<compile_context>
chip_gen: v7x
topology: tpu7x:2x2x1
jax: 0.10.0
libtpu: 0.0.40
codegen_flags: <defaults>
</compile_context>

<pallas_src>
import functools

import jax
import jax.numpy as jnp
from jax.experimental import pallas as pl
from jax.experimental.pallas import tpu as pltpu

EPS = 1e-5
COL_OFF = 8   # sublane-aligned column offset of the image inside the halo scratch


# ---------------------------------------------------------------------------
# Fused kernel: BN1 -> conv3x3 -> BN2 -> PReLU -> conv3x3(stride) -> BN3
#               (+ optional 1x1-conv/BN shortcut) -> residual add
# ---------------------------------------------------------------------------

def _bottleneck_ir_kernel(x_ref, w1_ref, s1_ref, b1_ref, s2_ref, b2_ref, alpha_ref,
                          w2_ref, s3_ref, b3_ref, *rest,
                          h, w, h_out, w_out, stride, dim_match):
    if dim_match:
        o_ref, pad1_ref, pad2_ref = rest
        ws_ref = ss_ref = bs_ref = None
    else:
        ws_ref, ss_ref, bs_ref, o_ref, pad1_ref, pad2_ref = rest

    cin = x_ref.shape[-1]
    cout = o_ref.shape[-1]

    def im2col(src, c, oh, ow, s):
        # Gather the 9 taps into one (oh*ow, 9*c) matrix so the conv is a single
        # MXU matmul with K = 9*c instead of nine K = c matmuls.
        cols = []
        for ky in range(3):
            for kx in range(3):
                cols.append(jax.lax.slice(
                    src,
                    (ky, COL_OFF - 1 + kx, 0),
                    (ky + (oh - 1) * s + 1,
                     COL_OFF - 1 + kx + (ow - 1) * s + 1, c),
                    (s, s, 1)))
        return jnp.concatenate(cols, axis=-1).reshape(oh * ow, 9 * c)

    x = x_ref[0].astype(jnp.float32)                        # (h, w, cin)

    # ---- BN1 (inference-mode affine) fused as the conv1 prologue ----
    y0 = x * s1_ref[...] + b1_ref[...]

    # ---- zero halo built in VMEM scratch (no host-side pad / HBM round trip) ----
    pad1_ref[...] = jnp.zeros_like(pad1_ref)
    pad1_ref[1:h + 1, COL_OFF:COL_OFF + w, :] = y0
    a1 = im2col(pad1_ref[...], cin, h, w, 1).astype(jnp.bfloat16)

    # ---- conv1 (3x3, stride 1) on the bf16 MXU path, f32 accumulation ----
    z1 = jnp.dot(a1, w1_ref[...], preferred_element_type=jnp.float32)   # (h*w, cout)

    # ---- BN2 + PReLU epilogue in f32 (VPU) ----
    z1 = z1 * s2_ref[...] + b2_ref[...]
    z1 = jnp.where(z1 >= 0, z1, alpha_ref[...] * z1)

    # ---- second zero halo for conv2 ----
    pad2_ref[...] = jnp.zeros_like(pad2_ref)
    pad2_ref[1:h + 1, COL_OFF:COL_OFF + w, :] = z1.reshape(h, w, cout)
    a2 = im2col(pad2_ref[...], cout, h_out, w_out, stride).astype(jnp.bfloat16)

    # ---- conv2 (3x3, stride) + BN3 ----
    res = jnp.dot(a2, w2_ref[...], preferred_element_type=jnp.float32)  # (ho*wo, cout)
    res = res * s3_ref[...] + b3_ref[...]

    # ---- shortcut branch, fused (no separate pallas_call / HBM pass) ----
    if dim_match:
        # identity shortcut (stride==1, cin==cout); x is bf16-quantized at entry.
        sc = x.reshape(h_out * w_out, cout)
    else:
        xs = jax.lax.slice(
            x, (0, 0, 0),
            ((h_out - 1) * stride + 1, (w_out - 1) * stride + 1, cin),
            (stride, stride, 1))                             # strided 1x1-conv input
        sc = jnp.dot(xs.reshape(h_out * w_out, cin).astype(jnp.bfloat16),
                     ws_ref[...], preferred_element_type=jnp.float32)
        sc = sc * ss_ref[...] + bs_ref[...]

    o_ref[0] = (sc + res).reshape(h_out, w_out, cout)


# ---------------------------------------------------------------------------
# Wrapper
# ---------------------------------------------------------------------------

def _full_spec(shape):
    zero = (0,) * len(shape)
    return pl.BlockSpec(tuple(shape), lambda b, _z=zero: _z)


def bottleneck_ir_forward(x_nchw, params, *, stride, dim_match):
    x = jnp.transpose(x_nchw, (0, 2, 3, 1))                  # -> NHWC
    nb, h, w, cin = x.shape
    cout = params["w1"].shape[-1]
    h_out = (h - 1) // stride + 1                            # k=3, pad=1
    w_out = (w - 1) // stride + 1
    if dim_match:
        assert stride == 1 and cin == cout, "identity shortcut needs matching dims"

    # bf16 matmul operands (MXU bf16 path); BN/PReLU epilogues stay f32 in-kernel.
    xb = x.astype(jnp.bfloat16)
    w1 = params["w1"].reshape(9 * cin, cout).astype(jnp.bfloat16)     # im2col layout
    w2 = params["w2"].reshape(9 * cout, cout).astype(jnp.bfloat16)

    inputs = [xb, w1, params["bn1_scale"], params["bn1_shift"],
              params["bn2_scale"], params["bn2_shift"], params["prelu_alpha"],
              w2, params["bn3_scale"], params["bn3_shift"]]
    in_specs = [
        pl.BlockSpec((1, h, w, cin), lambda b: (b, 0, 0, 0)),
        _full_spec((9 * cin, cout)),
        _full_spec((1, cin)), _full_spec((1, cin)),
        _full_spec((1, cout)), _full_spec((1, cout)), _full_spec((1, cout)),
        _full_spec((9 * cout, cout)),
        _full_spec((1, cout)), _full_spec((1, cout)),
    ]
    if not dim_match:
        inputs += [params["ws"].astype(jnp.bfloat16),
                   params["bns_scale"], params["bns_shift"]]
        in_specs += [_full_spec((cin, cout)),
                     _full_spec((1, cout)), _full_spec((1, cout))]

    kernel = functools.partial(
        _bottleneck_ir_kernel, h=h, w=w, h_out=h_out, w_out=w_out,
        stride=stride, dim_match=dim_match)

    out = pl.pallas_call(
        kernel,
        out_shape=jax.ShapeDtypeStruct((nb, h_out, w_out, cout), jnp.float32),
        grid=(nb,),
        in_specs=in_specs,
        out_specs=pl.BlockSpec((1, h_out, w_out, cout), lambda b: (b, 0, 0, 0)),
        scratch_shapes=[pltpu.VMEM((h + 2, w + 2 * COL_OFF, cin), jnp.float32),
                        pltpu.VMEM((h + 2, w + 2 * COL_OFF, cout), jnp.float32)],
        compiler_params=pltpu.CompilerParams(
            dimension_semantics=("parallel",)),
    )(*inputs)
    return jnp.transpose(out, (0, 3, 1, 2))                  # back to NCHW


# ---------------------------------------------------------------------------
# Deterministic parameter init (synthetic; shapes follow the PyTorch module)
# ---------------------------------------------------------------------------

def _bn_scale_shift(keys, c):
    kg, kb, km, kv = keys
    gamma = jax.random.uniform(kg, (c,), jnp.float32, 0.5, 1.5)
    beta = 0.1 * jax.random.normal(kb, (c,), jnp.float32)
    mean = 0.1 * jax.random.normal(km, (c,), jnp.float32)
    var = jax.random.uniform(kv, (c,), jnp.float32, 0.5, 1.5)
    scale = gamma / jnp.sqrt(var + EPS)
    shift = beta - mean * scale
    return scale.reshape(1, c), shift.reshape(1, c)


def init_params(key, cin, cout):
    keys = jax.random.split(key, 20)
    p = {}
    p["bn1_scale"], p["bn1_shift"] = _bn_scale_shift(keys[0:4], cin)
    p["bn2_scale"], p["bn2_shift"] = _bn_scale_shift(keys[4:8], cout)
    p["bn3_scale"], p["bn3_shift"] = _bn_scale_shift(keys[8:12], cout)
    p["bns_scale"], p["bns_shift"] = _bn_scale_shift(keys[12:16], cout)
    p["w1"] = 0.1 * jax.random.normal(keys[16], (3, 3, cin, cout), jnp.float32)
    p["w2"] = 0.1 * jax.random.normal(keys[17], (3, 3, cout, cout), jnp.float32)
    p["ws"] = 0.1 * jax.random.normal(keys[18], (cin, cout), jnp.float32)
    p["prelu_alpha"] = jnp.full((1, cout), 0.25, jnp.float32)    # nn.PReLU default
    return p


# ---------------------------------------------------------------------------
# Pure-JAX f32 reference (NCHW, mirrors the PyTorch graph in eval mode)
# ---------------------------------------------------------------------------

def reference_forward(x_nchw, params, *, stride, dim_match):
    def conv(x, w_oihw, s, pad):
        return jax.lax.conv_general_dilated(
            x, w_oihw, (s, s), ((pad, pad), (pad, pad)),
            dimension_numbers=("NCHW", "OIHW", "NCHW"),
            precision=jax.lax.Precision.HIGHEST)

    def bn(x, scale, shift):
        return x * scale.reshape(1, -1, 1, 1) + shift.reshape(1, -1, 1, 1)

    w1 = jnp.transpose(params["w1"], (3, 2, 0, 1))
    w2 = jnp.transpose(params["w2"], (3, 2, 0, 1))

    y = bn(x_nchw, params["bn1_scale"], params["bn1_shift"])
    y = conv(y, w1, 1, 1)
    y = bn(y, params["bn2_scale"], params["bn2_shift"])
    alpha = params["prelu_alpha"].reshape(1, -1, 1, 1)
    y = jnp.where(y >= 0, y, alpha * y)
    y = conv(y, w2, stride, 1)
    y = bn(y, params["bn3_scale"], params["bn3_shift"])
    if dim_match:
        shortcut = x_nchw
    else:
        ws = jnp.transpose(params["ws"], (1, 0))[:, :, None, None]
        shortcut = bn(conv(x_nchw, ws, stride, 0),
                      params["bns_scale"], params["bns_shift"])
    return shortcut + y


# ---------------------------------------------------------------------------

if __name__ == "__main__":
    N, H, W = 2, 16, 16
    configs = [
        dict(cin=4, cout=8, stride=1, dim_match=False),
        dict(cin=4, cout=8, stride=2, dim_match=False),
        dict(cin=8, cout=8, stride=1, dim_match=True),
    ]

    key = jax.random.PRNGKey(0)
    for cfg in configs:
        key, kx, kp = jax.random.split(key, 3)
        x = jax.random.normal(kx, (N, cfg["cin"], H, W), jnp.float32)   # NCHW
        params = init_params(kp, cfg["cin"], cfg["cout"])

        out = bottleneck_ir_forward(x, params, stride=cfg["stride"],
                                    dim_match=cfg["dim_match"])
        out = jax.block_until_ready(out)

        ref = reference_forward(x, params, stride=cfg["stride"],
                                dim_match=cfg["dim_match"])
        assert out.shape == ref.shape, (cfg, out.shape, ref.shape)
        max_err = float(jnp.max(jnp.abs(out - ref)))
        # tolerance accounts for bf16 MXU operands across two chained 3x3 convs
        # (f32 accumulation / epilogues); outputs are O(1)-O(5).
        assert max_err < 1e-1, f"config {cfg}: max abs err {max_err}"

    print("KERNEL_OK")
</pallas_src>

<mosaic_0001>
module attributes {stable_mosaic.version = 11 : i64} {
  func.func @_bottleneck_ir_kernel(%arg0: i32, %arg1: memref<1x16x16x4xbf16, #tpu.memory_space<vmem>>, %arg2: memref<36x8xbf16, #tpu.memory_space<vmem>>, %arg3: memref<1x4xf32, #tpu.memory_space<vmem>>, %arg4: memref<1x4xf32, #tpu.memory_space<vmem>>, %arg5: memref<1x8xf32, #tpu.memory_space<vmem>>, %arg6: memref<1x8xf32, #tpu.memory_space<vmem>>, %arg7: memref<1x8xf32, #tpu.memory_space<vmem>>, %arg8: memref<72x8xbf16, #tpu.memory_space<vmem>>, %arg9: memref<1x8xf32, #tpu.memory_space<vmem>>, %arg10: memref<1x8xf32, #tpu.memory_space<vmem>>, %arg11: memref<4x8xbf16, #tpu.memory_space<vmem>>, %arg12: memref<1x8xf32, #tpu.memory_space<vmem>>, %arg13: memref<1x8xf32, #tpu.memory_space<vmem>>, %arg14: memref<1x16x16x8xf32, #tpu.memory_space<vmem>>, %arg15: memref<18x32x4xf32, #tpu.memory_space<vmem>>, %arg16: memref<18x32x8xf32, #tpu.memory_space<vmem>>) attributes {dimension_semantics = [#tpu.dimension_semantics<parallel>], iteration_bounds = array<i64: 2>, scalar_prefetch = 0 : i64, scratch_operands = 2 : i64, tpu.core_type = #tpu.core_type<tc>, window_params = [{transform_indices = @transform_0, window_bounds = array<i64: 1, 16, 16, 4>}, {pipeline_mode = #tpu.pipeline_mode<synchronous>, transform_indices = @transform_1, window_bounds = array<i64: 36, 8>}, {pipeline_mode = #tpu.pipeline_mode<synchronous>, transform_indices = @transform_2, window_bounds = array<i64: 1, 4>}, {pipeline_mode = #tpu.pipeline_mode<synchronous>, transform_indices = @transform_3, window_bounds = array<i64: 1, 4>}, {pipeline_mode = #tpu.pipeline_mode<synchronous>, transform_indices = @transform_4, window_bounds = array<i64: 1, 8>}, {pipeline_mode = #tpu.pipeline_mode<synchronous>, transform_indices = @transform_5, window_bounds = array<i64: 1, 8>}, {pipeline_mode = #tpu.pipeline_mode<synchronous>, transform_indices = @transform_6, window_bounds = array<i64: 1, 8>}, {pipeline_mode = #tpu.pipeline_mode<synchronous>, transform_indices = @transform_7, window_bounds = array<i64: 72, 8>}, {pipeline_mode = #tpu.pipeline_mode<synchronous>, transform_indices = @transform_8, window_bounds = array<i64: 1, 8>}, {pipeline_mode = #tpu.pipeline_mode<synchronous>, transform_indices = @transform_9, window_bounds = array<i64: 1, 8>}, {pipeline_mode = #tpu.pipeline_mode<synchronous>, transform_indices = @transform_10, window_bounds = array<i64: 4, 8>}, {pipeline_mode = #tpu.pipeline_mode<synchronous>, transform_indices = @transform_11, window_bounds = array<i64: 1, 8>}, {pipeline_mode = #tpu.pipeline_mode<synchronous>, transform_indices = @transform_12, window_bounds = array<i64: 1, 8>}, {transform_indices = @transform_13, window_bounds = array<i64: 1, 16, 16, 8>}]} {
    %c0 = arith.constant 0 : index
    %c0_0 = arith.constant 0 : index
    %c0_1 = arith.constant 0 : index
    %c0_2 = arith.constant 0 : index
    %0 = vector.load %arg1[%c0, %c0_0, %c0_1, %c0_2] : memref<1x16x16x4xbf16, #tpu.memory_space<vmem>>, vector<1x16x16x4xbf16>
    %1 = vector.shape_cast %0 : vector<1x16x16x4xbf16> to vector<16x16x4xbf16>
    %2 = arith.extf %1 : vector<16x16x4xbf16> to vector<16x16x4xf32>
    %c0_3 = arith.constant 0 : index
    %c0_4 = arith.constant 0 : index
    %3 = vector.load %arg3[%c0_3, %c0_4] : memref<1x4xf32, #tpu.memory_space<vmem>>, vector<1x4xf32>
    %4 = vector.shape_cast %3 : vector<1x4xf32> to vector<1x1x4xf32>
    %5 = vector.broadcast %4 : vector<1x1x4xf32> to vector<16x16x4xf32>
    %6 = arith.mulf %2, %5 : vector<16x16x4xf32>
    %c0_5 = arith.constant 0 : index
    %c0_6 = arith.constant 0 : index
    %7 = vector.load %arg4[%c0_5, %c0_6] : memref<1x4xf32, #tpu.memory_space<vmem>>, vector<1x4xf32>
    %8 = vector.shape_cast %7 : vector<1x4xf32> to vector<1x1x4xf32>
    %9 = vector.broadcast %8 : vector<1x1x4xf32> to vector<16x16x4xf32>
    %10 = arith.addf %6, %9 : vector<16x16x4xf32>
    %cst = arith.constant 0.000000e+00 : f32
    %11 = vector.broadcast %cst : f32 to vector<18x32x4xf32>
    %c0_7 = arith.constant 0 : index
    %c0_8 = arith.constant 0 : index
    %c0_9 = arith.constant 0 : index
    %12 = vector.load %arg15[%c0_7, %c0_8, %c0_9] : memref<18x32x4xf32, #tpu.memory_space<vmem>>, vector<18x32x4xf32>
    tpu.vector_store %arg15[%c0_7, %c0_8, %c0_9], %11 {strides = array<i32>} : memref<18x32x4xf32, #tpu.memory_space<vmem>>, vector<18x32x4xf32>,
    %c1 = arith.constant 1 : index
    %c8 = arith.constant 8 : index
    %c0_10 = arith.constant 0 : index
    %13 = vector.load %arg15[%c1, %c8, %c0_10] : memref<18x32x4xf32, #tpu.memory_space<vmem>>, vector<16x16x4xf32>
    tpu.vector_store %arg15[%c1, %c8, %c0_10], %10 {strides = array<i32>} : memref<18x32x4xf32, #tpu.memory_space<vmem>>, vector<16x16x4xf32>,
    %c0_11 = arith.constant 0 : index
    %c0_12 = arith.constant 0 : index
    %c0_13 = arith.constant 0 : index
    %14 = vector.load %arg15[%c0_11, %c0_12, %c0_13] : memref<18x32x4xf32, #tpu.memory_space<vmem>>, vector<18x32x4xf32>
    %15 = vector.extract_strided_slice %14 {offsets = [0, 7, 0], sizes = [16, 16, 4], strides = [1, 1, 1]} : vector<18x32x4xf32> to vector<16x16x4xf32>
    %16 = vector.extract_strided_slice %14 {offsets = [0, 8, 0], sizes = [16, 16, 4], strides = [1, 1, 1]} : vector<18x32x4xf32> to vector<16x16x4xf32>
    %17 = vector.extract_strided_slice %14 {offsets = [0, 9, 0], sizes = [16, 16, 4], strides = [1, 1, 1]} : vector<18x32x4xf32> to vector<16x16x4xf32>
    %18 = vector.extract_strided_slice %14 {offsets = [1, 7, 0], sizes = [16, 16, 4], strides = [1, 1, 1]} : vector<18x32x4xf32> to vector<16x16x4xf32>
    %19 = vector.extract_strided_slice %14 {offsets = [1, 8, 0], sizes = [16, 16, 4], strides = [1, 1, 1]} : vector<18x32x4xf32> to vector<16x16x4xf32>
    %20 = vector.extract_strided_slice %14 {offsets = [1, 9, 0], sizes = [16, 16, 4], strides = [1, 1, 1]} : vector<18x32x4xf32> to vector<16x16x4xf32>
    %21 = vector.extract_strided_slice %14 {offsets = [2, 7, 0], sizes = [16, 16, 4], strides = [1, 1, 1]} : vector<18x32x4xf32> to vector<16x16x4xf32>
    %22 = vector.extract_strided_slice %14 {offsets = [2, 8, 0], sizes = [16, 16, 4], strides = [1, 1, 1]} : vector<18x32x4xf32> to vector<16x16x4xf32>
    %23 = vector.extract_strided_slice %14 {offsets = [2, 9, 0], sizes = [16, 16, 4], strides = [1, 1, 1]} : vector<18x32x4xf32> to vector<16x16x4xf32>
    %24 = tpu.concatenate %15, %16, %17, %18, %19, %20, %21, %22, %23 in 2 : vector<16x16x4xf32>, vector<16x16x4xf32>, vector<16x16x4xf32>, vector<16x16x4xf32>, vector<16x16x4xf32>, vector<16x16x4xf32>, vector<16x16x4xf32>, vector<16x16x4xf32>, vector<16x16x4xf32> -> vector<16x16x36xf32>
    %25 = vector.shape_cast %24 : vector<16x16x36xf32> to vector<256x36xf32>
    %26 = arith.truncf %25 : vector<256x36xf32> to vector<256x36xbf16>
    %c0_14 = arith.constant 0 : index
    %c0_15 = arith.constant 0 : index
    %27 = vector.load %arg2[%c0_14, %c0_15] : memref<36x8xbf16, #tpu.memory_space<vmem>>, vector<36x8xbf16>
    %cst_16 = arith.constant dense<0.000000e+00> : vector<256x8xf32>
    %28 = tpu.matmul %26, %27, %cst_16 {dimension_numbers = #tpu.dot_dimension_numbers<[1], [0], [0], [1], [0, 0, 1, 1], [], []>} : vector<256x36xbf16>, vector<36x8xbf16>, vector<256x8xf32> -> vector<256x8xf32>
    %c0_17 = arith.constant 0 : index
    %c0_18 = arith.constant 0 : index
    %29 = vector.load %arg5[%c0_17, %c0_18] : memref<1x8xf32, #tpu.memory_space<vmem>>, vector<1x8xf32>
    %30 = vector.broadcast %29 : vector<1x8xf32> to vector<256x8xf32>
    %31 = arith.mulf %28, %30 : vector<256x8xf32>
    %c0_19 = arith.constant 0 : index
    %c0_20 = arith.constant 0 : index
    %32 = vector.load %arg6[%c0_19, %c0_20] : memref<1x8xf32, #tpu.memory_space<vmem>>, vector<1x8xf32>
    %33 = vector.broadcast %32 : vector<1x8xf32> to vector<256x8xf32>
    %34 = arith.addf %31, %33 : vector<256x8xf32>
    %cst_21 = arith.constant 0.000000e+00 : f32
    %35 = vector.broadcast %cst_21 : f32 to vector<256x8xf32>
    %36 = arith.cmpf oge, %34, %35 : vector<256x8xf32>
    %c0_22 = arith.constant 0 : index
    %c0_23 = arith.constant 0 : index
    %37 = vector.load %arg7[%c0_22, %c0_23] : memref<1x8xf32, #tpu.memory_space<vmem>>, vector<1x8xf32>
    %38 = vector.broadcast %37 : vector<1x8xf32> to vector<256x8xf32>
    %39 = arith.mulf %38, %34 : vector<256x8xf32>
    %40 = arith.select %36, %34, %39 : vector<256x8xi1>, vector<256x8xf32>
    %cst_24 = arith.constant 0.000000e+00 : f32
    %41 = vector.broadcast %cst_24 : f32 to vector<18x32x8xf32>
    %c0_25 = arith.constant 0 : index
    %c0_26 = arith.constant 0 : index
    %c0_27 = arith.constant 0 : index
    %42 = vector.load %arg16[%c0_25, %c0_26, %c0_27] : memref<18x32x8xf32, #tpu.memory_space<vmem>>, vector<18x32x8xf32>
    tpu.vector_store %arg16[%c0_25, %c0_26, %c0_27], %41 {strides = array<i32>} : memref<18x32x8xf32, #tpu.memory_space<vmem>>, vector<18x32x8xf32>,
    %43 = vector.shape_cast %40 : vector<256x8xf32> to vector<16x16x8xf32>
    %c1_28 = arith.constant 1 : index
    %c8_29 = arith.constant 8 : index
    %c0_30 = arith.constant 0 : index
    %44 = vector.load %arg16[%c1_28, %c8_29, %c0_30] : memref<18x32x8xf32, #tpu.memory_space<vmem>>, vector<16x16x8xf32>
    tpu.vector_store %arg16[%c1_28, %c8_29, %c0_30], %43 {strides = array<i32>} : memref<18x32x8xf32, #tpu.memory_space<vmem>>, vector<16x16x8xf32>,
    %c0_31 = arith.constant 0 : index
    %c0_32 = arith.constant 0 : index
    %c0_33 = arith.constant 0 : index
    %45 = vector.load %arg16[%c0_31, %c0_32, %c0_33] : memref<18x32x8xf32, #tpu.memory_space<vmem>>, vector<18x32x8xf32>
    %46 = vector.extract_strided_slice %45 {offsets = [0, 7, 0], sizes = [16, 16, 8], strides = [1, 1, 1]} : vector<18x32x8xf32> to vector<16x16x8xf32>
    %47 = vector.extract_strided_slice %45 {offsets = [0, 8, 0], sizes = [16, 16, 8], strides = [1, 1, 1]} : vector<18x32x8xf32> to vector<16x16x8xf32>
    %48 = vector.extract_strided_slice %45 {offsets = [0, 9, 0], sizes = [16, 16, 8], strides = [1, 1, 1]} : vector<18x32x8xf32> to vector<16x16x8xf32>
    %49 = vector.extract_strided_slice %45 {offsets = [1, 7, 0], sizes = [16, 16, 8], strides = [1, 1, 1]} : vector<18x32x8xf32> to vector<16x16x8xf32>
    %50 = vector.extract_strided_slice %45 {offsets = [1, 8, 0], sizes = [16, 16, 8], strides = [1, 1, 1]} : vector<18x32x8xf32> to vector<16x16x8xf32>
    %51 = vector.extract_strided_slice %45 {offsets = [1, 9, 0], sizes = [16, 16, 8], strides = [1, 1, 1]} : vector<18x32x8xf32> to vector<16x16x8xf32>
    %52 = vector.extract_strided_slice %45 {offsets = [2, 7, 0], sizes = [16, 16, 8], strides = [1, 1, 1]} : vector<18x32x8xf32> to vector<16x16x8xf32>
    %53 = vector.extract_strided_slice %45 {offsets = [2, 8, 0], sizes = [16, 16, 8], strides = [1, 1, 1]} : vector<18x32x8xf32> to vector<16x16x8xf32>
    %54 = vector.extract_strided_slice %45 {offsets = [2, 9, 0], sizes = [16, 16, 8], strides = [1, 1, 1]} : vector<18x32x8xf32> to vector<16x16x8xf32>
    %55 = tpu.concatenate %46, %47, %48, %49, %50, %51, %52, %53, %54 in 2 : vector<16x16x8xf32>, vector<16x16x8xf32>, vector<16x16x8xf32>, vector<16x16x8xf32>, vector<16x16x8xf32>, vector<16x16x8xf32>, vector<16x16x8xf32>, vector<16x16x8xf32>, vector<16x16x8xf32> -> vector<16x16x72xf32>
    %56 = vector.shape_cast %55 : vector<16x16x72xf32> to vector<256x72xf32>
    %57 = arith.truncf %56 : vector<256x72xf32> to vector<256x72xbf16>
    %c0_34 = arith.constant 0 : index
    %c0_35 = arith.constant 0 : index
    %58 = vector.load %arg8[%c0_34, %c0_35] : memref<72x8xbf16, #tpu.memory_space<vmem>>, vector<72x8xbf16>
    %cst_36 = arith.constant dense<0.000000e+00> : vector<256x8xf32>
    %59 = tpu.matmul %57, %58, %cst_36 {dimension_numbers = #tpu.dot_dimension_numbers<[1], [0], [0], [1], [0, 0, 1, 1], [], []>} : vector<256x72xbf16>, vector<72x8xbf16>, vector<256x8xf32> -> vector<256x8xf32>
    %c0_37 = arith.constant 0 : index
    %c0_38 = arith.constant 0 : index
    %60 = vector.load %arg9[%c0_37, %c0_38] : memref<1x8xf32, #tpu.memory_space<vmem>>, vector<1x8xf32>
    %61 = vector.broadcast %60 : vector<1x8xf32> to vector<256x8xf32>
    %62 = arith.mulf %59, %61 : vector<256x8xf32>
    %c0_39 = arith.constant 0 : index
    %c0_40 = arith.constant 0 : index
    %63 = vector.load %arg10[%c0_39, %c0_40] : memref<1x8xf32, #tpu.memory_space<vmem>>, vector<1x8xf32>
    %64 = vector.broadcast %63 : vector<1x8xf32> to vector<256x8xf32>
    %65 = arith.addf %62, %64 : vector<256x8xf32>
    %66 = vector.extract_strided_slice %2 {offsets = [0, 0, 0], sizes = [16, 16, 4], strides = [1, 1, 1]} : vector<16x16x4xf32> to vector<16x16x4xf32>
    %67 = vector.shape_cast %66 : vector<16x16x4xf32> to vector<256x4xf32>
    %68 = arith.truncf %67 : vector<256x4xf32> to vector<256x4xbf16>
    %c0_41 = arith.constant 0 : index
    %c0_42 = arith.constant 0 : index
    %69 = vector.load %arg11[%c0_41, %c0_42] : memref<4x8xbf16, #tpu.memory_space<vmem>>, vector<4x8xbf16>
    %cst_43 = arith.constant dense<0.000000e+00> : vector<256x8xf32>
    %70 = tpu.matmul %68, %69, %cst_43 {dimension_numbers = #tpu.dot_dimension_numbers<[1], [0], [0], [1], [0, 0, 1, 1], [], []>} : vector<256x4xbf16>, vector<4x8xbf16>, vector<256x8xf32> -> vector<256x8xf32>
    %c0_44 = arith.constant 0 : index
    %c0_45 = arith.constant 0 : index
    %71 = vector.load %arg12[%c0_44, %c0_45] : memref<1x8xf32, #tpu.memory_space<vmem>>, vector<1x8xf32>
    %72 = vector.broadcast %71 : vector<1x8xf32> to vector<256x8xf32>
    %73 = arith.mulf %70, %72 : vector<256x8xf32>
    %c0_46 = arith.constant 0 : index
    %c0_47 = arith.constant 0 : index
    %74 = vector.load %arg13[%c0_46, %c0_47] : memref<1x8xf32, #tpu.memory_space<vmem>>, vector<1x8xf32>
    %75 = vector.broadcast %74 : vector<1x8xf32> to vector<256x8xf32>
    %76 = arith.addf %73, %75 : vector<256x8xf32>
    %77 = arith.addf %76, %65 : vector<256x8xf32>
    %78 = vector.shape_cast %77 : vector<256x8xf32> to vector<16x16x8xf32>
    %c0_48 = arith.constant 0 : index
    %c0_49 = arith.constant 0 : index
    %c0_50 = arith.constant 0 : index
    %c0_51 = arith.constant 0 : index
    %79 = vector.load %arg14[%c0_48, %c0_49, %c0_50, %c0_51] : memref<1x16x16x8xf32, #tpu.memory_space<vmem>>, vector<1x16x16x8xf32>
    %80 = vector.shape_cast %79 : vector<1x16x16x8xf32> to vector<16x16x8xf32>
    %81 = vector.shape_cast %78 : vector<16x16x8xf32> to vector<1x16x16x8xf32>
    tpu.vector_store %arg14[%c0_48, %c0_49, %c0_50, %c0_51], %81 {strides = array<i32>} : memref<1x16x16x8xf32, #tpu.memory_space<vmem>>, vector<1x16x16x8xf32>,
    return
  }
  func.func @transform_0(%arg0: i32) -> (i32, i32, i32, i32) {
    %c0_i32 = arith.constant 0 : i32
    %c0_i32_0 = arith.constant 0 : i32
    %c0_i32_1 = arith.constant 0 : i32
    %c0_i32_2 = arith.constant 0 : i32
    return %arg0, %c0_i32, %c0_i32_0, %c0_i32_1 : i32, i32, i32, i32
  }
  func.func @transform_1(%arg0: i32) -> (i32, i32) {
    %c0_i32 = arith.constant 0 : i32
    %c0_i32_0 = arith.constant 0 : i32
    %c0_i32_1 = arith.constant 0 : i32
    return %c0_i32, %c0_i32_0 : i32, i32
  }
  func.func @transform_2(%arg0: i32) -> (i32, i32) {
    %c0_i32 = arith.constant 0 : i32
    %c0_i32_0 = arith.constant 0 : i32
    %c0_i32_1 = arith.constant 0 : i32
    return %c0_i32, %c0_i32_0 : i32, i32
  }
  func.func @transform_3(%arg0: i32) -> (i32, i32) {
    %c0_i32 = arith.constant 0 : i32
    %c0_i32_0 = arith.constant 0 : i32
    %c0_i32_1 = arith.constant 0 : i32
    return %c0_i32, %c0_i32_0 : i32, i32
  }
  func.func @transform_4(%arg0: i32) -> (i32, i32) {
    %c0_i32 = arith.constant 0 : i32
    %c0_i32_0 = arith.constant 0 : i32
    %c0_i32_1 = arith.constant 0 : i32
    return %c0_i32, %c0_i32_0 : i32, i32
  }
  func.func @transform_5(%arg0: i32) -> (i32, i32) {
    %c0_i32 = arith.constant 0 : i32
    %c0_i32_0 = arith.constant 0 : i32
    %c0_i32_1 = arith.constant 0 : i32
    return %c0_i32, %c0_i32_0 : i32, i32
  }
  func.func @transform_6(%arg0: i32) -> (i32, i32) {
    %c0_i32 = arith.constant 0 : i32
    %c0_i32_0 = arith.constant 0 : i32
    %c0_i32_1 = arith.constant 0 : i32
    return %c0_i32, %c0_i32_0 : i32, i32
  }
  func.func @transform_7(%arg0: i32) -> (i32, i32) {
    %c0_i32 = arith.constant 0 : i32
    %c0_i32_0 = arith.constant 0 : i32
    %c0_i32_1 = arith.constant 0 : i32
    return %c0_i32, %c0_i32_0 : i32, i32
  }
  func.func @transform_8(%arg0: i32) -> (i32, i32) {
    %c0_i32 = arith.constant 0 : i32
    %c0_i32_0 = arith.constant 0 : i32
    %c0_i32_1 = arith.constant 0 : i32
    return %c0_i32, %c0_i32_0 : i32, i32
  }
  func.func @transform_9(%arg0: i32) -> (i32, i32) {
    %c0_i32 = arith.constant 0 : i32
    %c0_i32_0 = arith.constant 0 : i32
    %c0_i32_1 = arith.constant 0 : i32
    return %c0_i32, %c0_i32_0 : i32, i32
  }
  func.func @transform_10(%arg0: i32) -> (i32, i32) {
    %c0_i32 = arith.constant 0 : i32
    %c0_i32_0 = arith.constant 0 : i32
    %c0_i32_1 = arith.constant 0 : i32
    return %c0_i32, %c0_i32_0 : i32, i32
  }
  func.func @transform_11(%arg0: i32) -> (i32, i32) {
    %c0_i32 = arith.constant 0 : i32
    %c0_i32_0 = arith.constant 0 : i32
    %c0_i32_1 = arith.constant 0 : i32
    return %c0_i32, %c0_i32_0 : i32, i32
  }
  func.func @transform_12(%arg0: i32) -> (i32, i32) {
    %c0_i32 = arith.constant 0 : i32
    %c0_i32_0 = arith.constant 0 : i32
    %c0_i32_1 = arith.constant 0 : i32
    return %c0_i32, %c0_i32_0 : i32, i32
  }
  func.func @transform_13(%arg0: i32) -> (i32, i32, i32, i32) {
    %c0_i32 = arith.constant 0 : i32
    %c0_i32_0 = arith.constant 0 : i32
    %c0_i32_1 = arith.constant 0 : i32
    %c0_i32_2 = arith.constant 0 : i32
    return %arg0, %c0_i32, %c0_i32_0, %c0_i32_1 : i32, i32, i32, i32
  }
}

</mosaic_0001>

<llo_original>
// kernel: tpu_custom_call.1
$region0: #{tpu_custom_call.1}
  #allocation0 [shape = 'u32[]', space=smem, size = 0x4, offset = 0x4, fixed_abs, tag = 'smem constant byte address 0x4 - core index']
  #allocation1 [shape = 'u32[144,128]{1,0:T(1,128)}', space=vmem, size = 0x12000, scoped, tag = 'internal scratch']
  #allocation2 [shape = 'f32[18,32,4]{2,1,0:T(8,128)}', space=vmem, size = 0x48000, scoped, tag = 'scratch operand']
  #allocation3 [shape = 'f32[18,32,8]{2,1,0:T(8,128)}', space=vmem, size = 0x48000, scoped, tag = 'scratch operand']
  %s0 = inlined_call_operand.vmem [shape: bf16[2,16,16,4], index: 0, kind: input, shape index: {}]
  %s1 = inlined_call_operand.vmem [shape: bf16[36,8], index: 1, kind: input, shape index: {}]
  %s2 = inlined_call_operand.vmem [shape: f32[1,4], index: 2, kind: input, shape index: {}]
  %s3 = inlined_call_operand.vmem [shape: f32[1,4], index: 3, kind: input, shape index: {}]
  %s4 = inlined_call_operand.vmem [shape: f32[1,8], index: 4, kind: input, shape index: {}]
  %s5 = inlined_call_operand.vmem [shape: f32[1,8], index: 5, kind: input, shape index: {}]
  %s6 = inlined_call_operand.vmem [shape: f32[1,8], index: 6, kind: input, shape index: {}]
  %s7 = inlined_call_operand.vmem [shape: bf16[72,8], index: 7, kind: input, shape index: {}]
  %s8 = inlined_call_operand.vmem [shape: f32[1,8], index: 8, kind: input, shape index: {}]
  %s9 = inlined_call_operand.vmem [shape: f32[1,8], index: 9, kind: input, shape index: {}]
  %s10 = inlined_call_operand.vmem [shape: bf16[4,8], index: 10, kind: input, shape index: {}]
  %s11 = inlined_call_operand.vmem [shape: f32[1,8], index: 11, kind: input, shape index: {}]
  %s12 = inlined_call_operand.vmem [shape: f32[1,8], index: 12, kind: input, shape index: {}]
  %s13 = inlined_call_operand.vmem [shape: f32[2,16,16,8], index: 13, kind: output, shape index: {}]
  %s14 = sld [smem:[#allocation0]]
  $region85: #{tpu_custom_call.1} parent=0
    _
  %s16 = ssub.s32 1, %s14
  %s17 = scalar_select 0, %s16, %s14
  loop: start=0, step=1, limit=4
  $region2: #{tpu_custom_call.1} parent=0 // loop_pre_header
    _
  $region3: #{tpu_custom_call.1} parent=0 // loop_header
    %s19 = sphi 0, %s23
    %p20 = scmp.ge.s32.totalorder %s19, 4
    %s29 = sphi 0, %s31
    %s32 = sphi 0, %s29
    %s33 = sphi 0, %s32
    %s49 = sphi 0, %s33
    %s53 = sphi 0, %s53
    %s55 = sphi 0, %s53
    %s56 = sphi 0, %s55
    %s70 = sphi 0, %s56
    %s74 = sphi 0, %s74
    %s76 = sphi 0, %s74
    %s77 = sphi 0, %s76
    %s91 = sphi 0, %s77
    %s95 = sphi 0, %s95
    %s97 = sphi 0, %s95
    %s98 = sphi 0, %s97
    %s112 = sphi 0, %s98
    %s116 = sphi 0, %s116
    %s118 = sphi 0, %s116
    %s119 = sphi 0, %s118
    %s133 = sphi 0, %s119
    %s137 = sphi 0, %s137
    %s139 = sphi 0, %s137
    %s140 = sphi 0, %s139
    %s154 = sphi 0, %s140
    %s158 = sphi 0, %s158
    %s160 = sphi 0, %s158
    %s161 = sphi 0, %s160
    %s175 = sphi 0, %s161
    %s179 = sphi 0, %s179
    %s181 = sphi 0, %s179
    %s182 = sphi 0, %s181
    %s196 = sphi 0, %s182
    %s200 = sphi 0, %s200
    %s202 = sphi 0, %s200
    %s203 = sphi 0, %s202
    %s217 = sphi 0, %s203
    %s221 = sphi 0, %s221
    %s223 = sphi 0, %s221
    %s224 = sphi 0, %s223
    %s238 = sphi 0, %s224
    %s242 = sphi 0, %s242
    %s244 = sphi 0, %s242
    %s245 = sphi 0, %s244
    %s259 = sphi 0, %s245
    %s263 = sphi 0, %s263
    %s265 = sphi 0, %s263
    %s266 = sphi 0, %s265
    %s280 = sphi 0, %s266
    %s284 = sphi 0, %s284
    %s286 = sphi 0, %s284
    %s287 = sphi 0, %s286
    %s301 = sphi 0, %s287
    %s307 = sphi 0, %s309
    %s310 = sphi 0, %s307
    %s311 = sphi 0, %s310
    %s327 = sphi 0, %s311
  $region4: #{tpu_custom_call.1} parent=0 // loop_header_branch
    %22 = sbr.rel (%p20) target = $region8
  $region5: #{tpu_custom_call.1} parent=0 // loop_body
    %s24 = ssub.s32 %s19, 1
    %s25 = ssub.s32 %s19, 2
    %s26 = sadd.s32 %s19, 1
    %s27 = ssub.s32 %s19, %s26
    %p28 = scmp.eq.s32.totalorder %s27, 0
    %s30 = sadd.s32 %s29, 1
    %s31 = scalar_select %p28, %s29, %s30
    %p34 = pneg %p28
    %p35 = scmp.eq.s32.totalorder %s19, 1
    %p36 = por %p34, %p35
    %p37 = scmp.ne.s32.totalorder %s29, %s32
    %p38 = scmp.eq.s32.totalorder %s19, 0
    %p39 = por %p37, %p38
    %p40 = scmp.ne.s32.totalorder %s29, %s32
    %p41 = scmp.eq.s32.totalorder %s24, 1
    %p42 = por %p40, %p41
    %p43 = scmp.ne.s32.totalorder %s32, %s33
    %p44 = scmp.eq.s32.totalorder %s24, 0
    %p45 = por %p43, %p44
    %p46 = scmp.ne.s32.totalorder %s32, %s33
    %p47 = scmp.eq.s32.totalorder %s25, 1
    %p48 = por %p46, %p47
    %p50 = scmp.ne.s32.totalorder %s33, %s49
    %p51 = scmp.eq.s32.totalorder %s25, 0
    %p52 = por %p50, %p51
    %s54 = sadd.s32 %s53, 1
    %p57 = scmp.eq.s32.totalorder %s19, 1
    %p58 = scmp.ne.s32.totalorder %s53, %s55
    %p59 = scmp.eq.s32.totalorder %s19, 0
    %p60 = por %p58, %p59
    %p61 = scmp.ne.s32.totalorder %s53, %s55
    %p62 = scmp.eq.s32.totalorder %s24, 1
    %p63 = por %p61, %p62
    %p64 = scmp.ne.s32.totalorder %s55, %s56
    %p65 = scmp.eq.s32.totalorder %s24, 0
    %p66 = por %p64, %p65
    %p67 = scmp.ne.s32.totalorder %s55, %s56
    %p68 = scmp.eq.s32.totalorder %s25, 1
    %p69 = por %p67, %p68
    %p71 = scmp.ne.s32.totalorder %s56, %s70
    %p72 = scmp.eq.s32.totalorder %s25, 0
    %p73 = por %p71, %p72
    %s75 = sadd.s32 %s74, 1
    %p78 = scmp.eq.s32.totalorder %s19, 1
    %p79 = scmp.ne.s32.totalorder %s74, %s76
    %p80 = scmp.eq.s32.totalorder %s19, 0
    %p81 = por %p79, %p80
    %p82 = scmp.ne.s32.totalorder %s74, %s76
    %p83 = scmp.eq.s32.totalorder %s24, 1
    %p84 = por %p82, %p83
    %p85 = scmp.ne.s32.totalorder %s76, %s77
    %p86 = scmp.eq.s32.totalorder %s24, 0
    %p87 = por %p85, %p86
    %p88 = scmp.ne.s32.totalorder %s76, %s77
    %p89 = scmp.eq.s32.totalorder %s25, 1
    %p90 = por %p88, %p89
    %p92 = scmp.ne.s32.totalorder %s77, %s91
    %p93 = scmp.eq.s32.totalorder %s25, 0
    %p94 = por %p92, %p93
    %s96 = sadd.s32 %s95, 1
    %p99 = scmp.eq.s32.totalorder %s19, 1
    %p100 = scmp.ne.s32.totalorder %s95, %s97
    %p101 = scmp.eq.s32.totalorder %s19, 0
    %p102 = por %p100, %p101
    %p103 = scmp.ne.s32.totalorder %s95, %s97
    %p104 = scmp.eq.s32.totalorder %s24, 1
    %p105 = por %p103, %p104
    %p106 = scmp.ne.s32.totalorder %s97, %s98
    %p107 = scmp.eq.s32.totalorder %s24, 0
    %p108 = por %p106, %p107
    %p109 = scmp.ne.s32.totalorder %s97, %s98
    %p110 = scmp.eq.s32.totalorder %s25, 1
    %p111 = por %p109, %p110
    %p113 = scmp.ne.s32.totalorder %s98, %s112
    %p114 = scmp.eq.s32.totalorder %s25, 0
    %p115 = por %p113, %p114
    %s117 = sadd.s32 %s116, 1
    %p120 = scmp.eq.s32.totalorder %s19, 1
    %p121 = scmp.ne.s32.totalorder %s116, %s118
    %p122 = scmp.eq.s32.totalorder %s19, 0
    %p123 = por %p121, %p122
    %p124 = scmp.ne.s32.totalorder %s116, %s118
    %p125 = scmp.eq.s32.totalorder %s24, 1
    %p126 = por %p124, %p125
    %p127 = scmp.ne.s32.totalorder %s118, %s119
    %p128 = scmp.eq.s32.totalorder %s24, 0
    %p129 = por %p127, %p128
    %p130 = scmp.ne.s32.totalorder %s118, %s119
    %p131 = scmp.eq.s32.totalorder %s25, 1
    %p132 = por %p130, %p131
    %p134 = scmp.ne.s32.totalorder %s119, %s133
    %p135 = scmp.eq.s32.totalorder %s25, 0
    %p136 = por %p134, %p135
    %s138 = sadd.s32 %s137, 1
    %p141 = scmp.eq.s32.totalorder %s19, 1
    %p142 = scmp.ne.s32.totalorder %s137, %s139
    %p143 = scmp.eq.s32.totalorder %s19, 0
    %p144 = por %p142, %p143
    %p145 = scmp.ne.s32.totalorder %s137, %s139
    %p146 = scmp.eq.s32.totalorder %s24, 1
    %p147 = por %p145, %p146
    %p148 = scmp.ne.s32.totalorder %s139, %s140
    %p149 = scmp.eq.s32.totalorder %s24, 0
    %p150 = por %p148, %p149
    %p151 = scmp.ne.s32.totalorder %s139, %s140
    %p152 = scmp.eq.s32.totalorder %s25, 1
    %p153 = por %p151, %p152
    %p155 = scmp.ne.s32.totalorder %s140, %s154
    %p156 = scmp.eq.s32.totalorder %s25, 0
    %p157 = por %p155, %p156
    %s159 = sadd.s32 %s158, 1
    %p162 = scmp.eq.s32.totalorder %s19, 1
    %p163 = scmp.ne.s32.totalorder %s158, %s160
    %p164 = scmp.eq.s32.totalorder %s19, 0
    %p165 = por %p163, %p164
    %p166 = scmp.ne.s32.totalorder %s158, %s160
    %p167 = scmp.eq.s32.totalorder %s24, 1
    %p168 = por %p166, %p167
    %p169 = scmp.ne.s32.totalorder %s160, %s161
    %p170 = scmp.eq.s32.totalorder %s24, 0
    %p171 = por %p169, %p170
    %p172 = scmp.ne.s32.totalorder %s160, %s161
    %p173 = scmp.eq.s32.totalorder %s25, 1
    %p174 = por %p172, %p173
    %p176 = scmp.ne.s32.totalorder %s161, %s175
    %p177 = scmp.eq.s32.totalorder %s25, 0
    %p178 = por %p176, %p177
    %s180 = sadd.s32 %s179, 1
    %p183 = scmp.eq.s32.totalorder %s19, 1
    %p184 = scmp.ne.s32.totalorder %s179, %s181
    %p185 = scmp.eq.s32.totalorder %s19, 0
    %p186 = por %p184, %p185
    %p187 = scmp.ne.s32.totalorder %s179, %s181
    %p188 = scmp.eq.s32.totalorder %s24, 1
    %p189 = por %p187, %p188
    %p190 = scmp.ne.s32.totalorder %s181, %s182
    %p191 = scmp.eq.s32.totalorder %s24, 0
    %p192 = por %p190, %p191
    %p193 = scmp.ne.s32.totalorder %s181, %s182
    %p194 = scmp.eq.s32.totalorder %s25, 1
    %p195 = por %p193, %p194
    %p197 = scmp.ne.s32.totalorder %s182, %s196
    %p198 = scmp.eq.s32.totalorder %s25, 0
    %p199 = por %p197, %p198
    %s201 = sadd.s32 %s200, 1
    %p204 = scmp.eq.s32.totalorder %s19, 1
    %p205 = scmp.ne.s32.totalorder %s200, %s202
    %p206 = scmp.eq.s32.totalorder %s19, 0
    %p207 = por %p205, %p206
    %p208 = scmp.ne.s32.totalorder %s200, %s202
    %p209 = scmp.eq.s32.totalorder %s24, 1
    %p210 = por %p208, %p209
    %p211 = scmp.ne.s32.totalorder %s202, %s203
    %p212 = scmp.eq.s32.totalorder %s24, 0
    %p213 = por %p211, %p212
    %p214 = scmp.ne.s32.totalorder %s202, %s203
    %p215 = scmp.eq.s32.totalorder %s25, 1
    %p216 = por %p214, %p215
    %p218 = scmp.ne.s32.totalorder %s203, %s217
    %p219 = scmp.eq.s32.totalorder %s25, 0
    %p220 = por %p218, %p219
    %s222 = sadd.s32 %s221, 1
    %p225 = scmp.eq.s32.totalorder %s19, 1
    %p226 = scmp.ne.s32.totalorder %s221, %s223
    %p227 = scmp.eq.s32.totalorder %s19, 0
    %p228 = por %p226, %p227
    %p229 = scmp.ne.s32.totalorder %s221, %s223
    %p230 = scmp.eq.s32.totalorder %s24, 1
    %p231 = por %p229, %p230
    %p232 = scmp.ne.s32.totalorder %s223, %s224
    %p233 = scmp.eq.s32.totalorder %s24, 0
    %p234 = por %p232, %p233
    %p235 = scmp.ne.s32.totalorder %s223, %s224
    %p236 = scmp.eq.s32.totalorder %s25, 1
    %p237 = por %p235, %p236
    %p239 = scmp.ne.s32.totalorder %s224, %s238
    %p240 = scmp.eq.s32.totalorder %s25, 0
    %p241 = por %p239, %p240
    %s243 = sadd.s32 %s242, 1
    %p246 = scmp.eq.s32.totalorder %s19, 1
    %p247 = scmp.ne.s32.totalorder %s242, %s244
    %p248 = scmp.eq.s32.totalorder %s19, 0
    %p249 = por %p247, %p248
    %p250 = scmp.ne.s32.totalorder %s242, %s244
    %p251 = scmp.eq.s32.totalorder %s24, 1
    %p252 = por %p250, %p251
    %p253 = scmp.ne.s32.totalorder %s244, %s245
    %p254 = scmp.eq.s32.totalorder %s24, 0
    %p255 = por %p253, %p254
    %p256 = scmp.ne.s32.totalorder %s244, %s245
    %p257 = scmp.eq.s32.totalorder %s25, 1
    %p258 = por %p256, %p257
    %p260 = scmp.ne.s32.totalorder %s245, %s259
    %p261 = scmp.eq.s32.totalorder %s25, 0
    %p262 = por %p260, %p261
    %s264 = sadd.s32 %s263, 1
    %p267 = scmp.eq.s32.totalorder %s19, 1
    %p268 = scmp.ne.s32.totalorder %s263, %s265
    %p269 = scmp.eq.s32.totalorder %s19, 0
    %p270 = por %p268, %p269
    %p271 = scmp.ne.s32.totalorder %s263, %s265
    %p272 = scmp.eq.s32.totalorder %s24, 1
    %p273 = por %p271, %p272
    %p274 = scmp.ne.s32.totalorder %s265, %s266
    %p275 = scmp.eq.s32.totalorder %s24, 0
    %p276 = por %p274, %p275
    %p277 = scmp.ne.s32.totalorder %s265, %s266
    %p278 = scmp.eq.s32.totalorder %s25, 1
    %p279 = por %p277, %p278
    %p281 = scmp.ne.s32.totalorder %s266, %s280
    %p282 = scmp.eq.s32.totalorder %s25, 0
    %p283 = por %p281, %p282
    %s285 = sadd.s32 %s284, 1
    %p288 = scmp.eq.s32.totalorder %s19, 1
    %p289 = scmp.ne.s32.totalorder %s284, %s286
    %p290 = scmp.eq.s32.totalorder %s19, 0
    %p291 = por %p289, %p290
    %p292 = scmp.ne.s32.totalorder %s284, %s286
    %p293 = scmp.eq.s32.totalorder %s24, 1
    %p294 = por %p292, %p293
    %p295 = scmp.ne.s32.totalorder %s286, %s287
    %p296 = scmp.eq.s32.totalorder %s24, 0
    %p297 = por %p295, %p296
    %p298 = scmp.ne.s32.totalorder %s286, %s287
    %p299 = scmp.eq.s32.totalorder %s25, 1
    %p300 = por %p298, %p299
    %p302 = scmp.ne.s32.totalorder %s287, %s301
    %p303 = scmp.eq.s32.totalorder %s25, 0
    %p304 = por %p302, %p303
    %s305 = ssub.s32 %s19, %s26
    %p306 = scmp.eq.s32.totalorder %s305, 0
    %s308 = sadd.s32 %s307, 1
    %s309 = scalar_select %p306, %s307, %s308
    %p312 = pneg %p306
    %p313 = scmp.eq.s32.totalorder %s19, 1
    %p314 = por %p312, %p313
    %p315 = scmp.ne.s32.totalorder %s307, %s310
    %p316 = scmp.eq.s32.totalorder %s19, 0
    %p317 = por %p315, %p316
    %p318 = scmp.ne.s32.totalorder %s307, %s310
    %p319 = scmp.eq.s32.totalorder %s24, 1
    %p320 = por %p318, %p319
    %p321 = scmp.ne.s32.totalorder %s310, %s311
    %p322 = scmp.eq.s32.totalorder %s24, 0
    %p323 = por %p321, %p322
    %p324 = scmp.ne.s32.totalorder %s310, %s311
    %p325 = scmp.eq.s32.totalorder %s25, 1
    %p326 = por %p324, %p325
    %p328 = scmp.ne.s32.totalorder %s311, %s327
    %p329 = scmp.eq.s32.totalorder %s25, 0
    %p330 = por %p328, %p329
    %p331 = scmp.le.s32.totalorder 1, %s19
    %p332 = scmp.lt.s32.totalorder %s19, 3
    %p333 = pnand %p331, %p332
    %p334 = pneg %p333
    // Predicated region
    $region9: #{tpu_custom_call.1} parent=5 // pred_check
      _
    $region10: #{tpu_custom_call.1} parent=5 // pred_check_branch
      %336 = sbr.rel (%p333) target = $region12
    $region11: #{tpu_custom_call.1} parent=5 // pred_region
      %s337 = ssub.s32 %s19, 1
      // Predicated region
      $region13: #{tpu_custom_call.1} parent=11 // pred_check
        %p338 = pneg %p66
      $region14: #{tpu_custom_call.1} parent=11 // pred_check_branch
        %340 = sbr.rel (%p338) target = $region16
      $region15: #{tpu_custom_call.1} parent=11 // pred_region
        _
      $region16: #{tpu_custom_call.1} parent=11 // pred_fallthru
        _
      // Predicated region
      $region17: #{tpu_custom_call.1} parent=11 // pred_check
        %p341 = pneg %p87
      $region18: #{tpu_custom_call.1} parent=11 // pred_check_branch
        %343 = sbr.rel (%p341) target = $region20
      $region19: #{tpu_custom_call.1} parent=11 // pred_region
        _
      $region20: #{tpu_custom_call.1} parent=11 // pred_fallthru
        _
      // Predicated region
      $region21: #{tpu_custom_call.1} parent=11 // pred_check
        %p344 = pneg %p108
      $region22: #{tpu_custom_call.1} parent=11 // pred_check_branch
        %346 = sbr.rel (%p344) target = $region24
      $region23: #{tpu_custom_call.1} parent=11 // pred_region
        _
      $region24: #{tpu_custom_call.1} parent=11 // pred_fallthru
        _
      // Predicated region
      $region25: #{tpu_custom_call.1} parent=11 // pred_check
        %p347 = pneg %p129
      $region26: #{tpu_custom_call.1} parent=11 // pred_check_branch
        %349 = sbr.rel (%p347) target = $region28
      $region27: #{tpu_custom_call.1} parent=11 // pred_region
        _
      $region28: #{tpu_custom_call.1} parent=11 // pred_fallthru
        _
      // Predicated region
      $region29: #{tpu_custom_call.1} parent=11 // pred_check
        %p350 = pneg %p150
      $region30: #{tpu_custom_call.1} parent=11 // pred_check_branch
        %352 = sbr.rel (%p350) target = $region32
      $region31: #{tpu_custom_call.1} parent=11 // pred_region
        _
      $region32: #{tpu_custom_call.1} parent=11 // pred_fallthru
        _
      // Predicated region
      $region33: #{tpu_custom_call.1} parent=11 // pred_check
        %p353 = pneg %p171
      $region34: #{tpu_custom_call.1} parent=11 // pred_check_branch
        %355 = sbr.rel (%p353) target = $region36
      $region35: #{tpu_custom_call.1} parent=11 // pred_region
        _
      $region36: #{tpu_custom_call.1} parent=11 // pred_fallthru
        _
      // Predicated region
      $region37: #{tpu_custom_call.1} parent=11 // pred_check
        %p356 = pneg %p192
      $region38: #{tpu_custom_call.1} parent=11 // pred_check_branch
        %358 = sbr.rel (%p356) target = $region40
      $region39: #{tpu_custom_call.1} parent=11 // pred_region
        _
      $region40: #{tpu_custom_call.1} parent=11 // pred_fallthru
        _
      // Predicated region
      $region41: #{tpu_custom_call.1} parent=11 // pred_check
        %p359 = pneg %p213
      $region42: #{tpu_custom_call.1} parent=11 // pred_check_branch
        %361 = sbr.rel (%p359) target = $region44
      $region43: #{tpu_custom_call.1} parent=11 // pred_region
        _
      $region44: #{tpu_custom_call.1} parent=11 // pred_fallthru
        _
      // Predicated region
      $region45: #{tpu_custom_call.1} parent=11 // pred_check
        %p362 = pneg %p234
      $region46: #{tpu_custom_call.1} parent=11 // pred_check_branch
        %364 = sbr.rel (%p362) target = $region48
      $region47: #{tpu_custom_call.1} parent=11 // pred_region
        _
      $region48: #{tpu_custom_call.1} parent=11 // pred_fallthru
        _
      // Predicated region
      $region49: #{tpu_custom_call.1} parent=11 // pred_check
        %p365 = pneg %p255
      $region50: #{tpu_custom_call.1} parent=11 // pred_check_branch
        %367 = sbr.rel (%p365) target = $region52
      $region51: #{tpu_custom_call.1} parent=11 // pred_region
        _
      $region52: #{tpu_custom_call.1} parent=11 // pred_fallthru
        _
      // Predicated region
      $region53: #{tpu_custom_call.1} parent=11 // pred_check
        %p368 = pneg %p276
      $region54: #{tpu_custom_call.1} parent=11 // pred_check_branch
        %370 = sbr.rel (%p368) target = $region56
      $region55: #{tpu_custom_call.1} parent=11 // pred_region
        _
      $region56: #{tpu_custom_call.1} parent=11 // pred_fallthru
        _
      // Predicated region
      $region57: #{tpu_custom_call.1} parent=11 // pred_check
        %p371 = pneg %p297
      $region58: #{tpu_custom_call.1} parent=11 // pred_check_branch
        %373 = sbr.rel (%p371) target = $region60
      $region59: #{tpu_custom_call.1} parent=11 // pred_region
        _
      $region60: #{tpu_custom_call.1} parent=11 // pred_fallthru
        _
    $region12: #{tpu_custom_call.1} parent=5 // pred_fallthru
      _
    %p374 = scmp.lt.s32.totalorder %s19, 2
    // Predicated region
    $region61: #{tpu_custom_call.1} parent=5 // pred_check
      %p375 = pneg %p374
    $region62: #{tpu_custom_call.1} parent=5 // pred_check_branch
      %377 = sbr.rel (%p375) target = $region64
    $region63: #{tpu_custom_call.1} parent=5 // pred_region
      // Predicated region
      $region65: #{tpu_custom_call.1} parent=63 // pred_check
        %p378 = pneg %p39
      $region66: #{tpu_custom_call.1} parent=63 // pred_check_branch
        %380 = sbr.rel (%p378) target = $region68
      $region67: #{tpu_custom_call.1} parent=63 // pred_region
        %p381 = scmp.lt.s32.totalorder %s19, 1
        %s382 = scalar_select %p381, %s19, 1
        %s383 = smul.addr %s382, 32
        %s384 = smul.addr %s383, 4
        %s385 = scalar_lea.vmem %s0, %s384
      $region68: #{tpu_custom_call.1} parent=63 // pred_fallthru
        _
    $region64: #{tpu_custom_call.1} parent=5 // pred_fallthru
      _
    %p386 = scmp.le.s32.totalorder 1, %s19
    %p387 = scmp.lt.s32.totalorder %s19, 3
    %p388 = pnand %p386, %p387
    %p389 = pneg %p388
    // Predicated region
    $region69: #{tpu_custom_call.1} parent=5 // pred_check
      _
    $region70: #{tpu_custom_call.1} parent=5 // pred_check_branch
      %391 = sbr.rel (%p388) target = $region72
    $region71: #{tpu_custom_call.1} parent=5 // pred_region
      %s392 = ssub.s32 %s19, 1
      %p393 = scmp.lt.s32.totalorder %s24, 1
      %s394 = scalar_select %p393, %s24, 1
      %s395 = smul.addr %s394, 32
      %s396 = smul.addr %s395, 4
      %s397 = scalar_lea.vmem %s0, %s396
      %p398 = pneg %p45
      %p399 = pneg %p42
      %p400 = pneg %p66
      %p401 = pneg %p63
      %p402 = pneg %p87
      %p403 = pneg %p84
      %p404 = pneg %p108
      %p405 = pneg %p105
      %p406 = pneg %p129
      %p407 = pneg %p126
      %p408 = pneg %p150
      %p409 = pneg %p147
      %p410 = pneg %p171
      %p411 = pneg %p168
      %p412 = pneg %p192
      %p413 = pneg %p189
      %p414 = pneg %p213
      %p415 = pneg %p210
      %p416 = pneg %p234
      %p417 = pneg %p231
      %p418 = pneg %p255
      %p419 = pneg %p252
      %p420 = pneg %p276
      %p421 = pneg %p273
      %p422 = pneg %p297
      %p423 = pneg %p294
      %p424 = pneg %p323
      %p425 = pneg %p320
      %p426 = scmp.lt.s32.totalorder %s24, 1
      %s427 = scalar_select %p426, %s24, 1
      %s428 = smul.addr %s427, 32
      %s429 = smul.addr %s428, 8
      %s430 = scalar_lea.vmem %s13, %s429
      %p431 = scmp.lt.s32.totalorder %s24, 1
      %s432 = scalar_select %p431, %s24, 1
      %s433 = smul.addr %s432, 32
      %s434 = smul.addr %s433, 4
      %s435 = scalar_lea.vmem %s0, %s434
      %p436 = scmp.lt.s32.totalorder %s24, 1
      %s437 = scalar_select %p436, %s24, 1
      %s438 = smul.addr %s437, 32
      %s439 = smul.addr %s438, 8
      %s440 = scalar_lea.vmem %s13, %s439
      %v442 = vld [vmem:[%s435] sm:$0xf]
      %v443 = vld [vmem:[%s435 + $0x4] sm:$0xf]
      %v444 = vld [vmem:[%s435 + $0x8] sm:$0xf]
      %v445 = vld [vmem:[%s435 + $0xc] sm:$0xf]
      %v446 = vld [vmem:[%s435 + $0x10] sm:$0xf]
      %v447 = vld [vmem:[%s435 + $0x14] sm:$0xf]
      %v448 = vld [vmem:[%s435 + $0x18] sm:$0xf]
      %v449 = vld [vmem:[%s435 + $0x1c] sm:$0xf]
      %v450 = vld [vmem:[%s435 + $0x20] sm:$0xf]
      %v451 = vld [vmem:[%s435 + $0x24] sm:$0xf]
      %v452 = vld [vmem:[%s435 + $0x28] sm:$0xf]
      %v453 = vld [vmem:[%s435 + $0x2c] sm:$0xf]
      %v454 = vld [vmem:[%s435 + $0x30] sm:$0xf]
      %v455 = vld [vmem:[%s435 + $0x34] sm:$0xf]
      %v456 = vld [vmem:[%s435 + $0x38] sm:$0xf]
      %v457 = vld [vmem:[%s435 + $0x3c] sm:$0xf]
      %v458 = vld [vmem:[%s435 + $0x40] sm:$0xf]
      %v459 = vld [vmem:[%s435 + $0x44] sm:$0xf]
      %v460 = vld [vmem:[%s435 + $0x48] sm:$0xf]
      %v461 = vld [vmem:[%s435 + $0x4c] sm:$0xf]
      %v462 = vld [vmem:[%s435 + $0x50] sm:$0xf]
      %v463 = vld [vmem:[%s435 + $0x54] sm:$0xf]
      %v464 = vld [vmem:[%s435 + $0x58] sm:$0xf]
      %v465 = vld [vmem:[%s435 + $0x5c] sm:$0xf]
      %v466 = vld [vmem:[%s435 + $0x60] sm:$0xf]
      %v467 = vld [vmem:[%s435 + $0x64] sm:$0xf]
      %v468 = vld [vmem:[%s435 + $0x68] sm:$0xf]
      %v469 = vld [vmem:[%s435 + $0x6c] sm:$0xf]
      %v470 = vld [vmem:[%s435 + $0x70] sm:$0xf]
      %v471 = vld [vmem:[%s435 + $0x74] sm:$0xf]
      %v472 = vld [vmem:[%s435 + $0x78] sm:$0xf]
      %v473 = vld [vmem:[%s435 + $0x7c] sm:$0xf]
      %v474 = vunpack.c.l.bf16 %v442
      %v475 = vunpack.c.l.bf16 %v443
      %v476 = vunpack.c.l.bf16 %v444
      %v477 = vunpack.c.l.bf16 %v445
      %v478 = vunpack.c.l.bf16 %v446
      %v479 = vunpack.c.l.bf16 %v447
      %v480 = vunpack.c.l.bf16 %v448
      %v481 = vunpack.c.l.bf16 %v449
      %v482 = vunpack.c.l.bf16 %v450
      %v483 = vunpack.c.l.bf16 %v451
      %v484 = vunpack.c.l.bf16 %v452
      %v485 = vunpack.c.l.bf16 %v453
      %v486 = vunpack.c.l.bf16 %v454
      %v487 = vunpack.c.l.bf16 %v455
      %v488 = vunpack.c.l.bf16 %v456
      %v489 = vunpack.c.l.bf16 %v457
      %v490 = vunpack.c.l.bf16 %v458
      %v491 = vunpack.c.l.bf16 %v459
      %v492 = vunpack.c.l.bf16 %v460
      %v493 = vunpack.c.l.bf16 %v461
      %v494 = vunpack.c.l.bf16 %v462
      %v495 = vunpack.c.l.bf16 %v463
      %v496 = vunpack.c.l.bf16 %v464
      %v497 = vunpack.c.l.bf16 %v465
      %v498 = vunpack.c.l.bf16 %v466
      %v499 = vunpack.c.l.bf16 %v467
      %v500 = vunpack.c.l.bf16 %v468
      %v501 = vunpack.c.l.bf16 %v469
      %v502 = vunpack.c.l.bf16 %v470
      %v503 = vunpack.c.l.bf16 %v471
      %v504 = vunpack.c.l.bf16 %v472
      %v505 = vunpack.c.l.bf16 %v473
      %v506 = vld [vmem:[%s2] sm:$0x1]
      %v508 = vlaneseq
      %v509 = vshrl.u32 %v508, 7
      %v510 = vsub.s32 0, %v509
      %v511 = vrot.slane %v506, %v510
      %v513 = vmul.f32 %v474, %v511
      %v514 = vmul.f32 %v475, %v511
      %v515 = vmul.f32 %v476, %v511
      %v516 = vmul.f32 %v477, %v511
      %v517 = vmul.f32 %v478, %v511
      %v518 = vmul.f32 %v479, %v511
      %v519 = vmul.f32 %v480, %v511
      %v520 = vmul.f32 %v481, %v511
      %v521 = vmul.f32 %v482, %v511
      %v522 = vmul.f32 %v483, %v511
      %v523 = vmul.f32 %v484, %v511
      %v524 = vmul.f32 %v485, %v511
      %v525 = vmul.f32 %v486, %v511
      %v526 = vmul.f32 %v487, %v511
      %v527 = vmul.f32 %v488, %v511
      %v528 = vmul.f32 %v489, %v511
      %v529 = vmul.f32 %v490, %v511
      %v530 = vmul.f32 %v491, %v511
      %v531 = vmul.f32 %v492, %v511
      %v532 = vmul.f32 %v493, %v511
      %v533 = vmul.f32 %v494, %v511
      %v534 = vmul.f32 %v495, %v511
      %v535 = vmul.f32 %v496, %v511
      %v536 = vmul.f32 %v497, %v511
      %v537 = vmul.f32 %v498, %v511
      %v538 = vmul.f32 %v499, %v511
      %v539 = vmul.f32 %v500, %v511
      %v540 = vmul.f32 %v501, %v511
      %v541 = vmul.f32 %v502, %v511
      %v542 = vmul.f32 %v503, %v511
      %v543 = vmul.f32 %v504, %v511
      %v544 = vmul.f32 %v505, %v511
      %v545 = vld [vmem:[%s3] sm:$0x1]
      %v547 = vlaneseq
      %v548 = vshrl.u32 %v547, 7
      %v549 = vsub.s32 0, %v548
      %v550 = vrot.slane %v545, %v549
      %v552 = vadd.f32 %v513, %v550
      %v553 = vadd.f32 %v514, %v550
      %v554 = vadd.f32 %v515, %v550
      %v555 = vadd.f32 %v516, %v550
      %v556 = vadd.f32 %v517, %v550
      %v557 = vadd.f32 %v518, %v550
      %v558 = vadd.f32 %v519, %v550
      %v559 = vadd.f32 %v520, %v550
      %v560 = vadd.f32 %v521, %v550
      %v561 = vadd.f32 %v522, %v550
      %v562 = vadd.f32 %v523, %v550
      %v563 = vadd.f32 %v524, %v550
      %v564 = vadd.f32 %v525, %v550
      %v565 = vadd.f32 %v526, %v550
      %v566 = vadd.f32 %v527, %v550
      %v567 = vadd.f32 %v528, %v550
      %v568 = vadd.f32 %v529, %v550
      %v569 = vadd.f32 %v530, %v550
      %v570 = vadd.f32 %v531, %v550
      %v571 = vadd.f32 %v532, %v550
      %v572 = vadd.f32 %v533, %v550
      %v573 = vadd.f32 %v534, %v550
      %v574 = vadd.f32 %v535, %v550
      %v575 = vadd.f32 %v536, %v550
      %v576 = vadd.f32 %v537, %v550
      %v577 = vadd.f32 %v538, %v550
      %v578 = vadd.f32 %v539, %v550
      %v579 = vadd.f32 %v540, %v550
      %v580 = vadd.f32 %v541, %v550
      %v581 = vadd.f32 %v542, %v550
      %v582 = vadd.f32 %v543, %v550
      %v583 = vadd.f32 %v544, %v550
      %vm584 = vcmask 31744
      %585 = vst.msk [vmem:[#allocation2] sm:$0xff] %vm584, 0.0
      %586 = vst.msk [vmem:[#allocation2 + $0x8] sm:$0xff] %vm584, 0.0
      %587 = vst.msk [vmem:[#allocation2 + $0x10] sm:$0xff] %vm584, 0.0
      %588 = vst.msk [vmem:[#allocation2 + $0x18] sm:$0xff] %vm584, 0.0
      %589 = vst.msk [vmem:[#allocation2 + $0x20] sm:$0xff] %vm584, 0.0
      %590 = vst.msk [vmem:[#allocation2 + $0x28] sm:$0xff] %vm584, 0.0
      %591 = vst.msk [vmem:[#allocation2 + $0x30] sm:$0xff] %vm584, 0.0
      %592 = vst.msk [vmem:[#allocation2 + $0x38] sm:$0xff] %vm584, 0.0
      %593 = vst.msk [vmem:[#allocation2 + $0x40] sm:$0xff] %vm584, 0.0
      %594 = vst.msk [vmem:[#allocation2 + $0x48] sm:$0xff] %vm584, 0.0
      %595 = vst.msk [vmem:[#allocation2 + $0x50] sm:$0xff] %vm584, 0.0
      %596 = vst.msk [vmem:[#allocation2 + $0x58] sm:$0xff] %vm584, 0.0
      %597 = vst.msk [vmem:[#allocation2 + $0x60] sm:$0xff] %vm584, 0.0
      %598 = vst.msk [vmem:[#allocation2 + $0x68] sm:$0xff] %vm584, 0.0
      %599 = vst.msk [vmem:[#allocation2 + $0x70] sm:$0xff] %vm584, 0.0
      %600 = vst.msk [vmem:[#allocation2 + $0x78] sm:$0xff] %vm584, 0.0
      %601 = vst.msk [vmem:[#allocation2 + $0x80] sm:$0xff] %vm584, 0.0
      %602 = vst.msk [vmem:[#allocation2 + $0x88] sm:$0xff] %vm584, 0.0
      %603 = vst.msk [vmem:[#allocation2 + $0x90] sm:$0xff] %vm584, 0.0
      %604 = vst.msk [vmem:[#allocation2 + $0x98] sm:$0xff] %vm584, 0.0
      %605 = vst.msk [vmem:[#allocation2 + $0xa0] sm:$0xff] %vm584, 0.0
      %606 = vst.msk [vmem:[#allocation2 + $0xa8] sm:$0xff] %vm584, 0.0
      %607 = vst.msk [vmem:[#allocation2 + $0xb0] sm:$0xff] %vm584, 0.0
      %608 = vst.msk [vmem:[#allocation2 + $0xb8] sm:$0xff] %vm584, 0.0
      %609 = vst.msk [vmem:[#allocation2 + $0xc0] sm:$0xff] %vm584, 0.0
      %610 = vst.msk [vmem:[#allocation2 + $0xc8] sm:$0xff] %vm584, 0.0
      %611 = vst.msk [vmem:[#allocation2 + $0xd0] sm:$0xff] %vm584, 0.0
      %612 = vst.msk [vmem:[#allocation2 + $0xd8] sm:$0xff] %vm584, 0.0
      %613 = vst.msk [vmem:[#allocation2 + $0xe0] sm:$0xff] %vm584, 0.0
      %614 = vst.msk [vmem:[#allocation2 + $0xe8] sm:$0xff] %vm584, 0.0
      %615 = vst.msk [vmem:[#allocation2 + $0xf0] sm:$0xff] %vm584, 0.0
      %616 = vst.msk [vmem:[#allocation2 + $0xf8] sm:$0xff] %vm584, 0.0
      %617 = vst.msk [vmem:[#allocation2 + $0x100] sm:$0xff] %vm584, 0.0
      %618 = vst.msk [vmem:[#allocation2 + $0x108] sm:$0xff] %vm584, 0.0
      %619 = vst.msk [vmem:[#allocation2 + $0x110] sm:$0xff] %vm584, 0.0
      %620 = vst.msk [vmem:[#allocation2 + $0x118] sm:$0xff] %vm584, 0.0
      %621 = vst.msk [vmem:[#allocation2 + $0x120] sm:$0xff] %vm584, 0.0
      %622 = vst.msk [vmem:[#allocation2 + $0x128] sm:$0xff] %vm584, 0.0
      %623 = vst.msk [vmem:[#allocation2 + $0x130] sm:$0xff] %vm584, 0.0
      %624 = vst.msk [vmem:[#allocation2 + $0x138] sm:$0xff] %vm584, 0.0
      %625 = vst.msk [vmem:[#allocation2 + $0x140] sm:$0xff] %vm584, 0.0
      %626 = vst.msk [vmem:[#allocation2 + $0x148] sm:$0xff] %vm584, 0.0
      %627 = vst.msk [vmem:[#allocation2 + $0x150] sm:$0xff] %vm584, 0.0
      %628 = vst.msk [vmem:[#allocation2 + $0x158] sm:$0xff] %vm584, 0.0
      %629 = vst.msk [vmem:[#allocation2 + $0x160] sm:$0xff] %vm584, 0.0
      %630 = vst.msk [vmem:[#allocation2 + $0x168] sm:$0xff] %vm584, 0.0
      %631 = vst.msk [vmem:[#allocation2 + $0x170] sm:$0xff] %vm584, 0.0
      %632 = vst.msk [vmem:[#allocation2 + $0x178] sm:$0xff] %vm584, 0.0
      %633 = vst.msk [vmem:[#allocation2 + $0x180] sm:$0xff] %vm584, 0.0
      %634 = vst.msk [vmem:[#allocation2 + $0x188] sm:$0xff] %vm584, 0.0
      %635 = vst.msk [vmem:[#allocation2 + $0x190] sm:$0xff] %vm584, 0.0
      %636 = vst.msk [vmem:[#allocation2 + $0x198] sm:$0xff] %vm584, 0.0
      %637 = vst.msk [vmem:[#allocation2 + $0x1a0] sm:$0xff] %vm584, 0.0
      %638 = vst.msk [vmem:[#allocation2 + $0x1a8] sm:$0xff] %vm584, 0.0
      %639 = vst.msk [vmem:[#allocation2 + $0x1b0] sm:$0xff] %vm584, 0.0
      %640 = vst.msk [vmem:[#allocation2 + $0x1b8] sm:$0xff] %vm584, 0.0
      %641 = vst.msk [vmem:[#allocation2 + $0x1c0] sm:$0xff] %vm584, 0.0
      %642 = vst.msk [vmem:[#allocation2 + $0x1c8] sm:$0xff] %vm584, 0.0
      %643 = vst.msk [vmem:[#allocation2 + $0x1d0] sm:$0xff] %vm584, 0.0
      %644 = vst.msk [vmem:[#allocation2 + $0x1d8] sm:$0xff] %vm584, 0.0
      %645 = vst.msk [vmem:[#allocation2 + $0x1e0] sm:$0xff] %vm584, 0.0
      %646 = vst.msk [vmem:[#allocation2 + $0x1e8] sm:$0xff] %vm584, 0.0
      %647 = vst.msk [vmem:[#allocation2 + $0x1f0] sm:$0xff] %vm584, 0.0
      %648 = vst.msk [vmem:[#allocation2 + $0x1f8] sm:$0xff] %vm584, 0.0
      %649 = vst.msk [vmem:[#allocation2 + $0x200] sm:$0xff] %vm584, 0.0
      %650 = vst.msk [vmem:[#allocation2 + $0x208] sm:$0xff] %vm584, 0.0
      %651 = vst.msk [vmem:[#allocation2 + $0x210] sm:$0xff] %vm584, 0.0
      %652 = vst.msk [vmem:[#allocation2 + $0x218] sm:$0xff] %vm584, 0.0
      %653 = vst.msk [vmem:[#allocation2 + $0x220] sm:$0xff] %vm584, 0.0
      %654 = vst.msk [vmem:[#allocation2 + $0x228] sm:$0xff] %vm584, 0.0
      %655 = vst.msk [vmem:[#allocation2 + $0x230] sm:$0xff] %vm584, 0.0
      %656 = vst.msk [vmem:[#allocation2 + $0x238] sm:$0xff] %vm584, 0.0
      %s657 = scalar_lea.vmem [#allocation2], 32
      %658 = vst.msk [vmem:[%s657 + $0x8] sm:$0xff] %vm584, %v552
      %659 = vst.msk [vmem:[%s657 + $0x10] sm:$0xff] %vm584, %v553
      %660 = vst.msk [vmem:[%s657 + $0x28] sm:$0xff] %vm584, %v554
      %661 = vst.msk [vmem:[%s657 + $0x30] sm:$0xff] %vm584, %v555
      %662 = vst.msk [vmem:[%s657 + $0x48] sm:$0xff] %vm584, %v556
      %663 = vst.msk [vmem:[%s657 + $0x50] sm:$0xff] %vm584, %v557
      %664 = vst.msk [vmem:[%s657 + $0x68] sm:$0xff] %vm584, %v558
      %665 = vst.msk [vmem:[%s657 + $0x70] sm:$0xff] %vm584, %v559
      %666 = vst.msk [vmem:[%s657 + $0x88] sm:$0xff] %vm584, %v560
      %667 = vst.msk [vmem:[%s657 + $0x90] sm:$0xff] %vm584, %v561
      %668 = vst.msk [vmem:[%s657 + $0xa8] sm:$0xff] %vm584, %v562
      %669 = vst.msk [vmem:[%s657 + $0xb0] sm:$0xff] %vm584, %v563
      %670 = vst.msk [vmem:[%s657 + $0xc8] sm:$0xff] %vm584, %v564
      %671 = vst.msk [vmem:[%s657 + $0xd0] sm:$0xff] %vm584, %v565
      %672 = vst.msk [vmem:[%s657 + $0xe8] sm:$0xff] %vm584, %v566
      %673 = vst.msk [vmem:[%s657 + $0xf0] sm:$0xff] %vm584, %v567
      %674 = vst.msk [vmem:[%s657 + $0x108] sm:$0xff] %vm584, %v568
      %675 = vst.msk [vmem:[%s657 + $0x110] sm:$0xff] %vm584, %v569
      %676 = vst.msk [vmem:[%s657 + $0x128] sm:$0xff] %vm584, %v570
      %677 = vst.msk [vmem:[%s657 + $0x130] sm:$0xff] %vm584, %v571
      %678 = vst.msk [vmem:[%s657 + $0x148] sm:$0xff] %vm584, %v572
      %679 = vst.msk [vmem:[%s657 + $0x150] sm:$0xff] %vm584, %v573
      %680 = vst.msk [vmem:[%s657 + $0x168] sm:$0xff] %vm584, %v574
      %681 = vst.msk [vmem:[%s657 + $0x170] sm:$0xff] %vm584, %v575
      %682 = vst.msk [vmem:[%s657 + $0x188] sm:$0xff] %vm584, %v576
      %683 = vst.msk [vmem:[%s657 + $0x190] sm:$0xff] %vm584, %v577
      %684 = vst.msk [vmem:[%s657 + $0x1a8] sm:$0xff] %vm584, %v578
      %685 = vst.msk [vmem:[%s657 + $0x1b0] sm:$0xff] %vm584, %v579
      %686 = vst.msk [vmem:[%s657 + $0x1c8] sm:$0xff] %vm584, %v580
      %687 = vst.msk [vmem:[%s657 + $0x1d0] sm:$0xff] %vm584, %v581
      %688 = vst.msk [vmem:[%s657 + $0x1e8] sm:$0xff] %vm584, %v582
      %689 = vst.msk [vmem:[%s657 + $0x1f0] sm:$0xff] %vm584, %v583
      %v690 = vld [vmem:[#allocation2] sm:$0xff]
      %v691 = vld [vmem:[#allocation2 + $0x8] sm:$0xff]
      %v692 = vld [vmem:[#allocation2 + $0x10] sm:$0xff]
      %v693 = vld [vmem:[#allocation2 + $0x18] sm:$0xff]
      %v694 = vld [vmem:[#allocation2 + $0x20] sm:$0xff]
      %v695 = vld [vmem:[#allocation2 + $0x28] sm:$0xff]
      %v696 = vld [vmem:[#allocation2 + $0x30] sm:$0xff]
      %v697 = vld [vmem:[#allocation2 + $0x38] sm:$0xff]
      %v698 = vld [vmem:[#allocation2 + $0x40] sm:$0xff]
      %v699 = vld [vmem:[#allocation2 + $0x48] sm:$0xff]
      %v700 = vld [vmem:[#allocation2 + $0x50] sm:$0xff]
      %v701 = vld [vmem:[#allocation2 + $0x58] sm:$0xff]
      %v702 = vld [vmem:[#allocation2 + $0x60] sm:$0xff]
      %v703 = vld [vmem:[#allocation2 + $0x68] sm:$0xff]
      %v704 = vld [vmem:[#allocation2 + $0x70] sm:$0xff]
      %v705 = vld [vmem:[#allocation2 + $0x78] sm:$0xff]
      %v706 = vld [vmem:[#allocation2 + $0x80] sm:$0xff]
      %v707 = vld [vmem:[#allocation2 + $0x88] sm:$0xff]
      %v708 = vld [vmem:[#allocation2 + $0x90] sm:$0xff]
      %v709 = vld [vmem:[#allocation2 + $0x98] sm:$0xff]
      %v710 = vld [vmem:[#allocation2 + $0xa0] sm:$0xff]
      %v711 = vld [vmem:[#allocation2 + $0xa8] sm:$0xff]
      %v712 = vld [vmem:[#allocation2 + $0xb0] sm:$0xff]
      %v713 = vld [vmem:[#allocation2 + $0xb8] sm:$0xff]
      %v714 = vld [vmem:[#allocation2 + $0xc0] sm:$0xff]
      %v715 = vld [vmem:[#allocation2 + $0xc8] sm:$0xff]
      %v716 = vld [vmem:[#allocation2 + $0xd0] sm:$0xff]
      %v717 = vld [vmem:[#allocation2 + $0xd8] sm:$0xff]
      %v718 = vld [vmem:[#allocation2 + $0xe0] sm:$0xff]
      %v719 = vld [vmem:[#allocation2 + $0xe8] sm:$0xff]
      %v720 = vld [vmem:[#allocation2 + $0xf0] sm:$0xff]
      %v721 = vld [vmem:[#allocation2 + $0xf8] sm:$0xff]
      %v722 = vld [vmem:[#allocation2 + $0x100] sm:$0xff]
      %v723 = vld [vmem:[#allocation2 + $0x108] sm:$0xff]
      %v724 = vld [vmem:[#allocation2 + $0x110] sm:$0xff]
      %v725 = vld [vmem:[#allocation2 + $0x118] sm:$0xff]
      %v726 = vld [vmem:[#allocation2 + $0x120] sm:$0xff]
      %v727 = vld [vmem:[#allocation2 + $0x128] sm:$0xff]
      %v728 = vld [vmem:[#allocation2 + $0x130] sm:$0xff]
      %v729 = vld [vmem:[#allocation2 + $0x138] sm:$0xff]
      %v730 = vld [vmem:[#allocation2 + $0x140] sm:$0xff]
      %v731 = vld [vmem:[#allocation2 + $0x148] sm:$0xff]
      %v732 = vld [vmem:[#allocation2 + $0x150] sm:$0xff]
      %v733 = vld [vmem:[#allocation2 + $0x158] sm:$0xff]
      %v734 = vld [vmem:[#allocation2 + $0x160] sm:$0xff]
      %v735 = vld [vmem:[#allocation2 + $0x168] sm:$0xff]
      %v736 = vld [vmem:[#allocation2 + $0x170] sm:$0xff]
      %v737 = vld [vmem:[#allocation2 + $0x178] sm:$0xff]
      %v738 = vld [vmem:[#allocation2 + $0x180] sm:$0xff]
      %v739 = vld [vmem:[#allocation2 + $0x188] sm:$0xff]
      %v740 = vld [vmem:[#allocation2 + $0x190] sm:$0xff]
      %v741 = vld [vmem:[#allocation2 + $0x198] sm:$0xff]
      %v742 = vld [vmem:[#allocation2 + $0x1a0] sm:$0xff]
      %v743 = vld [vmem:[#allocation2 + $0x1a8] sm:$0xff]
      %v744 = vld [vmem:[#allocation2 + $0x1b0] sm:$0xff]
      %v745 = vld [vmem:[#allocation2 + $0x1b8] sm:$0xff]
      %v746 = vld [vmem:[#allocation2 + $0x1c0] sm:$0xff]
      %v747 = vld [vmem:[#allocation2 + $0x1c8] sm:$0xff]
      %v748 = vld [vmem:[#allocation2 + $0x1d0] sm:$0xff]
      %v749 = vld [vmem:[#allocation2 + $0x1d8] sm:$0xff]
      %v750 = vld [vmem:[#allocation2 + $0x1e0] sm:$0xff]
      %v751 = vld [vmem:[#allocation2 + $0x1e8] sm:$0xff]
      %v752 = vld [vmem:[#allocation2 + $0x1f0] sm:$0xff]
      %v753 = vld [vmem:[#allocation2 + $0x1f8] sm:$0xff]
      %v754 = vld [vmem:[#allocation2 + $0x200] sm:$0xff]
      %v755 = vld [vmem:[#allocation2 + $0x208] sm:$0xff]
      %v756 = vld [vmem:[#allocation2 + $0x210] sm:$0xff]
      %v757 = vld [vmem:[#allocation2 + $0x218] sm:$0xff]
      %v758 = vld [vmem:[#allocation2 + $0x220] sm:$0xff]
      %v759 = vld [vmem:[#allocation2 + $0x228] sm:$0xff]
      %v760 = vld [vmem:[#allocation2 + $0x230] sm:$0xff]
      %v761 = vld [vmem:[#allocation2 + $0x238] sm:$0xff]
      %vm794 = vcmask 1046528
      %v795 = vrot.slane %v691, 1
      %v796 = vrot.slane %v692, 1
      %v797 = vsel %vm794, %v795, %v796
      %v798 = vrot.slane %v695, 1
      %v799 = vrot.slane %v696, 1
      %v800 = vsel %vm794, %v798, %v799
      %v801 = vrot.slane %v699, 1
      %v802 = vrot.slane %v700, 1
      %v803 = vsel %vm794, %v801, %v802
      %v804 = vrot.slane %v703, 1
      %v805 = vrot.slane %v704, 1
      %v806 = vsel %vm794, %v804, %v805
      %v807 = vrot.slane %v707, 1
      %v808 = vrot.slane %v708, 1
      %v809 = vsel %vm794, %v807, %v808
      %v810 = vrot.slane %v711, 1
      %v811 = vrot.slane %v712, 1
      %v812 = vsel %vm794, %v810, %v811
      %v813 = vrot.slane %v715, 1
      %v814 = vrot.slane %v716, 1
      %v815 = vsel %vm794, %v813, %v814
      %v816 = vrot.slane %v719, 1
      %v817 = vrot.slane %v720, 1
      %v818 = vsel %vm794, %v816, %v817
      %v819 = vrot.slane %v723, 1
      %v820 = vrot.slane %v724, 1
      %v821 = vsel %vm794, %v819, %v820
      %v822 = vrot.slane %v727, 1
      %v823 = vrot.slane %v728, 1
      %v824 = vsel %vm794, %v822, %v823
      %v825 = vrot.slane %v731, 1
      %v826 = vrot.slane %v732, 1
      %v827 = vsel %vm794, %v825, %v826
      %v828 = vrot.slane %v735, 1
      %v829 = vrot.slane %v736, 1
      %v830 = vsel %vm794, %v828, %v829
      %v831 = vrot.slane %v739, 1
      %v832 = vrot.slane %v740, 1
      %v833 = vsel %vm794, %v831, %v832
      %v834 = vrot.slane %v743, 1
      %v835 = vrot.slane %v744, 1
      %v836 = vsel %vm794, %v834, %v835
      %v837 = vrot.slane %v747, 1
      %v838 = vrot.slane %v748, 1
      %v839 = vsel %vm794, %v837, %v838
      %v840 = vrot.slane %v751, 1
      %v841 = vrot.slane %v752, 1
      %v842 = vsel %vm794, %v840, %v841
      %843 = vrot.lane.b32.xlu0 %v795, 4
      %v844 = vpop.permute.xlu0 %843
      %845 = vrot.lane.b32.xlu0 %v797, 4
      %v846 = vpop.permute.xlu0 %845
      %847 = vrot.lane.b32.xlu0 %v796, 4
      %v848 = vpop.permute.xlu0 %847
      %849 = vrot.lane.b32.xlu0 %v798, 4
      %v850 = vpop.permute.xlu0 %849
      %851 = vrot.lane.b32.xlu0 %v800, 4
      %v852 = vpop.permute.xlu0 %851
      %853 = vrot.lane.b32.xlu0 %v799, 4
      %v854 = vpop.permute.xlu0 %853
      %855 = vrot.lane.b32.xlu0 %v801, 4
      %v856 = vpop.permute.xlu0 %855
      %857 = vrot.lane.b32.xlu0 %v803, 4
      %v858 = vpop.permute.xlu0 %857
      %859 = vrot.lane.b32.xlu0 %v802, 4
      %v860 = vpop.permute.xlu0 %859
      %861 = vrot.lane.b32.xlu0 %v804, 4
      %v862 = vpop.permute.xlu0 %861
      %863 = vrot.lane.b32.xlu0 %v806, 4
      %v864 = vpop.permute.xlu0 %863
      %865 = vrot.lane.b32.xlu0 %v805, 4
      %v866 = vpop.permute.xlu0 %865
      %867 = vrot.lane.b32.xlu0 %v807, 4
      %v868 = vpop.permute.xlu0 %867
      %869 = vrot.lane.b32.xlu0 %v809, 4
      %v870 = vpop.permute.xlu0 %869
      %871 = vrot.lane.b32.xlu0 %v808, 4
      %v872 = vpop.permute.xlu0 %871
      %873 = vrot.lane.b32.xlu0 %v810, 4
      %v874 = vpop.permute.xlu0 %873
      %875 = vrot.lane.b32.xlu0 %v812, 4
      %v876 = vpop.permute.xlu0 %875
      %877 = vrot.lane.b32.xlu0 %v811, 4
      %v878 = vpop.permute.xlu0 %877
      %879 = vrot.lane.b32.xlu0 %v813, 4
      %v880 = vpop.permute.xlu0 %879
      %881 = vrot.lane.b32.xlu0 %v815, 4
      %v882 = vpop.permute.xlu0 %881
      %883 = vrot.lane.b32.xlu0 %v814, 4
      %v884 = vpop.permute.xlu0 %883
      %885 = vrot.lane.b32.xlu0 %v816, 4
      %v886 = vpop.permute.xlu0 %885
      %887 = vrot.lane.b32.xlu0 %v818, 4
      %v888 = vpop.permute.xlu0 %887
      %889 = vrot.lane.b32.xlu0 %v817, 4
      %v890 = vpop.permute.xlu0 %889
      %891 = vrot.lane.b32.xlu0 %v819, 4
      %v892 = vpop.permute.xlu0 %891
      %893 = vrot.lane.b32.xlu0 %v821, 4
      %v894 = vpop.permute.xlu0 %893
      %895 = vrot.lane.b32.xlu0 %v820, 4
      %v896 = vpop.permute.xlu0 %895
      %897 = vrot.lane.b32.xlu0 %v822, 4
      %v898 = vpop.permute.xlu0 %897
      %899 = vrot.lane.b32.xlu0 %v824, 4
      %v900 = vpop.permute.xlu0 %899
      %901 = vrot.lane.b32.xlu0 %v823, 4
      %v902 = vpop.permute.xlu0 %901
      %903 = vrot.lane.b32.xlu0 %v825, 4
      %v904 = vpop.permute.xlu0 %903
      %905 = vrot.lane.b32.xlu0 %v827, 4
      %v906 = vpop.permute.xlu0 %905
      %907 = vrot.lane.b32.xlu0 %v826, 4
      %v908 = vpop.permute.xlu0 %907
      %909 = vrot.lane.b32.xlu0 %v828, 4
      %v910 = vpop.permute.xlu0 %909
      %911 = vrot.lane.b32.xlu0 %v830, 4
      %v912 = vpop.permute.xlu0 %911
      %913 = vrot.lane.b32.xlu0 %v829, 4
      %v914 = vpop.permute.xlu0 %913
      %915 = vrot.lane.b32.xlu0 %v831, 4
      %v916 = vpop.permute.xlu0 %915
      %917 = vrot.lane.b32.xlu0 %v833, 4
      %v918 = vpop.permute.xlu0 %917
      %919 = vrot.lane.b32.xlu0 %v832, 4
      %v920 = vpop.permute.xlu0 %919
      %921 = vrot.lane.b32.xlu0 %v834, 4
      %v922 = vpop.permute.xlu0 %921
      %923 = vrot.lane.b32.xlu0 %v836, 4
      %v924 = vpop.permute.xlu0 %923
      %925 = vrot.lane.b32.xlu0 %v835, 4
      %v926 = vpop.permute.xlu0 %925
      %927 = vrot.lane.b32.xlu0 %v837, 4
      %v928 = vpop.permute.xlu0 %927
      %929 = vrot.lane.b32.xlu0 %v839, 4
      %v930 = vpop.permute.xlu0 %929
      %931 = vrot.lane.b32.xlu0 %v838, 4
      %v932 = vpop.permute.xlu0 %931
      %933 = vrot.lane.b32.xlu0 %v840, 4
      %v934 = vpop.permute.xlu0 %933
      %935 = vrot.lane.b32.xlu0 %v842, 4
      %v936 = vpop.permute.xlu0 %935
      %937 = vrot.lane.b32.xlu0 %v841, 4
      %v938 = vpop.permute.xlu0 %937
      %vm1003 = vcmask 1045504
      %v1004 = vrot.slane %v691, 2
      %v1005 = vrot.slane %v692, 2
      %v1006 = vsel %vm1003, %v1004, %v1005
      %v1007 = vrot.slane %v693, 2
      %v1008 = vsel %vm1003, %v1005, %v1007
      %v1009 = vrot.slane %v695, 2
      %v1010 = vrot.slane %v696, 2
      %v1011 = vsel %vm1003, %v1009, %v1010
      %v1012 = vrot.slane %v697, 2
      %v1013 = vsel %vm1003, %v1010, %v1012
      %v1014 = vrot.slane %v699, 2
      %v1015 = vrot.slane %v700, 2
      %v1016 = vsel %vm1003, %v1014, %v1015
      %v1017 = vrot.slane %v701, 2
      %v1018 = vsel %vm1003, %v1015, %v1017
      %v1019 = vrot.slane %v703, 2
      %v1020 = vrot.slane %v704, 2
      %v1021 = vsel %vm1003, %v1019, %v1020
      %v1022 = vrot.slane %v705, 2
      %v1023 = vsel %vm1003, %v1020, %v1022
      %v1024 = vrot.slane %v707, 2
      %v1025 = vrot.slane %v708, 2
      %v1026 = vsel %vm1003, %v1024, %v1025
      %v1027 = vrot.slane %v709, 2
      %v1028 = vsel %vm1003, %v1025, %v1027
      %v1029 = vrot.slane %v711, 2
      %v1030 = vrot.slane %v712, 2
      %v1031 = vsel %vm1003, %v1029, %v1030
      %v1032 = vrot.slane %v713, 2
      %v1033 = vsel %vm1003, %v1030, %v1032
      %v1034 = vrot.slane %v715, 2
      %v1035 = vrot.slane %v716, 2
      %v1036 = vsel %vm1003, %v1034, %v1035
      %v1037 = vrot.slane %v717, 2
      %v1038 = vsel %vm1003, %v1035, %v1037
      %v1039 = vrot.slane %v719, 2
      %v1040 = vrot.slane %v720, 2
      %v1041 = vsel %vm1003, %v1039, %v1040
      %v1042 = vrot.slane %v721, 2
      %v1043 = vsel %vm1003, %v1040, %v1042
      %v1044 = vrot.slane %v723, 2
      %v1045 = vrot.slane %v724, 2
      %v1046 = vsel %vm1003, %v1044, %v1045
      %v1047 = vrot.slane %v725, 2
      %v1048 = vsel %vm1003, %v1045, %v1047
      %v1049 = vrot.slane %v727, 2
      %v1050 = vrot.slane %v728, 2
      %v1051 = vsel %vm1003, %v1049, %v1050
      %v1052 = vrot.slane %v729, 2
      %v1053 = vsel %vm1003, %v1050, %v1052
      %v1054 = vrot.slane %v731, 2
      %v1055 = vrot.slane %v732, 2
      %v1056 = vsel %vm1003, %v1054, %v1055
      %v1057 = vrot.slane %v733, 2
      %v1058 = vsel %vm1003, %v1055, %v1057
      %v1059 = vrot.slane %v735, 2
      %v1060 = vrot.slane %v736, 2
      %v1061 = vsel %vm1003, %v1059, %v1060
      %v1062 = vrot.slane %v737, 2
      %v1063 = vsel %vm1003, %v1060, %v1062
      %v1064 = vrot.slane %v739, 2
      %v1065 = vrot.slane %v740, 2
      %v1066 = vsel %vm1003, %v1064, %v1065
      %v1067 = vrot.slane %v741, 2
      %v1068 = vsel %vm1003, %v1065, %v1067
      %v1069 = vrot.slane %v743, 2
      %v1070 = vrot.slane %v744, 2
      %v1071 = vsel %vm1003, %v1069, %v1070
      %v1072 = vrot.slane %v745, 2
      %v1073 = vsel %vm1003, %v1070, %v1072
      %v1074 = vrot.slane %v747, 2
      %v1075 = vrot.slane %v748, 2
      %v1076 = vsel %vm1003, %v1074, %v1075
      %v1077 = vrot.slane %v749, 2
      %v1078 = vsel %vm1003, %v1075, %v1077
      %v1079 = vrot.slane %v751, 2
      %v1080 = vrot.slane %v752, 2
      %v1081 = vsel %vm1003, %v1079, %v1080
      %v1082 = vrot.slane %v753, 2
      %v1083 = vsel %vm1003, %v1080, %v1082
      %1084 = vrot.lane.b32.xlu0 %v1004, 8
      %v1085 = vpop.permute.xlu0 %1084
      %1086 = vrot.lane.b32.xlu0 %v1006, 8
      %v1087 = vpop.permute.xlu0 %1086
      %1088 = vrot.lane.b32.xlu0 %v1008, 8
      %v1089 = vpop.permute.xlu0 %1088
      %1090 = vrot.lane.b32.xlu0 %v1009, 8
      %v1091 = vpop.permute.xlu0 %1090
      %1092 = vrot.lane.b32.xlu0 %v1011, 8
      %v1093 = vpop.permute.xlu0 %1092
      %1094 = vrot.lane.b32.xlu0 %v1013, 8
      %v1095 = vpop.permute.xlu0 %1094
      %1096 = vrot.lane.b32.xlu0 %v1014, 8
      %v1097 = vpop.permute.xlu0 %1096
      %1098 = vrot.lane.b32.xlu0 %v1016, 8
      %v1099 = vpop.permute.xlu0 %1098
      %1100 = vrot.lane.b32.xlu0 %v1018, 8
      %v1101 = vpop.permute.xlu0 %1100
      %1102 = vrot.lane.b32.xlu0 %v1019, 8
      %v1103 = vpop.permute.xlu0 %1102
      %1104 = vrot.lane.b32.xlu0 %v1021, 8
      %v1105 = vpop.permute.xlu0 %1104
      %1106 = vrot.lane.b32.xlu0 %v1023, 8
      %v1107 = vpop.permute.xlu0 %1106
      %1108 = vrot.lane.b32.xlu0 %v1024, 8
      %v1109 = vpop.permute.xlu0 %1108
      %1110 = vrot.lane.b32.xlu0 %v1026, 8
      %v1111 = vpop.permute.xlu0 %1110
      %1112 = vrot.lane.b32.xlu0 %v1028, 8
      %v1113 = vpop.permute.xlu0 %1112
      %1114 = vrot.lane.b32.xlu0 %v1029, 8
      %v1115 = vpop.permute.xlu0 %1114
      %1116 = vrot.lane.b32.xlu0 %v1031, 8
      %v1117 = vpop.permute.xlu0 %1116
      %1118 = vrot.lane.b32.xlu0 %v1033, 8
      %v1119 = vpop.permute.xlu0 %1118
      %1120 = vrot.lane.b32.xlu0 %v1034, 8
      %v1121 = vpop.permute.xlu0 %1120
      %1122 = vrot.lane.b32.xlu0 %v1036, 8
      %v1123 = vpop.permute.xlu0 %1122
      %1124 = vrot.lane.b32.xlu0 %v1038, 8
      %v1125 = vpop.permute.xlu0 %1124
      %1126 = vrot.lane.b32.xlu0 %v1039, 8
      %v1127 = vpop.permute.xlu0 %1126
      %1128 = vrot.lane.b32.xlu0 %v1041, 8
      %v1129 = vpop.permute.xlu0 %1128
      %1130 = vrot.lane.b32.xlu0 %v1043, 8
      %v1131 = vpop.permute.xlu0 %1130
      %1132 = vrot.lane.b32.xlu0 %v1044, 8
      %v1133 = vpop.permute.xlu0 %1132
      %1134 = vrot.lane.b32.xlu0 %v1046, 8
      %v1135 = vpop.permute.xlu0 %1134
      %1136 = vrot.lane.b32.xlu0 %v1048, 8
      %v1137 = vpop.permute.xlu0 %1136
      %1138 = vrot.lane.b32.xlu0 %v1049, 8
      %v1139 = vpop.permute.xlu0 %1138
      %1140 = vrot.lane.b32.xlu0 %v1051, 8
      %v1141 = vpop.permute.xlu0 %1140
      %1142 = vrot.lane.b32.xlu0 %v1053, 8
      %v1143 = vpop.permute.xlu0 %1142
      %1144 = vrot.lane.b32.xlu0 %v1054, 8
      %v1145 = vpop.permute.xlu0 %1144
      %1146 = vrot.lane.b32.xlu0 %v1056, 8
      %v1147 = vpop.permute.xlu0 %1146
      %1148 = vrot.lane.b32.xlu0 %v1058, 8
      %v1149 = vpop.permute.xlu0 %1148
      %1150 = vrot.lane.b32.xlu0 %v1059, 8
      %v1151 = vpop.permute.xlu0 %1150
      %1152 = vrot.lane.b32.xlu0 %v1061, 8
      %v1153 = vpop.permute.xlu0 %1152
      %1154 = vrot.lane.b32.xlu0 %v1063, 8
      %v1155 = vpop.permute.xlu0 %1154
      %1156 = vrot.lane.b32.xlu0 %v1064, 8
      %v1157 = vpop.permute.xlu0 %1156
      %1158 = vrot.lane.b32.xlu0 %v1066, 8
      %v1159 = vpop.permute.xlu0 %1158
      %1160 = vrot.lane.b32.xlu0 %v1068, 8
      %v1161 = vpop.permute.xlu0 %1160
      %1162 = vrot.lane.b32.xlu0 %v1069, 8
      %v1163 = vpop.permute.xlu0 %1162
      %1164 = vrot.lane.b32.xlu0 %v1071, 8
      %v1165 = vpop.permute.xlu0 %1164
      %1166 = vrot.lane.b32.xlu0 %v1073, 8
      %v1167 = vpop.permute.xlu0 %1166
      %1168 = vrot.lane.b32.xlu0 %v1074, 8
      %v1169 = vpop.permute.xlu0 %1168
      %1170 = vrot.lane.b32.xlu0 %v1076, 8
      %v1171 = vpop.permute.xlu0 %1170
      %1172 = vrot.lane.b32.xlu0 %v1078, 8
      %v1173 = vpop.permute.xlu0 %1172
      %1174 = vrot.lane.b32.xlu0 %v1079, 8
      %v1175 = vpop.permute.xlu0 %1174
      %1176 = vrot.lane.b32.xlu0 %v1081, 8
      %v1177 = vpop.permute.xlu0 %1176
      %1178 = vrot.lane.b32.xlu0 %v1083, 8
      %v1179 = vpop.permute.xlu0 %1178
      %1246 = vrot.lane.b32.xlu0 %v694, 12
      %v1247 = vpop.permute.xlu0 %1246
      %1248 = vrot.lane.b32.xlu0 %v695, 12
      %v1249 = vpop.permute.xlu0 %1248
      %1250 = vrot.lane.b32.xlu0 %v696, 12
      %v1251 = vpop.permute.xlu0 %1250
      %1252 = vrot.lane.b32.xlu0 %v698, 12
      %v1253 = vpop.permute.xlu0 %1252
      %1254 = vrot.lane.b32.xlu0 %v699, 12
      %v1255 = vpop.permute.xlu0 %1254
      %1256 = vrot.lane.b32.xlu0 %v700, 12
      %v1257 = vpop.permute.xlu0 %1256
      %1258 = vrot.lane.b32.xlu0 %v702, 12
      %v1259 = vpop.permute.xlu0 %1258
      %1260 = vrot.lane.b32.xlu0 %v703, 12
      %v1261 = vpop.permute.xlu0 %1260
      %1262 = vrot.lane.b32.xlu0 %v704, 12
      %v1263 = vpop.permute.xlu0 %1262
      %1264 = vrot.lane.b32.xlu0 %v706, 12
      %v1265 = vpop.permute.xlu0 %1264
      %1266 = vrot.lane.b32.xlu0 %v707, 12
      %v1267 = vpop.permute.xlu0 %1266
      %1268 = vrot.lane.b32.xlu0 %v708, 12
      %v1269 = vpop.permute.xlu0 %1268
      %1270 = vrot.lane.b32.xlu0 %v710, 12
      %v1271 = vpop.permute.xlu0 %1270
      %1272 = vrot.lane.b32.xlu0 %v711, 12
      %v1273 = vpop.permute.xlu0 %1272
      %1274 = vrot.lane.b32.xlu0 %v712, 12
      %v1275 = vpop.permute.xlu0 %1274
      %1276 = vrot.lane.b32.xlu0 %v714, 12
      %v1277 = vpop.permute.xlu0 %1276
      %1278 = vrot.lane.b32.xlu0 %v715, 12
      %v1279 = vpop.permute.xlu0 %1278
      %1280 = vrot.lane.b32.xlu0 %v716, 12
      %v1281 = vpop.permute.xlu0 %1280
      %1282 = vrot.lane.b32.xlu0 %v718, 12
      %v1283 = vpop.permute.xlu0 %1282
      %1284 = vrot.lane.b32.xlu0 %v719, 12
      %v1285 = vpop.permute.xlu0 %1284
      %1286 = vrot.lane.b32.xlu0 %v720, 12
      %v1287 = vpop.permute.xlu0 %1286
      %1288 = vrot.lane.b32.xlu0 %v722, 12
      %v1289 = vpop.permute.xlu0 %1288
      %1290 = vrot.lane.b32.xlu0 %v723, 12
      %v1291 = vpop.permute.xlu0 %1290
      %1292 = vrot.lane.b32.xlu0 %v724, 12
      %v1293 = vpop.permute.xlu0 %1292
      %1294 = vrot.lane.b32.xlu0 %v726, 12
      %v1295 = vpop.permute.xlu0 %1294
      %1296 = vrot.lane.b32.xlu0 %v727, 12
      %v1297 = vpop.permute.xlu0 %1296
      %1298 = vrot.lane.b32.xlu0 %v728, 12
      %v1299 = vpop.permute.xlu0 %1298
      %1300 = vrot.lane.b32.xlu0 %v730, 12
      %v1301 = vpop.permute.xlu0 %1300
      %1302 = vrot.lane.b32.xlu0 %v731, 12
      %v1303 = vpop.permute.xlu0 %1302
      %1304 = vrot.lane.b32.xlu0 %v732, 12
      %v1305 = vpop.permute.xlu0 %1304
      %1306 = vrot.lane.b32.xlu0 %v734, 12
      %v1307 = vpop.permute.xlu0 %1306
      %1308 = vrot.lane.b32.xlu0 %v735, 12
      %v1309 = vpop.permute.xlu0 %1308
      %1310 = vrot.lane.b32.xlu0 %v736, 12
      %v1311 = vpop.permute.xlu0 %1310
      %1312 = vrot.lane.b32.xlu0 %v738, 12
      %v1313 = vpop.permute.xlu0 %1312
      %1314 = vrot.lane.b32.xlu0 %v739, 12
      %v1315 = vpop.permute.xlu0 %1314
      %1316 = vrot.lane.b32.xlu0 %v740, 12
      %v1317 = vpop.permute.xlu0 %1316
      %1318 = vrot.lane.b32.xlu0 %v742, 12
      %v1319 = vpop.permute.xlu0 %1318
      %1320 = vrot.lane.b32.xlu0 %v743, 12
      %v1321 = vpop.permute.xlu0 %1320
      %1322 = vrot.lane.b32.xlu0 %v744, 12
      %v1323 = vpop.permute.xlu0 %1322
      %1324 = vrot.lane.b32.xlu0 %v746, 12
      %v1325 = vpop.permute.xlu0 %1324
      %1326 = vrot.lane.b32.xlu0 %v747, 12
      %v1327 = vpop.permute.xlu0 %1326
      %1328 = vrot.lane.b32.xlu0 %v748, 12
      %v1329 = vpop.permute.xlu0 %1328
      %1330 = vrot.lane.b32.xlu0 %v750, 12
      %v1331 = vpop.permute.xlu0 %1330
      %1332 = vrot.lane.b32.xlu0 %v751, 12
      %v1333 = vpop.permute.xlu0 %1332
      %1334 = vrot.lane.b32.xlu0 %v752, 12
      %v1335 = vpop.permute.xlu0 %1334
      %1336 = vrot.lane.b32.xlu0 %v754, 12
      %v1337 = vpop.permute.xlu0 %1336
      %1338 = vrot.lane.b32.xlu0 %v755, 12
      %v1339 = vpop.permute.xlu0 %1338
      %1340 = vrot.lane.b32.xlu0 %v756, 12
      %v1341 = vpop.permute.xlu0 %1340
      %v1390 = vrot.slane %v755, 1
      %v1391 = vrot.slane %v756, 1
      %v1392 = vsel %vm794, %v1390, %v1391
      %1393 = vrot.lane.b32.xlu0 %v798, 16
      %v1394 = vpop.permute.xlu0 %1393
      %1395 = vrot.lane.b32.xlu0 %v800, 16
      %v1396 = vpop.permute.xlu0 %1395
      %1397 = vrot.lane.b32.xlu0 %v799, 16
      %v1398 = vpop.permute.xlu0 %1397
      %1399 = vrot.lane.b32.xlu0 %v801, 16
      %v1400 = vpop.permute.xlu0 %1399
      %1401 = vrot.lane.b32.xlu0 %v803, 16
      %v1402 = vpop.permute.xlu0 %1401
      %1403 = vrot.lane.b32.xlu0 %v802, 16
      %v1404 = vpop.permute.xlu0 %1403
      %1405 = vrot.lane.b32.xlu0 %v804, 16
      %v1406 = vpop.permute.xlu0 %1405
      %1407 = vrot.lane.b32.xlu0 %v806, 16
      %v1408 = vpop.permute.xlu0 %1407
      %1409 = vrot.lane.b32.xlu0 %v805, 16
      %v1410 = vpop.permute.xlu0 %1409
      %1411 = vrot.lane.b32.xlu0 %v807, 16
      %v1412 = vpop.permute.xlu0 %1411
      %1413 = vrot.lane.b32.xlu0 %v809, 16
      %v1414 = vpop.permute.xlu0 %1413
      %1415 = vrot.lane.b32.xlu0 %v808, 16
      %v1416 = vpop.permute.xlu0 %1415
      %1417 = vrot.lane.b32.xlu0 %v810, 16
      %v1418 = vpop.permute.xlu0 %1417
      %1419 = vrot.lane.b32.xlu0 %v812, 16
      %v1420 = vpop.permute.xlu0 %1419
      %1421 = vrot.lane.b32.xlu0 %v811, 16
      %v1422 = vpop.permute.xlu0 %1421
      %1423 = vrot.lane.b32.xlu0 %v813, 16
      %v1424 = vpop.permute.xlu0 %1423
      %1425 = vrot.lane.b32.xlu0 %v815, 16
      %v1426 = vpop.permute.xlu0 %1425
      %1427 = vrot.lane.b32.xlu0 %v814, 16
      %v1428 = vpop.permute.xlu0 %1427
      %1429 = vrot.lane.b32.xlu0 %v816, 16
      %v1430 = vpop.permute.xlu0 %1429
      %1431 = vrot.lane.b32.xlu0 %v818, 16
      %v1432 = vpop.permute.xlu0 %1431
      %1433 = vrot.lane.b32.xlu0 %v817, 16
      %v1434 = vpop.permute.xlu0 %1433
      %1435 = vrot.lane.b32.xlu0 %v819, 16
      %v1436 = vpop.permute.xlu0 %1435
      %1437 = vrot.lane.b32.xlu0 %v821, 16
      %v1438 = vpop.permute.xlu0 %1437
      %1439 = vrot.lane.b32.xlu0 %v820, 16
      %v1440 = vpop.permute.xlu0 %1439
      %1441 = vrot.lane.b32.xlu0 %v822, 16
      %v1442 = vpop.permute.xlu0 %1441
      %1443 = vrot.lane.b32.xlu0 %v824, 16
      %v1444 = vpop.permute.xlu0 %1443
      %1445 = vrot.lane.b32.xlu0 %v823, 16
      %v1446 = vpop.permute.xlu0 %1445
      %1447 = vrot.lane.b32.xlu0 %v825, 16
      %v1448 = vpop.permute.xlu0 %1447
      %1449 = vrot.lane.b32.xlu0 %v827, 16
      %v1450 = vpop.permute.xlu0 %1449
      %1451 = vrot.lane.b32.xlu0 %v826, 16
      %v1452 = vpop.permute.xlu0 %1451
      %1453 = vrot.lane.b32.xlu0 %v828, 16
      %v1454 = vpop.permute.xlu0 %1453
      %1455 = vrot.lane.b32.xlu0 %v830, 16
      %v1456 = vpop.permute.xlu0 %1455
      %1457 = vrot.lane.b32.xlu0 %v829, 16
      %v1458 = vpop.permute.xlu0 %1457
      %1459 = vrot.lane.b32.xlu0 %v831, 16
      %v1460 = vpop.permute.xlu0 %1459
      %1461 = vrot.lane.b32.xlu0 %v833, 16
      %v1462 = vpop.permute.xlu0 %1461
      %1463 = vrot.lane.b32.xlu0 %v832, 16
      %v1464 = vpop.permute.xlu0 %1463
      %1465 = vrot.lane.b32.xlu0 %v834, 16
      %v1466 = vpop.permute.xlu0 %1465
      %1467 = vrot.lane.b32.xlu0 %v836, 16
      %v1468 = vpop.permute.xlu0 %1467
      %1469 = vrot.lane.b32.xlu0 %v835, 16
      %v1470 = vpop.permute.xlu0 %1469
      %1471 = vrot.lane.b32.xlu0 %v837, 16
      %v1472 = vpop.permute.xlu0 %1471
      %1473 = vrot.lane.b32.xlu0 %v839, 16
      %v1474 = vpop.permute.xlu0 %1473
      %1475 = vrot.lane.b32.xlu0 %v838, 16
      %v1476 = vpop.permute.xlu0 %1475
      %1477 = vrot.lane.b32.xlu0 %v840, 16
      %v1478 = vpop.permute.xlu0 %1477
      %1479 = vrot.lane.b32.xlu0 %v842, 16
      %v1480 = vpop.permute.xlu0 %1479
      %1481 = vrot.lane.b32.xlu0 %v841, 16
      %v1482 = vpop.permute.xlu0 %1481
      %1483 = vrot.lane.b32.xlu0 %v1390, 16
      %v1484 = vpop.permute.xlu0 %1483
      %1485 = vrot.lane.b32.xlu0 %v1392, 16
      %v1486 = vpop.permute.xlu0 %1485
      %1487 = vrot.lane.b32.xlu0 %v1391, 16
      %v1488 = vpop.permute.xlu0 %1487
      %v1538 = vrot.slane %v755, 2
      %v1539 = vrot.slane %v756, 2
      %v1540 = vsel %vm1003, %v1538, %v1539
      %v1541 = vrot.slane %v757, 2
      %v1542 = vsel %vm1003, %v1539, %v1541
      %1543 = vrot.lane.b32.xlu0 %v1009, 20
      %v1544 = vpop.permute.xlu0 %1543
      %1545 = vrot.lane.b32.xlu0 %v1011, 20
      %v1546 = vpop.permute.xlu0 %1545
      %1547 = vrot.lane.b32.xlu0 %v1013, 20
      %v1548 = vpop.permute.xlu0 %1547
      %1549 = vrot.lane.b32.xlu0 %v1014, 20
      %v1550 = vpop.permute.xlu0 %1549
      %1551 = vrot.lane.b32.xlu0 %v1016, 20
      %v1552 = vpop.permute.xlu0 %1551
      %1553 = vrot.lane.b32.xlu0 %v1018, 20
      %v1554 = vpop.permute.xlu0 %1553
      %1555 = vrot.lane.b32.xlu0 %v1019, 20
      %v1556 = vpop.permute.xlu0 %1555
      %1557 = vrot.lane.b32.xlu0 %v1021, 20
      %v1558 = vpop.permute.xlu0 %1557
      %1559 = vrot.lane.b32.xlu0 %v1023, 20
      %v1560 = vpop.permute.xlu0 %1559
      %1561 = vrot.lane.b32.xlu0 %v1024, 20
      %v1562 = vpop.permute.xlu0 %1561
      %1563 = vrot.lane.b32.xlu0 %v1026, 20
      %v1564 = vpop.permute.xlu0 %1563
      %1565 = vrot.lane.b32.xlu0 %v1028, 20
      %v1566 = vpop.permute.xlu0 %1565
      %1567 = vrot.lane.b32.xlu0 %v1029, 20
      %v1568 = vpop.permute.xlu0 %1567
      %1569 = vrot.lane.b32.xlu0 %v1031, 20
      %v1570 = vpop.permute.xlu0 %1569
      %1571 = vrot.lane.b32.xlu0 %v1033, 20
      %v1572 = vpop.permute.xlu0 %1571
      %1573 = vrot.lane.b32.xlu0 %v1034, 20
      %v1574 = vpop.permute.xlu0 %1573
      %1575 = vrot.lane.b32.xlu0 %v1036, 20
      %v1576 = vpop.permute.xlu0 %1575
      %1577 = vrot.lane.b32.xlu0 %v1038, 20
      %v1578 = vpop.permute.xlu0 %1577
      %1579 = vrot.lane.b32.xlu0 %v1039, 20
      %v1580 = vpop.permute.xlu0 %1579
      %1581 = vrot.lane.b32.xlu0 %v1041, 20
      %v1582 = vpop.permute.xlu0 %1581
      %1583 = vrot.lane.b32.xlu0 %v1043, 20
      %v1584 = vpop.permute.xlu0 %1583
      %1585 = vrot.lane.b32.xlu0 %v1044, 20
      %v1586 = vpop.permute.xlu0 %1585
      %1587 = vrot.lane.b32.xlu0 %v1046, 20
      %v1588 = vpop.permute.xlu0 %1587
      %1589 = vrot.lane.b32.xlu0 %v1048, 20
      %v1590 = vpop.permute.xlu0 %1589
      %1591 = vrot.lane.b32.xlu0 %v1049, 20
      %v1592 = vpop.permute.xlu0 %1591
      %1593 = vrot.lane.b32.xlu0 %v1051, 20
      %v1594 = vpop.permute.xlu0 %1593
      %1595 = vrot.lane.b32.xlu0 %v1053, 20
      %v1596 = vpop.permute.xlu0 %1595
      %1597 = vrot.lane.b32.xlu0 %v1054, 20
      %v1598 = vpop.permute.xlu0 %1597
      %1599 = vrot.lane.b32.xlu0 %v1056, 20
      %v1600 = vpop.permute.xlu0 %1599
      %1601 = vrot.lane.b32.xlu0 %v1058, 20
      %v1602 = vpop.permute.xlu0 %1601
      %1603 = vrot.lane.b32.xlu0 %v1059, 20
      %v1604 = vpop.permute.xlu0 %1603
      %1605 = vrot.lane.b32.xlu0 %v1061, 20
      %v1606 = vpop.permute.xlu0 %1605
      %1607 = vrot.lane.b32.xlu0 %v1063, 20
      %v1608 = vpop.permute.xlu0 %1607
      %1609 = vrot.lane.b32.xlu0 %v1064, 20
      %v1610 = vpop.permute.xlu0 %1609
      %1611 = vrot.lane.b32.xlu0 %v1066, 20
      %v1612 = vpop.permute.xlu0 %1611
      %1613 = vrot.lane.b32.xlu0 %v1068, 20
      %v1614 = vpop.permute.xlu0 %1613
      %1615 = vrot.lane.b32.xlu0 %v1069, 20
      %v1616 = vpop.permute.xlu0 %1615
      %1617 = vrot.lane.b32.xlu0 %v1071, 20
      %v1618 = vpop.permute.xlu0 %1617
      %1619 = vrot.lane.b32.xlu0 %v1073, 20
      %v1620 = vpop.permute.xlu0 %1619
      %1621 = vrot.lane.b32.xlu0 %v1074, 20
      %v1622 = vpop.permute.xlu0 %1621
      %1623 = vrot.lane.b32.xlu0 %v1076, 20
      %v1624 = vpop.permute.xlu0 %1623
      %1625 = vrot.lane.b32.xlu0 %v1078, 20
      %v1626 = vpop.permute.xlu0 %1625
      %1627 = vrot.lane.b32.xlu0 %v1079, 20
      %v1628 = vpop.permute.xlu0 %1627
      %1629 = vrot.lane.b32.xlu0 %v1081, 20
      %v1630 = vpop.permute.xlu0 %1629
      %1631 = vrot.lane.b32.xlu0 %v1083, 20
      %v1632 = vpop.permute.xlu0 %1631
      %1633 = vrot.lane.b32.xlu0 %v1538, 20
      %v1634 = vpop.permute.xlu0 %1633
      %1635 = vrot.lane.b32.xlu0 %v1540, 20
      %v1636 = vpop.permute.xlu0 %1635
      %1637 = vrot.lane.b32.xlu0 %v1542, 20
      %v1638 = vpop.permute.xlu0 %1637
      %1690 = vrot.lane.b32.xlu0 %v698, 24
      %v1691 = vpop.permute.xlu0 %1690
      %1692 = vrot.lane.b32.xlu0 %v699, 24
      %v1693 = vpop.permute.xlu0 %1692
      %1694 = vrot.lane.b32.xlu0 %v700, 24
      %v1695 = vpop.permute.xlu0 %1694
      %1696 = vrot.lane.b32.xlu0 %v702, 24
      %v1697 = vpop.permute.xlu0 %1696
      %1698 = vrot.lane.b32.xlu0 %v703, 24
      %v1699 = vpop.permute.xlu0 %1698
      %1700 = vrot.lane.b32.xlu0 %v704, 24
      %v1701 = vpop.permute.xlu0 %1700
      %1702 = vrot.lane.b32.xlu0 %v706, 24
      %v1703 = vpop.permute.xlu0 %1702
      %1704 = vrot.lane.b32.xlu0 %v707, 24
      %v1705 = vpop.permute.xlu0 %1704
      %1706 = vrot.lane.b32.xlu0 %v708, 24
      %v1707 = vpop.permute.xlu0 %1706
      %1708 = vrot.lane.b32.xlu0 %v710, 24
      %v1709 = vpop.permute.xlu0 %1708
      %1710 = vrot.lane.b32.xlu0 %v711, 24
      %v1711 = vpop.permute.xlu0 %1710
      %1712 = vrot.lane.b32.xlu0 %v712, 24
      %v1713 = vpop.permute.xlu0 %1712
      %1714 = vrot.lane.b32.xlu0 %v714, 24
      %v1715 = vpop.permute.xlu0 %1714
      %1716 = vrot.lane.b32.xlu0 %v715, 24
      %v1717 = vpop.permute.xlu0 %1716
      %1718 = vrot.lane.b32.xlu0 %v716, 24
      %v1719 = vpop.permute.xlu0 %1718
      %1720 = vrot.lane.b32.xlu0 %v718, 24
      %v1721 = vpop.permute.xlu0 %1720
      %1722 = vrot.lane.b32.xlu0 %v719, 24
      %v1723 = vpop.permute.xlu0 %1722
      %1724 = vrot.lane.b32.xlu0 %v720, 24
      %v1725 = vpop.permute.xlu0 %1724
      %1726 = vrot.lane.b32.xlu0 %v722, 24
      %v1727 = vpop.permute.xlu0 %1726
      %1728 = vrot.lane.b32.xlu0 %v723, 24
      %v1729 = vpop.permute.xlu0 %1728
      %1730 = vrot.lane.b32.xlu0 %v724, 24
      %v1731 = vpop.permute.xlu0 %1730
      %1732 = vrot.lane.b32.xlu0 %v726, 24
      %v1733 = vpop.permute.xlu0 %1732
      %1734 = vrot.lane.b32.xlu0 %v727, 24
      %v1735 = vpop.permute.xlu0 %1734
      %1736 = vrot.lane.b32.xlu0 %v728, 24
      %v1737 = vpop.permute.xlu0 %1736
      %1738 = vrot.lane.b32.xlu0 %v730, 24
      %v1739 = vpop.permute.xlu0 %1738
      %1740 = vrot.lane.b32.xlu0 %v731, 24
      %v1741 = vpop.permute.xlu0 %1740
      %1742 = vrot.lane.b32.xlu0 %v732, 24
      %v1743 = vpop.permute.xlu0 %1742
      %1744 = vrot.lane.b32.xlu0 %v734, 24
      %v1745 = vpop.permute.xlu0 %1744
      %1746 = vrot.lane.b32.xlu0 %v735, 24
      %v1747 = vpop.permute.xlu0 %1746
      %1748 = vrot.lane.b32.xlu0 %v736, 24
      %v1749 = vpop.permute.xlu0 %1748
      %1750 = vrot.lane.b32.xlu0 %v738, 24
      %v1751 = vpop.permute.xlu0 %1750
      %1752 = vrot.lane.b32.xlu0 %v739, 24
      %v1753 = vpop.permute.xlu0 %1752
      %1754 = vrot.lane.b32.xlu0 %v740, 24
      %v1755 = vpop.permute.xlu0 %1754
      %1756 = vrot.lane.b32.xlu0 %v742, 24
      %v1757 = vpop.permute.xlu0 %1756
      %1758 = vrot.lane.b32.xlu0 %v743, 24
      %v1759 = vpop.permute.xlu0 %1758
      %1760 = vrot.lane.b32.xlu0 %v744, 24
      %v1761 = vpop.permute.xlu0 %1760
      %1762 = vrot.lane.b32.xlu0 %v746, 24
      %v1763 = vpop.permute.xlu0 %1762
      %1764 = vrot.lane.b32.xlu0 %v747, 24
      %v1765 = vpop.permute.xlu0 %1764
      %1766 = vrot.lane.b32.xlu0 %v748, 24
      %v1767 = vpop.permute.xlu0 %1766
      %1768 = vrot.lane.b32.xlu0 %v750, 24
      %v1769 = vpop.permute.xlu0 %1768
      %1770 = vrot.lane.b32.xlu0 %v751, 24
      %v1771 = vpop.permute.xlu0 %1770
      %1772 = vrot.lane.b32.xlu0 %v752, 24
      %v1773 = vpop.permute.xlu0 %1772
      %1774 = vrot.lane.b32.xlu0 %v754, 24
      %v1775 = vpop.permute.xlu0 %1774
      %1776 = vrot.lane.b32.xlu0 %v755, 24
      %v1777 = vpop.permute.xlu0 %1776
      %1778 = vrot.lane.b32.xlu0 %v756, 24
      %v1779 = vpop.permute.xlu0 %1778
      %1780 = vrot.lane.b32.xlu0 %v758, 24
      %v1781 = vpop.permute.xlu0 %1780
      %1782 = vrot.lane.b32.xlu0 %v759, 24
      %v1783 = vpop.permute.xlu0 %1782
      %1784 = vrot.lane.b32.xlu0 %v760, 24
      %v1785 = vpop.permute.xlu0 %1784
      %v1834 = vrot.slane %v759, 1
      %v1835 = vrot.slane %v760, 1
      %v1836 = vsel %vm794, %v1834, %v1835
      %1837 = vrot.lane.b32.xlu0 %v801, 28
      %v1838 = vpop.permute.xlu0 %1837
      %1839 = vrot.lane.b32.xlu0 %v803, 28
      %v1840 = vpop.permute.xlu0 %1839
      %1841 = vrot.lane.b32.xlu0 %v802, 28
      %v1842 = vpop.permute.xlu0 %1841
      %1843 = vrot.lane.b32.xlu0 %v804, 28
      %v1844 = vpop.permute.xlu0 %1843
      %1845 = vrot.lane.b32.xlu0 %v806, 28
      %v1846 = vpop.permute.xlu0 %1845
      %1847 = vrot.lane.b32.xlu0 %v805, 28
      %v1848 = vpop.permute.xlu0 %1847
      %1849 = vrot.lane.b32.xlu0 %v807, 28
      %v1850 = vpop.permute.xlu0 %1849
      %1851 = vrot.lane.b32.xlu0 %v809, 28
      %v1852 = vpop.permute.xlu0 %1851
      %1853 = vrot.lane.b32.xlu0 %v808, 28
      %v1854 = vpop.permute.xlu0 %1853
      %1855 = vrot.lane.b32.xlu0 %v810, 28
      %v1856 = vpop.permute.xlu0 %1855
      %1857 = vrot.lane.b32.xlu0 %v812, 28
      %v1858 = vpop.permute.xlu0 %1857
      %1859 = vrot.lane.b32.xlu0 %v811, 28
      %v1860 = vpop.permute.xlu0 %1859
      %1861 = vrot.lane.b32.xlu0 %v813, 28
      %v1862 = vpop.permute.xlu0 %1861
      %1863 = vrot.lane.b32.xlu0 %v815, 28
      %v1864 = vpop.permute.xlu0 %1863
      %1865 = vrot.lane.b32.xlu0 %v814, 28
      %v1866 = vpop.permute.xlu0 %1865
      %1867 = vrot.lane.b32.xlu0 %v816, 28
      %v1868 = vpop.permute.xlu0 %1867
      %1869 = vrot.lane.b32.xlu0 %v818, 28
      %v1870 = vpop.permute.xlu0 %1869
      %1871 = vrot.lane.b32.xlu0 %v817, 28
      %v1872 = vpop.permute.xlu0 %1871
      %1873 = vrot.lane.b32.xlu0 %v819, 28
      %v1874 = vpop.permute.xlu0 %1873
      %1875 = vrot.lane.b32.xlu0 %v821, 28
      %v1876 = vpop.permute.xlu0 %1875
      %1877 = vrot.lane.b32.xlu0 %v820, 28
      %v1878 = vpop.permute.xlu0 %1877
      %1879 = vrot.lane.b32.xlu0 %v822, 28
      %v1880 = vpop.permute.xlu0 %1879
      %1881 = vrot.lane.b32.xlu0 %v824, 28
      %v1882 = vpop.permute.xlu0 %1881
      %1883 = vrot.lane.b32.xlu0 %v823, 28
      %v1884 = vpop.permute.xlu0 %1883
      %1885 = vrot.lane.b32.xlu0 %v825, 28
      %v1886 = vpop.permute.xlu0 %1885
      %1887 = vrot.lane.b32.xlu0 %v827, 28
      %v1888 = vpop.permute.xlu0 %1887
      %1889 = vrot.lane.b32.xlu0 %v826, 28
      %v1890 = vpop.permute.xlu0 %1889
      %1891 = vrot.lane.b32.xlu0 %v828, 28
      %v1892 = vpop.permute.xlu0 %1891
      %1893 = vrot.lane.b32.xlu0 %v830, 28
      %v1894 = vpop.permute.xlu0 %1893
      %1895 = vrot.lane.b32.xlu0 %v829, 28
      %v1896 = vpop.permute.xlu0 %1895
      %1897 = vrot.lane.b32.xlu0 %v831, 28
      %v1898 = vpop.permute.xlu0 %1897
      %1899 = vrot.lane.b32.xlu0 %v833, 28
      %v1900 = vpop.permute.xlu0 %1899
      %1901 = vrot.lane.b32.xlu0 %v832, 28
      %v1902 = vpop.permute.xlu0 %1901
      %1903 = vrot.lane.b32.xlu0 %v834, 28
      %v1904 = vpop.permute.xlu0 %1903
      %1905 = vrot.lane.b32.xlu0 %v836, 28
      %v1906 = vpop.permute.xlu0 %1905
      %1907 = vrot.lane.b32.xlu0 %v835, 28
      %v1908 = vpop.permute.xlu0 %1907
      %1909 = vrot.lane.b32.xlu0 %v837, 28
      %v1910 = vpop.permute.xlu0 %1909
      %1911 = vrot.lane.b32.xlu0 %v839, 28
      %v1912 = vpop.permute.xlu0 %1911
      %1913 = vrot.lane.b32.xlu0 %v838, 28
      %v1914 = vpop.permute.xlu0 %1913
      %1915 = vrot.lane.b32.xlu0 %v840, 28
      %v1916 = vpop.permute.xlu0 %1915
      %1917 = vrot.lane.b32.xlu0 %v842, 28
      %v1918 = vpop.permute.xlu0 %1917
      %1919 = vrot.lane.b32.xlu0 %v841, 28
      %v1920 = vpop.permute.xlu0 %1919
      %1921 = vrot.lane.b32.xlu0 %v1390, 28
      %v1922 = vpop.permute.xlu0 %1921
      %1923 = vrot.lane.b32.xlu0 %v1392, 28
      %v1924 = vpop.permute.xlu0 %1923
      %1925 = vrot.lane.b32.xlu0 %v1391, 28
      %v1926 = vpop.permute.xlu0 %1925
      %1927 = vrot.lane.b32.xlu0 %v1834, 28
      %v1928 = vpop.permute.xlu0 %1927
      %1929 = vrot.lane.b32.xlu0 %v1836, 28
      %v1930 = vpop.permute.xlu0 %1929
      %1931 = vrot.lane.b32.xlu0 %v1835, 28
      %v1932 = vpop.permute.xlu0 %1931
      %v1982 = vrot.slane %v759, 2
      %v1983 = vrot.slane %v760, 2
      %v1984 = vsel %vm1003, %v1982, %v1983
      %v1985 = vrot.slane %v761, 2
      %v1986 = vsel %vm1003, %v1983, %v1985
      %1987 = vrot.lane.b32.xlu0 %v1014, 32
      %v1988 = vpop.permute.xlu0 %1987
      %1989 = vrot.lane.b32.xlu0 %v1016, 32
      %v1990 = vpop.permute.xlu0 %1989
      %1991 = vrot.lane.b32.xlu0 %v1018, 32
      %v1992 = vpop.permute.xlu0 %1991
      %1993 = vrot.lane.b32.xlu0 %v1019, 32
      %v1994 = vpop.permute.xlu0 %1993
      %1995 = vrot.lane.b32.xlu0 %v1021, 32
      %v1996 = vpop.permute.xlu0 %1995
      %1997 = vrot.lane.b32.xlu0 %v1023, 32
      %v1998 = vpop.permute.xlu0 %1997
      %1999 = vrot.lane.b32.xlu0 %v1024, 32
      %v2000 = vpop.permute.xlu0 %1999
      %2001 = vrot.lane.b32.xlu0 %v1026, 32
      %v2002 = vpop.permute.xlu0 %2001
      %2003 = vrot.lane.b32.xlu0 %v1028, 32
      %v2004 = vpop.permute.xlu0 %2003
      %2005 = vrot.lane.b32.xlu0 %v1029, 32
      %v2006 = vpop.permute.xlu0 %2005
      %2007 = vrot.lane.b32.xlu0 %v1031, 32
      %v2008 = vpop.permute.xlu0 %2007
      %2009 = vrot.lane.b32.xlu0 %v1033, 32
      %v2010 = vpop.permute.xlu0 %2009
      %2011 = vrot.lane.b32.xlu0 %v1034, 32
      %v2012 = vpop.permute.xlu0 %2011
      %2013 = vrot.lane.b32.xlu0 %v1036, 32
      %v2014 = vpop.permute.xlu0 %2013
      %2015 = vrot.lane.b32.xlu0 %v1038, 32
      %v2016 = vpop.permute.xlu0 %2015
      %2017 = vrot.lane.b32.xlu0 %v1039, 32
      %v2018 = vpop.permute.xlu0 %2017
      %2019 = vrot.lane.b32.xlu0 %v1041, 32
      %v2020 = vpop.permute.xlu0 %2019
      %2021 = vrot.lane.b32.xlu0 %v1043, 32
      %v2022 = vpop.permute.xlu0 %2021
      %2023 = vrot.lane.b32.xlu0 %v1044, 32
      %v2024 = vpop.permute.xlu0 %2023
      %2025 = vrot.lane.b32.xlu0 %v1046, 32
      %v2026 = vpop.permute.xlu0 %2025
      %2027 = vrot.lane.b32.xlu0 %v1048, 32
      %v2028 = vpop.permute.xlu0 %2027
      %2029 = vrot.lane.b32.xlu0 %v1049, 32
      %v2030 = vpop.permute.xlu0 %2029
      %2031 = vrot.lane.b32.xlu0 %v1051, 32
      %v2032 = vpop.permute.xlu0 %2031
      %2033 = vrot.lane.b32.xlu0 %v1053, 32
      %v2034 = vpop.permute.xlu0 %2033
      %2035 = vrot.lane.b32.xlu0 %v1054, 32
      %v2036 = vpop.permute.xlu0 %2035
      %2037 = vrot.lane.b32.xlu0 %v1056, 32
      %v2038 = vpop.permute.xlu0 %2037
      %2039 = vrot.lane.b32.xlu0 %v1058, 32
      %v2040 = vpop.permute.xlu0 %2039
      %2041 = vrot.lane.b32.xlu0 %v1059, 32
      %v2042 = vpop.permute.xlu0 %2041
      %2043 = vrot.lane.b32.xlu0 %v1061, 32
      %v2044 = vpop.permute.xlu0 %2043
      %2045 = vrot.lane.b32.xlu0 %v1063, 32
      %v2046 = vpop.permute.xlu0 %2045
      %2047 = vrot.lane.b32.xlu0 %v1064, 32
      %v2048 = vpop.permute.xlu0 %2047
      %2049 = vrot.lane.b32.xlu0 %v1066, 32
      %v2050 = vpop.permute.xlu0 %2049
      %2051 = vrot.lane.b32.xlu0 %v1068, 32
      %v2052 = vpop.permute.xlu0 %2051
      %2053 = vrot.lane.b32.xlu0 %v1069, 32
      %v2054 = vpop.permute.xlu0 %2053
      %2055 = vrot.lane.b32.xlu0 %v1071, 32
      %v2056 = vpop.permute.xlu0 %2055
      %2057 = vrot.lane.b32.xlu0 %v1073, 32
      %v2058 = vpop.permute.xlu0 %2057
      %2059 = vrot.lane.b32.xlu0 %v1074, 32
      %v2060 = vpop.permute.xlu0 %2059
      %2061 = vrot.lane.b32.xlu0 %v1076, 32
      %v2062 = vpop.permute.xlu0 %2061
      %2063 = vrot.lane.b32.xlu0 %v1078, 32
      %v2064 = vpop.permute.xlu0 %2063
      %2065 = vrot.lane.b32.xlu0 %v1079, 32
      %v2066 = vpop.permute.xlu0 %2065
      %2067 = vrot.lane.b32.xlu0 %v1081, 32
      %v2068 = vpop.permute.xlu0 %2067
      %2069 = vrot.lane.b32.xlu0 %v1083, 32
      %v2070 = vpop.permute.xlu0 %2069
      %2071 = vrot.lane.b32.xlu0 %v1538, 32
      %v2072 = vpop.permute.xlu0 %2071
      %2073 = vrot.lane.b32.xlu0 %v1540, 32
      %v2074 = vpop.permute.xlu0 %2073
      %2075 = vrot.lane.b32.xlu0 %v1542, 32
      %v2076 = vpop.permute.xlu0 %2075
      %2077 = vrot.lane.b32.xlu0 %v1982, 32
      %v2078 = vpop.permute.xlu0 %2077
      %2079 = vrot.lane.b32.xlu0 %v1984, 32
      %v2080 = vpop.permute.xlu0 %2079
      %2081 = vrot.lane.b32.xlu0 %v1986, 32
      %v2082 = vpop.permute.xlu0 %2081
      %v2131 = vsel %vm584, %v690, %v844
      %v2132 = vsel %vm584, %v691, %v846
      %v2133 = vsel %vm584, %v692, %v848
      %v2134 = vsel %vm584, %v694, %v850
      %v2135 = vsel %vm584, %v695, %v852
      %v2136 = vsel %vm584, %v696, %v854
      %v2137 = vsel %vm584, %v698, %v856
      %v2138 = vsel %vm584, %v699, %v858
      %v2139 = vsel %vm584, %v700, %v860
      %v2140 = vsel %vm584, %v702, %v862
      %v2141 = vsel %vm584, %v703, %v864
      %v2142 = vsel %vm584, %v704, %v866
      %v2143 = vsel %vm584, %v706, %v868
      %v2144 = vsel %vm584, %v707, %v870
      %v2145 = vsel %vm584, %v708, %v872
      %v2146 = vsel %vm584, %v710, %v874
      %v2147 = vsel %vm584, %v711, %v876
      %v2148 = vsel %vm584, %v712, %v878
      %v2149 = vsel %vm584, %v714, %v880
      %v2150 = vsel %vm584, %v715, %v882
      %v2151 = vsel %vm584, %v716, %v884
      %v2152 = vsel %vm584, %v718, %v886
      %v2153 = vsel %vm584, %v719, %v888
      %v2154 = vsel %vm584, %v720, %v890
      %v2155 = vsel %vm584, %v722, %v892
      %v2156 = vsel %vm584, %v723, %v894
      %v2157 = vsel %vm584, %v724, %v896
      %v2158 = vsel %vm584, %v726, %v898
      %v2159 = vsel %vm584, %v727, %v900
      %v2160 = vsel %vm584, %v728, %v902
      %v2161 = vsel %vm584, %v730, %v904
      %v2162 = vsel %vm584, %v731, %v906
      %v2163 = vsel %vm584, %v732, %v908
      %v2164 = vsel %vm584, %v734, %v910
      %v2165 = vsel %vm584, %v735, %v912
      %v2166 = vsel %vm584, %v736, %v914
      %v2167 = vsel %vm584, %v738, %v916
      %v2168 = vsel %vm584, %v739, %v918
      %v2169 = vsel %vm584, %v740, %v920
      %v2170 = vsel %vm584, %v742, %v922
      %v2171 = vsel %vm584, %v743, %v924
      %v2172 = vsel %vm584, %v744, %v926
      %v2173 = vsel %vm584, %v746, %v928
      %v2174 = vsel %vm584, %v747, %v930
      %v2175 = vsel %vm584, %v748, %v932
      %v2176 = vsel %vm584, %v750, %v934
      %v2177 = vsel %vm584, %v751, %v936
      %v2178 = vsel %vm584, %v752, %v938
      %vm2179 = vcmask 64512
      %v2180 = vsel %vm2179, %v2131, %v1085
      %v2181 = vsel %vm2179, %v2132, %v1087
      %v2182 = vsel %vm2179, %v2133, %v1089
      %v2183 = vsel %vm2179, %v2134, %v1091
      %v2184 = vsel %vm2179, %v2135, %v1093
      %v2185 = vsel %vm2179, %v2136, %v1095
      %v2186 = vsel %vm2179, %v2137, %v1097
      %v2187 = vsel %vm2179, %v2138, %v1099
      %v2188 = vsel %vm2179, %v2139, %v1101
      %v2189 = vsel %vm2179, %v2140, %v1103
      %v2190 = vsel %vm2179, %v2141, %v1105
      %v2191 = vsel %vm2179, %v2142, %v1107
      %v2192 = vsel %vm2179, %v2143, %v1109
      %v2193 = vsel %vm2179, %v2144, %v1111
      %v2194 = vsel %vm2179, %v2145, %v1113
      %v2195 = vsel %vm2179, %v2146, %v1115
      %v2196 = vsel %vm2179, %v2147, %v1117
      %v2197 = vsel %vm2179, %v2148, %v1119
      %v2198 = vsel %vm2179, %v2149, %v1121
      %v2199 = vsel %vm2179, %v2150, %v1123
      %v2200 = vsel %vm2179, %v2151, %v1125
      %v2201 = vsel %vm2179, %v2152, %v1127
      %v2202 = vsel %vm2179, %v2153, %v1129
      %v2203 = vsel %vm2179, %v2154, %v1131
      %v2204 = vsel %vm2179, %v2155, %v1133
      %v2205 = vsel %vm2179, %v2156, %v1135
      %v2206 = vsel %vm2179, %v2157, %v1137
      %v2207 = vsel %vm2179, %v2158, %v1139
      %v2208 = vsel %vm2179, %v2159, %v1141
      %v2209 = vsel %vm2179, %v2160, %v1143
      %v2210 = vsel %vm2179, %v2161, %v1145
      %v2211 = vsel %vm2179, %v2162, %v1147
      %v2212 = vsel %vm2179, %v2163, %v1149
      %v2213 = vsel %vm2179, %v2164, %v1151
      %v2214 = vsel %vm2179, %v2165, %v1153
      %v2215 = vsel %vm2179, %v2166, %v1155
      %v2216 = vsel %vm2179, %v2167, %v1157
      %v2217 = vsel %vm2179, %v2168, %v1159
      %v2218 = vsel %vm2179, %v2169, %v1161
      %v2219 = vsel %vm2179, %v2170, %v1163
      %v2220 = vsel %vm2179, %v2171, %v1165
      %v2221 = vsel %vm2179, %v2172, %v1167
      %v2222 = vsel %vm2179, %v2173, %v1169
      %v2223 = vsel %vm2179, %v2174, %v1171
      %v2224 = vsel %vm2179, %v2175, %v1173
      %v2225 = vsel %vm2179, %v2176, %v1175
      %v2226 = vsel %vm2179, %v2177, %v1177
      %v2227 = vsel %vm2179, %v2178, %v1179
      %vm2228 = vcmask 97280
      %v2229 = vsel %vm2228, %v2180, %v1247
      %v2230 = vsel %vm2228, %v2181, %v1249
      %v2231 = vsel %vm2228, %v2182, %v1251
      %v2232 = vsel %vm2228, %v2183, %v1253
      %v2233 = vsel %vm2228, %v2184, %v1255
      %v2234 = vsel %vm2228, %v2185, %v1257
      %v2235 = vsel %vm2228, %v2186, %v1259
      %v2236 = vsel %vm2228, %v2187, %v1261
      %v2237 = vsel %vm2228, %v2188, %v1263
      %v2238 = vsel %vm2228, %v2189, %v1265
      %v2239 = vsel %vm2228, %v2190, %v1267
      %v2240 = vsel %vm2228, %v2191, %v1269
      %v2241 = vsel %vm2228, %v2192, %v1271
      %v2242 = vsel %vm2228, %v2193, %v1273
      %v2243 = vsel %vm2228, %v2194, %v1275
      %v2244 = vsel %vm2228, %v2195, %v1277
      %v2245 = vsel %vm2228, %v2196, %v1279
      %v2246 = vsel %vm2228, %v2197, %v1281
      %v2247 = vsel %vm2228, %v2198, %v1283
      %v2248 = vsel %vm2228, %v2199, %v1285
      %v2249 = vsel %vm2228, %v2200, %v1287
      %v2250 = vsel %vm2228, %v2201, %v1289
      %v2251 = vsel %vm2228, %v2202, %v1291
      %v2252 = vsel %vm2228, %v2203, %v1293
      %v2253 = vsel %vm2228, %v2204, %v1295
      %v2254 = vsel %vm2228, %v2205, %v1297
      %v2255 = vsel %vm2228, %v2206, %v1299
      %v2256 = vsel %vm2228, %v2207, %v1301
      %v2257 = vsel %vm2228, %v2208, %v1303
      %v2258 = vsel %vm2228, %v2209, %v1305
      %v2259 = vsel %vm2228, %v2210, %v1307
      %v2260 = vsel %vm2228, %v2211, %v1309
      %v2261 = vsel %vm2228, %v2212, %v1311
      %v2262 = vsel %vm2228, %v2213, %v1313
      %v2263 = vsel %vm2228, %v2214, %v1315
      %v2264 = vsel %vm2228, %v2215, %v1317
      %v2265 = vsel %vm2228, %v2216, %v1319
      %v2266 = vsel %vm2228, %v2217, %v1321
      %v2267 = vsel %vm2228, %v2218, %v1323
      %v2268 = vsel %vm2228, %v2219, %v1325
      %v2269 = vsel %vm2228, %v2220, %v1327
      %v2270 = vsel %vm2228, %v2221, %v1329
      %v2271 = vsel %vm2228, %v2222, %v1331
      %v2272 = vsel %vm2228, %v2223, %v1333
      %v2273 = vsel %vm2228, %v2224, %v1335
      %v2274 = vsel %vm2228, %v2225, %v1337
      %v2275 = vsel %vm2228, %v2226, %v1339
      %v2276 = vsel %vm2228, %v2227, %v1341
      %vm2277 = vcmask 130048
      %v2278 = vsel %vm2277, %v2229, %v1394
      %v2279 = vsel %vm2277, %v2230, %v1396
      %v2280 = vsel %vm2277, %v2231, %v1398
      %v2281 = vsel %vm2277, %v2232, %v1400
      %v2282 = vsel %vm2277, %v2233, %v1402
      %v2283 = vsel %vm2277, %v2234, %v1404
      %v2284 = vsel %vm2277, %v2235, %v1406
      %v2285 = vsel %vm2277, %v2236, %v1408
      %v2286 = vsel %vm2277, %v2237, %v1410
      %v2287 = vsel %vm2277, %v2238, %v1412
      %v2288 = vsel %vm2277, %v2239, %v1414
      %v2289 = vsel %vm2277, %v2240, %v1416
      %v2290 = vsel %vm2277, %v2241, %v1418
      %v2291 = vsel %vm2277, %v2242, %v1420
      %v2292 = vsel %vm2277, %v2243, %v1422
      %v2293 = vsel %vm2277, %v2244, %v1424
      %v2294 = vsel %vm2277, %v2245, %v1426
      %v2295 = vsel %vm2277, %v2246, %v1428
      %v2296 = vsel %vm2277, %v2247, %v1430
      %v2297 = vsel %vm2277, %v2248, %v1432
      %v2298 = vsel %vm2277, %v2249, %v1434
      %v2299 = vsel %vm2277, %v2250, %v1436
      %v2300 = vsel %vm2277, %v2251, %v1438
      %v2301 = vsel %vm2277, %v2252, %v1440
      %v2302 = vsel %vm2277, %v2253, %v1442
      %v2303 = vsel %vm2277, %v2254, %v1444
      %v2304 = vsel %vm2277, %v2255, %v1446
      %v2305 = vsel %vm2277, %v2256, %v1448
      %v2306 = vsel %vm2277, %v2257, %v1450
      %v2307 = vsel %vm2277, %v2258, %v1452
      %v2308 = vsel %vm2277, %v2259, %v1454
      %v2309 = vsel %vm2277, %v2260, %v1456
      %v2310 = vsel %vm2277, %v2261, %v1458
      %v2311 = vsel %vm2277, %v2262, %v1460
      %v2312 = vsel %vm2277, %v2263, %v1462
      %v2313 = vsel %vm2277, %v2264, %v1464
      %v2314 = vsel %vm2277, %v2265, %v1466
      %v2315 = vsel %vm2277, %v2266, %v1468
      %v2316 = vsel %vm2277, %v2267, %v1470
      %v2317 = vsel %vm2277, %v2268, %v1472
      %v2318 = vsel %vm2277, %v2269, %v1474
      %v2319 = vsel %vm2277, %v2270, %v1476
      %v2320 = vsel %vm2277, %v2271, %v1478
      %v2321 = vsel %vm2277, %v2272, %v1480
      %v2322 = vsel %vm2277, %v2273, %v1482
      %v2323 = vsel %vm2277, %v2274, %v1484
      %v2324 = vsel %vm2277, %v2275, %v1486
      %v2325 = vsel %vm2277, %v2276, %v1488
      %vm2326 = vcmask 162816
      %v2327 = vsel %vm2326, %v2278, %v1544
      %v2328 = vsel %vm2326, %v2279, %v1546
      %v2329 = vsel %vm2326, %v2280, %v1548
      %v2330 = vsel %vm2326, %v2281, %v1550
      %v2331 = vsel %vm2326, %v2282, %v1552
      %v2332 = vsel %vm2326, %v2283, %v1554
      %v2333 = vsel %vm2326, %v2284, %v1556
      %v2334 = vsel %vm2326, %v2285, %v1558
      %v2335 = vsel %vm2326, %v2286, %v1560
      %v2336 = vsel %vm2326, %v2287, %v1562
      %v2337 = vsel %vm2326, %v2288, %v1564
      %v2338 = vsel %vm2326, %v2289, %v1566
      %v2339 = vsel %vm2326, %v2290, %v1568
      %v2340 = vsel %vm2326, %v2291, %v1570
      %v2341 = vsel %vm2326, %v2292, %v1572
      %v2342 = vsel %vm2326, %v2293, %v1574
      %v2343 = vsel %vm2326, %v2294, %v1576
      %v2344 = vsel %vm2326, %v2295, %v1578
      %v2345 = vsel %vm2326, %v2296, %v1580
      %v2346 = vsel %vm2326, %v2297, %v1582
      %v2347 = vsel %vm2326, %v2298, %v1584
      %v2348 = vsel %vm2326, %v2299, %v1586
      %v2349 = vsel %vm2326, %v2300, %v1588
      %v2350 = vsel %vm2326, %v2301, %v1590
      %v2351 = vsel %vm2326, %v2302, %v1592
      %v2352 = vsel %vm2326, %v2303, %v1594
      %v2353 = vsel %vm2326, %v2304, %v1596
      %v2354 = vsel %vm2326, %v2305, %v1598
      %v2355 = vsel %vm2326, %v2306, %v1600
      %v2356 = vsel %vm2326, %v2307, %v1602
      %v2357 = vsel %vm2326, %v2308, %v1604
      %v2358 = vsel %vm2326, %v2309, %v1606
      %v2359 = vsel %vm2326, %v2310, %v1608
      %v2360 = vsel %vm2326, %v2311, %v1610
      %v2361 = vsel %vm2326, %v2312, %v1612
      %v2362 = vsel %vm2326, %v2313, %v1614
      %v2363 = vsel %vm2326, %v2314, %v1616
      %v2364 = vsel %vm2326, %v2315, %v1618
      %v2365 = vsel %vm2326, %v2316, %v1620
      %v2366 = vsel %vm2326, %v2317, %v1622
      %v2367 = vsel %vm2326, %v2318, %v1624
      %v2368 = vsel %vm2326, %v2319, %v1626
      %v2369 = vsel %vm2326, %v2320, %v1628
      %v2370 = vsel %vm2326, %v2321, %v1630
      %v2371 = vsel %vm2326, %v2322, %v1632
      %v2372 = vsel %vm2326, %v2323, %v1634
      %v2373 = vsel %vm2326, %v2324, %v1636
      %v2374 = vsel %vm2326, %v2325, %v1638
      %vm2375 = vcmask 195584
      %v2376 = vsel %vm2375, %v2327, %v1691
      %v2377 = vsel %vm2375, %v2328, %v1693
      %v2378 = vsel %vm2375, %v2329, %v1695
      %v2379 = vsel %vm2375, %v2330, %v1697
      %v2380 = vsel %vm2375, %v2331, %v1699
      %v2381 = vsel %vm2375, %v2332, %v1701
      %v2382 = vsel %vm2375, %v2333, %v1703
      %v2383 = vsel %vm2375, %v2334, %v1705
      %v2384 = vsel %vm2375, %v2335, %v1707
      %v2385 = vsel %vm2375, %v2336, %v1709
      %v2386 = vsel %vm2375, %v2337, %v1711
      %v2387 = vsel %vm2375, %v2338, %v1713
      %v2388 = vsel %vm2375, %v2339, %v1715
      %v2389 = vsel %vm2375, %v2340, %v1717
      %v2390 = vsel %vm2375, %v2341, %v1719
      %v2391 = vsel %vm2375, %v2342, %v1721
      %v2392 = vsel %vm2375, %v2343, %v1723
      %v2393 = vsel %vm2375, %v2344, %v1725
      %v2394 = vsel %vm2375, %v2345, %v1727
      %v2395 = vsel %vm2375, %v2346, %v1729
      %v2396 = vsel %vm2375, %v2347, %v1731
      %v2397 = vsel %vm2375, %v2348, %v1733
      %v2398 = vsel %vm2375, %v2349, %v1735
      %v2399 = vsel %vm2375, %v2350, %v1737
      %v2400 = vsel %vm2375, %v2351, %v1739
      %v2401 = vsel %vm2375, %v2352, %v1741
      %v2402 = vsel %vm2375, %v2353, %v1743
      %v2403 = vsel %vm2375, %v2354, %v1745
      %v2404 = vsel %vm2375, %v2355, %v1747
      %v2405 = vsel %vm2375, %v2356, %v1749
      %v2406 = vsel %vm2375, %v2357, %v1751
      %v2407 = vsel %vm2375, %v2358, %v1753
      %v2408 = vsel %vm2375, %v2359, %v1755
      %v2409 = vsel %vm2375, %v2360, %v1757
      %v2410 = vsel %vm2375, %v2361, %v1759
      %v2411 = vsel %vm2375, %v2362, %v1761
      %v2412 = vsel %vm2375, %v2363, %v1763
      %v2413 = vsel %vm2375, %v2364, %v1765
      %v2414 = vsel %vm2375, %v2365, %v1767
      %v2415 = vsel %vm2375, %v2366, %v1769
      %v2416 = vsel %vm2375, %v2367, %v1771
      %v2417 = vsel %vm2375, %v2368, %v1773
      %v2418 = vsel %vm2375, %v2369, %v1775
      %v2419 = vsel %vm2375, %v2370, %v1777
      %v2420 = vsel %vm2375, %v2371, %v1779
      %v2421 = vsel %vm2375, %v2372, %v1781
      %v2422 = vsel %vm2375, %v2373, %v1783
      %v2423 = vsel %vm2375, %v2374, %v1785
      %vm2424 = vcmask 228352
      %v2425 = vsel %vm2424, %v2376, %v1838
      %v2426 = vsel %vm2424, %v2377, %v1840
      %v2427 = vsel %vm2424, %v2378, %v1842
      %v2428 = vsel %vm2424, %v2379, %v1844
      %v2429 = vsel %vm2424, %v2380, %v1846
      %v2430 = vsel %vm2424, %v2381, %v1848
      %v2431 = vsel %vm2424, %v2382, %v1850
      %v2432 = vsel %vm2424, %v2383, %v1852
      %v2433 = vsel %vm2424, %v2384, %v1854
      %v2434 = vsel %vm2424, %v2385, %v1856
      %v2435 = vsel %vm2424, %v2386, %v1858
      %v2436 = vsel %vm2424, %v2387, %v1860
      %v2437 = vsel %vm2424, %v2388, %v1862
      %v2438 = vsel %vm2424, %v2389, %v1864
      %v2439 = vsel %vm2424, %v2390, %v1866
      %v2440 = vsel %vm2424, %v2391, %v1868
      %v2441 = vsel %vm2424, %v2392, %v1870
      %v2442 = vsel %vm2424, %v2393, %v1872
      %v2443 = vsel %vm2424, %v2394, %v1874
      %v2444 = vsel %vm2424, %v2395, %v1876
      %v2445 = vsel %vm2424, %v2396, %v1878
      %v2446 = vsel %vm2424, %v2397, %v1880
      %v2447 = vsel %vm2424, %v2398, %v1882
      %v2448 = vsel %vm2424, %v2399, %v1884
      %v2449 = vsel %vm2424, %v2400, %v1886
      %v2450 = vsel %vm2424, %v2401, %v1888
      %v2451 = vsel %vm2424, %v2402, %v1890
      %v2452 = vsel %vm2424, %v2403, %v1892
      %v2453 = vsel %vm2424, %v2404, %v1894
      %v2454 = vsel %vm2424, %v2405, %v1896
      %v2455 = vsel %vm2424, %v2406, %v1898
      %v2456 = vsel %vm2424, %v2407, %v1900
      %v2457 = vsel %vm2424, %v2408, %v1902
      %v2458 = vsel %vm2424, %v2409, %v1904
      %v2459 = vsel %vm2424, %v2410, %v1906
      %v2460 = vsel %vm2424, %v2411, %v1908
      %v2461 = vsel %vm2424, %v2412, %v1910
      %v2462 = vsel %vm2424, %v2413, %v1912
      %v2463 = vsel %vm2424, %v2414, %v1914
      %v2464 = vsel %vm2424, %v2415, %v1916
      %v2465 = vsel %vm2424, %v2416, %v1918
      %v2466 = vsel %vm2424, %v2417, %v1920
      %v2467 = vsel %vm2424, %v2418, %v1922
      %v2468 = vsel %vm2424, %v2419, %v1924
      %v2469 = vsel %vm2424, %v2420, %v1926
      %v2470 = vsel %vm2424, %v2421, %v1928
      %v2471 = vsel %vm2424, %v2422, %v1930
      %v2472 = vsel %vm2424, %v2423, %v1932
      %vm2473 = vcmask 261120
      %v2474 = vsel %vm2473, %v2425, %v1988
      %v2475 = vsel %vm2473, %v2426, %v1990
      %v2476 = vsel %vm2473, %v2427, %v1992
      %v2477 = vsel %vm2473, %v2428, %v1994
      %v2478 = vsel %vm2473, %v2429, %v1996
      %v2479 = vsel %vm2473, %v2430, %v1998
      %v2480 = vsel %vm2473, %v2431, %v2000
      %v2481 = vsel %vm2473, %v2432, %v2002
      %v2482 = vsel %vm2473, %v2433, %v2004
      %v2483 = vsel %vm2473, %v2434, %v2006
      %v2484 = vsel %vm2473, %v2435, %v2008
      %v2485 = vsel %vm2473, %v2436, %v2010
      %v2486 = vsel %vm2473, %v2437, %v2012
      %v2487 = vsel %vm2473, %v2438, %v2014
      %v2488 = vsel %vm2473, %v2439, %v2016
      %v2489 = vsel %vm2473, %v2440, %v2018
      %v2490 = vsel %vm2473, %v2441, %v2020
      %v2491 = vsel %vm2473, %v2442, %v2022
      %v2492 = vsel %vm2473, %v2443, %v2024
      %v2493 = vsel %vm2473, %v2444, %v2026
      %v2494 = vsel %vm2473, %v2445, %v2028
      %v2495 = vsel %vm2473, %v2446, %v2030
      %v2496 = vsel %vm2473, %v2447, %v2032
      %v2497 = vsel %vm2473, %v2448, %v2034
      %v2498 = vsel %vm2473, %v2449, %v2036
      %v2499 = vsel %vm2473, %v2450, %v2038
      %v2500 = vsel %vm2473, %v2451, %v2040
      %v2501 = vsel %vm2473, %v2452, %v2042
      %v2502 = vsel %vm2473, %v2453, %v2044
      %v2503 = vsel %vm2473, %v2454, %v2046
      %v2504 = vsel %vm2473, %v2455, %v2048
      %v2505 = vsel %vm2473, %v2456, %v2050
      %v2506 = vsel %vm2473, %v2457, %v2052
      %v2507 = vsel %vm2473, %v2458, %v2054
      %v2508 = vsel %vm2473, %v2459, %v2056
      %v2509 = vsel %vm2473, %v2460, %v2058
      %v2510 = vsel %vm2473, %v2461, %v2060
      %v2511 = vsel %vm2473, %v2462, %v2062
      %v2512 = vsel %vm2473, %v2463, %v2064
      %v2513 = vsel %vm2473, %v2464, %v2066
      %v2514 = vsel %vm2473, %v2465, %v2068
      %v2515 = vsel %vm2473, %v2466, %v2070
      %v2516 = vsel %vm2473, %v2467, %v2072
      %v2517 = vsel %vm2473, %v2468, %v2074
      %v2518 = vsel %vm2473, %v2469, %v2076
      %v2519 = vsel %vm2473, %v2470, %v2078
      %v2520 = vsel %vm2473, %v2471, %v2080
      %v2521 = vsel %vm2473, %v2472, %v2082
      %vm2570 = vcmask 1040384
      %v2571 = vrot.slane %v2474, 7
      %v2572 = vrot.slane %v2475, 7
      %v2573 = vsel %vm2570, %v2571, %v2572
      %v2574 = vrot.slane %v2476, 7
      %v2575 = vsel %vm2570, %v2572, %v2574
      %v2576 = vrot.slane %v2477, 7
      %v2577 = vrot.slane %v2478, 7
      %v2578 = vsel %vm2570, %v2576, %v2577
      %v2579 = vrot.slane %v2479, 7
      %v2580 = vsel %vm2570, %v2577, %v2579
      %v2581 = vrot.slane %v2480, 7
      %v2582 = vrot.slane %v2481, 7
      %v2583 = vsel %vm2570, %v2581, %v2582
      %v2584 = vrot.slane %v2482, 7
      %v2585 = vsel %vm2570, %v2582, %v2584
      %v2586 = vrot.slane %v2483, 7
      %v2587 = vrot.slane %v2484, 7
      %v2588 = vsel %vm2570, %v2586, %v2587
      %v2589 = vrot.slane %v2485, 7
      %v2590 = vsel %vm2570, %v2587, %v2589
      %v2591 = vrot.slane %v2486, 7
      %v2592 = vrot.slane %v2487, 7
      %v2593 = vsel %vm2570, %v2591, %v2592
      %v2594 = vrot.slane %v2488, 7
      %v2595 = vsel %vm2570, %v2592, %v2594
      %v2596 = vrot.slane %v2489, 7
      %v2597 = vrot.slane %v2490, 7
      %v2598 = vsel %vm2570, %v2596, %v2597
      %v2599 = vrot.slane %v2491, 7
      %v2600 = vsel %vm2570, %v2597, %v2599
      %v2601 = vrot.slane %v2492, 7
      %v2602 = vrot.slane %v2493, 7
      %v2603 = vsel %vm2570, %v2601, %v2602
      %v2604 = vrot.slane %v2494, 7
      %v2605 = vsel %vm2570, %v2602, %v2604
      %v2606 = vrot.slane %v2495, 7
      %v2607 = vrot.slane %v2496, 7
      %v2608 = vsel %vm2570, %v2606, %v2607
      %v2609 = vrot.slane %v2497, 7
      %v2610 = vsel %vm2570, %v2607, %v2609
      %v2611 = vrot.slane %v2498, 7
      %v2612 = vrot.slane %v2499, 7
      %v2613 = vsel %vm2570, %v2611, %v2612
      %v2614 = vrot.slane %v2500, 7
      %v2615 = vsel %vm2570, %v2612, %v2614
      %v2616 = vrot.slane %v2501, 7
      %v2617 = vrot.slane %v2502, 7
      %v2618 = vsel %vm2570, %v2616, %v2617
      %v2619 = vrot.slane %v2503, 7
      %v2620 = vsel %vm2570, %v2617, %v2619
      %v2621 = vrot.slane %v2504, 7
      %v2622 = vrot.slane %v2505, 7
      %v2623 = vsel %vm2570, %v2621, %v2622
      %v2624 = vrot.slane %v2506, 7
      %v2625 = vsel %vm2570, %v2622, %v2624
      %v2626 = vrot.slane %v2507, 7
      %v2627 = vrot.slane %v2508, 7
      %v2628 = vsel %vm2570, %v2626, %v2627
      %v2629 = vrot.slane %v2509, 7
      %v2630 = vsel %vm2570, %v2627, %v2629
      %v2631 = vrot.slane %v2510, 7
      %v2632 = vrot.slane %v2511, 7
      %v2633 = vsel %vm2570, %v2631, %v2632
      %v2634 = vrot.slane %v2512, 7
      %v2635 = vsel %vm2570, %v2632, %v2634
      %v2636 = vrot.slane %v2513, 7
      %v2637 = vrot.slane %v2514, 7
      %v2638 = vsel %vm2570, %v2636, %v2637
      %v2639 = vrot.slane %v2515, 7
      %v2640 = vsel %vm2570, %v2637, %v2639
      %v2641 = vrot.slane %v2516, 7
      %v2642 = vrot.slane %v2517, 7
      %v2643 = vsel %vm2570, %v2641, %v2642
      %v2644 = vrot.slane %v2518, 7
      %v2645 = vsel %vm2570, %v2642, %v2644
      %v2646 = vrot.slane %v2519, 7
      %v2647 = vrot.slane %v2520, 7
      %v2648 = vsel %vm2570, %v2646, %v2647
      %v2649 = vrot.slane %v2521, 7
      %v2650 = vsel %vm2570, %v2647, %v2649
      %v2683 = vpack.c.bf16 %v2575, %v2573
      %v2684 = vpack.c.bf16 %v2580, %v2578
      %v2685 = vpack.c.bf16 %v2585, %v2583
      %v2686 = vpack.c.bf16 %v2590, %v2588
      %v2687 = vpack.c.bf16 %v2595, %v2593
      %v2688 = vpack.c.bf16 %v2600, %v2598
      %v2689 = vpack.c.bf16 %v2605, %v2603
      %v2690 = vpack.c.bf16 %v2610, %v2608
      %v2691 = vpack.c.bf16 %v2615, %v2613
      %v2692 = vpack.c.bf16 %v2620, %v2618
      %v2693 = vpack.c.bf16 %v2625, %v2623
      %v2694 = vpack.c.bf16 %v2630, %v2628
      %v2695 = vpack.c.bf16 %v2635, %v2633
      %v2696 = vpack.c.bf16 %v2640, %v2638
      %v2697 = vpack.c.bf16 %v2645, %v2643
      %v2698 = vpack.c.bf16 %v2650, %v2648
      %v2699 = vld [vmem:[%s1] sm:$0xf]
      %v2700 = vld [vmem:[%s1 + $0x4] sm:$0xf]
      %v2701 = vld [vmem:[%s1 + $0x8] sm:$0xf]
      %v2702 = vld [vmem:[%s1 + $0xc] sm:$0xf]
      %v2703 = vld [vmem:[%s1 + $0x10] sm:$0x3]
      %v2709 = vunpack.c.l.b16 %v2699
      %v2710 = vunpack.c.l.b16 %v2700
      %v2711 = vunpack.c.l.b16 %v2701
      %v2712 = vunpack.c.l.b16 %v2702
      %v2713 = vunpack.c.l.b16 %v2703
      %v2714 = vpack.c.b16 %v2710, %v2709
      %v2715 = vpack.c.b16 %v2712, %v2711
      %v2716 = vpack.c.b16 %v2713, %v2713
      %vm2719 = vcmask 293888
      %v2721 = vsel %vm2719, %v2683, 0
      %v2724 = vsel %vm2719, %v2684, 0
      %v2727 = vsel %vm2719, %v2685, 0
      %v2730 = vsel %vm2719, %v2686, 0
      %v2733 = vsel %vm2719, %v2687, 0
      %v2736 = vsel %vm2719, %v2688, 0
      %v2739 = vsel %vm2719, %v2689, 0
      %v2742 = vsel %vm2719, %v2690, 0
      %v2745 = vsel %vm2719, %v2691, 0
      %v2748 = vsel %vm2719, %v2692, 0
      %v2751 = vsel %vm2719, %v2693, 0
      %v2754 = vsel %vm2719, %v2694, 0
      %v2757 = vsel %vm2719, %v2695, 0
      %v2760 = vsel %vm2719, %v2696, 0
      %v2763 = vsel %vm2719, %v2697, 0
      %v2766 = vsel %vm2719, %v2698, 0
      %vm2768 = vcmask 1041408
      %v2770 = vsel %vm2768, %v2716, 0
      %2772 = vmatprep.subr.bf16.mxu0 0
      %2773 = vmatpush1.bf16.msra.mxu0 %v2714
      %2774 = vmatprep.subr.bf16.mxu0 0
      %2775 = vmatpush1.bf16.msra.mxu0 %v2715
      %2776 = vmatprep.subr.bf16.mxu0 0
      %2777 = vmatpush1.bf16.msra.mxu0 %v2770
      %2778 = vmatprep.subr.bf16.mxu0 0
      %2779 = vmatpush1.bf16.msra.mxu0 0
      %2780 = vmatprep.subr.bf16.mxu0 0
      %2781 = vmatpush1.bf16.msra.mxu0 0
      %2782 = vmatprep.subr.bf16.mxu0 0
      %2783 = vmatpush1.bf16.msra.mxu0 0
      %2784 = vmatprep.subr.bf16.mxu0 0
      %2785 = vmatpush1.bf16.msra.mxu0 0
      %2786 = vmatprep.subr.bf16.mxu0 0
      %2787 = vmatpush1.bf16.msra.mxu0 0
      %2788 = vmatprep.subr.bf16.mxu0 0
      %2789 = vmatpush1.bf16.msra.mxu0 0
      %2790 = vmatprep.subr.bf16.mxu0 0
      %2791 = vmatpush1.bf16.msra.mxu0 0
      %2792 = vmatprep.subr.bf16.mxu0 0
      %2793 = vmatpush1.bf16.msra.mxu0 0
      %2794 = vmatprep.subr.bf16.mxu0 0
      %2795 = vmatpush1.bf16.msra.mxu0 0
      %2796 = vmatprep.subr.bf16.mxu0 0
      %2797 = vmatpush1.bf16.msra.mxu0 0
      %2798 = vmatprep.subr.bf16.mxu0 0
      %2799 = vmatpush1.bf16.msra.mxu0 0
      %2800 = vmatprep.subr.bf16.mxu0 0
      %2801 = vmatpush1.bf16.msra.mxu0 0
      %2802 = vmatprep.subr.bf16.mxu0 0
      %2803 = vmatpush1.bf16.msra.mxu0 0
      %2804 = vmatprep.mubr.bf16.mxu0 0
      %2805 = vmatmul.mubr.bf16.gmra.mrb[0].mxu0 %v2721
      %v2806 = vpop.f32.mrb[0].mxu0
      %v2807 = vadd.f32 0.0, %v2806
      %v2808 = vpop.f32.mrb[0].mxu0
      %v2809 = vpop.f32.mrb[0].mxu0
      %v2810 = vadd.f32 0.0, %v2809
      %v2811 = vpop.f32.mrb[0].mxu0
      %2812 = vmatprep.mubr.bf16.mxu0 0
      %2813 = vmatmul.mubr.bf16.gmra.mrb[0].mxu0 %v2724
      %v2814 = vpop.f32.mrb[0].mxu0
      %v2815 = vadd.f32 0.0, %v2814
      %v2816 = vpop.f32.mrb[0].mxu0
      %v2817 = vpop.f32.mrb[0].mxu0
      %v2818 = vadd.f32 0.0, %v2817
      %v2819 = vpop.f32.mrb[0].mxu0
      %2820 = vmatprep.mubr.bf16.mxu0 0
      %2821 = vmatmul.mubr.bf16.gmra.mrb[0].mxu0 %v2727
      %v2822 = vpop.f32.mrb[0].mxu0
      %v2823 = vadd.f32 0.0, %v2822
      %v2824 = vpop.f32.mrb[0].mxu0
      %v2825 = vpop.f32.mrb[0].mxu0
      %v2826 = vadd.f32 0.0, %v2825
      %v2827 = vpop.f32.mrb[0].mxu0
      %2828 = vmatprep.mubr.bf16.mxu0 0
      %2829 = vmatmul.mubr.bf16.gmra.mrb[0].mxu0 %v2730
      %v2830 = vpop.f32.mrb[0].mxu0
      %v2831 = vadd.f32 0.0, %v2830
      %v2832 = vpop.f32.mrb[0].mxu0
      %v2833 = vpop.f32.mrb[0].mxu0
      %v2834 = vadd.f32 0.0, %v2833
      %v2835 = vpop.f32.mrb[0].mxu0
      %2836 = vmatprep.mubr.bf16.mxu0 0
      %2837 = vmatmul.mubr.bf16.gmra.mrb[0].mxu0 %v2733
      %v2838 = vpop.f32.mrb[0].mxu0
      %v2839 = vadd.f32 0.0, %v2838
      %v2840 = vpop.f32.mrb[0].mxu0
      %v2841 = vpop.f32.mrb[0].mxu0
      %v2842 = vadd.f32 0.0, %v2841
      %v2843 = vpop.f32.mrb[0].mxu0
      %2844 = vmatprep.mubr.bf16.mxu0 0
      %2845 = vmatmul.mubr.bf16.gmra.mrb[0].mxu0 %v2736
      %v2846 = vpop.f32.mrb[0].mxu0
      %v2847 = vadd.f32 0.0, %v2846
      %v2848 = vpop.f32.mrb[0].mxu0
      %v2849 = vpop.f32.mrb[0].mxu0
      %v2850 = vadd.f32 0.0, %v2849
      %v2851 = vpop.f32.mrb[0].mxu0
      %2852 = vmatprep.mubr.bf16.mxu0 0
      %2853 = vmatmul.mubr.bf16.gmra.mrb[0].mxu0 %v2739
      %v2854 = vpop.f32.mrb[0].mxu0
      %v2855 = vadd.f32 0.0, %v2854
      %v2856 = vpop.f32.mrb[0].mxu0
      %v2857 = vpop.f32.mrb[0].mxu0
      %v2858 = vadd.f32 0.0, %v2857
      %v2859 = vpop.f32.mrb[0].mxu0
      %2860 = vmatprep.mubr.bf16.mxu0 0
      %2861 = vmatmul.mubr.bf16.gmra.mrb[0].mxu0 %v2742
      %v2862 = vpop.f32.mrb[0].mxu0
      %v2863 = vadd.f32 0.0, %v2862
      %v2864 = vpop.f32.mrb[0].mxu0
      %v2865 = vpop.f32.mrb[0].mxu0
      %v2866 = vadd.f32 0.0, %v2865
      %v2867 = vpop.f32.mrb[0].mxu0
      %2868 = vmatprep.mubr.bf16.mxu0 0
      %2869 = vmatmul.mubr.bf16.gmra.mrb[0].mxu0 %v2745
      %v2870 = vpop.f32.mrb[0].mxu0
      %v2871 = vadd.f32 0.0, %v2870
      %v2872 = vpop.f32.mrb[0].mxu0
      %v2873 = vpop.f32.mrb[0].mxu0
      %v2874 = vadd.f32 0.0, %v2873
      %v2875 = vpop.f32.mrb[0].mxu0
      %2876 = vmatprep.mubr.bf16.mxu0 0
      %2877 = vmatmul.mubr.bf16.gmra.mrb[0].mxu0 %v2748
      %v2878 = vpop.f32.mrb[0].mxu0
      %v2879 = vadd.f32 0.0, %v2878
      %v2880 = vpop.f32.mrb[0].mxu0
      %v2881 = vpop.f32.mrb[0].mxu0
      %v2882 = vadd.f32 0.0, %v2881
      %v2883 = vpop.f32.mrb[0].mxu0
      %2884 = vmatprep.mubr.bf16.mxu0 0
      %2885 = vmatmul.mubr.bf16.gmra.mrb[0].mxu0 %v2751
      %v2886 = vpop.f32.mrb[0].mxu0
      %v2887 = vadd.f32 0.0, %v2886
      %v2888 = vpop.f32.mrb[0].mxu0
      %v2889 = vpop.f32.mrb[0].mxu0
      %v2890 = vadd.f32 0.0, %v2889
      %v2891 = vpop.f32.mrb[0].mxu0
      %2892 = vmatprep.mubr.bf16.mxu0 0
      %2893 = vmatmul.mubr.bf16.gmra.mrb[0].mxu0 %v2754
      %v2894 = vpop.f32.mrb[0].mxu0
      %v2895 = vadd.f32 0.0, %v2894
      %v2896 = vpop.f32.mrb[0].mxu0
      %v2897 = vpop.f32.mrb[0].mxu0
      %v2898 = vadd.f32 0.0, %v2897
      %v2899 = vpop.f32.mrb[0].mxu0
      %2900 = vmatprep.mubr.bf16.mxu0 0
      %2901 = vmatmul.mubr.bf16.gmra.mrb[0].mxu0 %v2757
      %v2902 = vpop.f32.mrb[0].mxu0
      %v2903 = vadd.f32 0.0, %v2902
      %v2904 = vpop.f32.mrb[0].mxu0
      %v2905 = vpop.f32.mrb[0].mxu0
      %v2906 = vadd.f32 0.0, %v2905
      %v2907 = vpop.f32.mrb[0].mxu0
      %2908 = vmatprep.mubr.bf16.mxu0 0
      %2909 = vmatmul.mubr.bf16.gmra.mrb[0].mxu0 %v2760
      %v2910 = vpop.f32.mrb[0].mxu0
      %v2911 = vadd.f32 0.0, %v2910
      %v2912 = vpop.f32.mrb[0].mxu0
      %v2913 = vpop.f32.mrb[0].mxu0
      %v2914 = vadd.f32 0.0, %v2913
      %v2915 = vpop.f32.mrb[0].mxu0
      %2916 = vmatprep.mubr.bf16.mxu0 0
      %2917 = vmatmul.mubr.bf16.gmra.mrb[0].mxu0 %v2763
      %v2918 = vpop.f32.mrb[0].mxu0
      %v2919 = vadd.f32 0.0, %v2918
      %v2920 = vpop.f32.mrb[0].mxu0
      %v2921 = vpop.f32.mrb[0].mxu0
      %v2922 = vadd.f32 0.0, %v2921
      %v2923 = vpop.f32.mrb[0].mxu0
      %2924 = vmatprep.mubr.bf16.mxu0 0
      %2925 = vmatmul.mubr.bf16.gmra.mrb[0].mxu0 %v2766
      %v2926 = vpop.f32.mrb[0].mxu0
      %v2927 = vadd.f32 0.0, %v2926
      %v2928 = vpop.f32.mrb[0].mxu0
      %v2929 = vpop.f32.mrb[0].mxu0
      %v2930 = vadd.f32 0.0, %v2929
      %v2931 = vpop.f32.mrb[0].mxu0
      %2932 = vdwg.mxu0
      %v2933 = vld [vmem:[%s4] sm:$0x1]
      %v2935 = vlaneseq
      %v2936 = vshrl.u32 %v2935, 7
      %v2937 = vsub.s32 0, %v2936
      %v2938 = vrot.slane %v2933, %v2937
      %v2940 = vmul.f32 %v2807, %v2938
      %v2941 = vmul.f32 %v2810, %v2938
      %v2942 = vmul.f32 %v2815, %v2938
      %v2943 = vmul.f32 %v2818, %v2938
      %v2944 = vmul.f32 %v2823, %v2938
      %v2945 = vmul.f32 %v2826, %v2938
      %v2946 = vmul.f32 %v2831, %v2938
      %v2947 = vmul.f32 %v2834, %v2938
      %v2948 = vmul.f32 %v2839, %v2938
      %v2949 = vmul.f32 %v2842, %v2938
      %v2950 = vmul.f32 %v2847, %v2938
      %v2951 = vmul.f32 %v2850, %v2938
      %v2952 = vmul.f32 %v2855, %v2938
      %v2953 = vmul.f32 %v2858, %v2938
      %v2954 = vmul.f32 %v2863, %v2938
      %v2955 = vmul.f32 %v2866, %v2938
      %v2956 = vmul.f32 %v2871, %v2938
      %v2957 = vmul.f32 %v2874, %v2938
      %v2958 = vmul.f32 %v2879, %v2938
      %v2959 = vmul.f32 %v2882, %v2938
      %v2960 = vmul.f32 %v2887, %v2938
      %v2961 = vmul.f32 %v2890, %v2938
      %v2962 = vmul.f32 %v2895, %v2938
      %v2963 = vmul.f32 %v2898, %v2938
      %v2964 = vmul.f32 %v2903, %v2938
      %v2965 = vmul.f32 %v2906, %v2938
      %v2966 = vmul.f32 %v2911, %v2938
      %v2967 = vmul.f32 %v2914, %v2938
      %v2968 = vmul.f32 %v2919, %v2938
      %v2969 = vmul.f32 %v2922, %v2938
      %v2970 = vmul.f32 %v2927, %v2938
      %v2971 = vmul.f32 %v2930, %v2938
      %v2972 = vld [vmem:[%s5] sm:$0x1]
      %v2974 = vlaneseq
      %v2975 = vshrl.u32 %v2974, 7
      %v2976 = vsub.s32 0, %v2975
      %v2977 = vrot.slane %v2972, %v2976
      %v2979 = vadd.f32 %v2940, %v2977
      %v2980 = vadd.f32 %v2941, %v2977
      %v2981 = vadd.f32 %v2942, %v2977
      %v2982 = vadd.f32 %v2943, %v2977
      %v2983 = vadd.f32 %v2944, %v2977
      %v2984 = vadd.f32 %v2945, %v2977
      %v2985 = vadd.f32 %v2946, %v2977
      %v2986 = vadd.f32 %v2947, %v2977
      %v2987 = vadd.f32 %v2948, %v2977
      %v2988 = vadd.f32 %v2949, %v2977
      %v2989 = vadd.f32 %v2950, %v2977
      %v2990 = vadd.f32 %v2951, %v2977
      %v2991 = vadd.f32 %v2952, %v2977
      %v2992 = vadd.f32 %v2953, %v2977
      %v2993 = vadd.f32 %v2954, %v2977
      %v2994 = vadd.f32 %v2955, %v2977
      %v2995 = vadd.f32 %v2956, %v2977
      %v2996 = vadd.f32 %v2957, %v2977
      %v2997 = vadd.f32 %v2958, %v2977
      %v2998 = vadd.f32 %v2959, %v2977
      %v2999 = vadd.f32 %v2960, %v2977
      %v3000 = vadd.f32 %v2961, %v2977
      %v3001 = vadd.f32 %v2962, %v2977
      %v3002 = vadd.f32 %v2963, %v2977
      %v3003 = vadd.f32 %v2964, %v2977
      %v3004 = vadd.f32 %v2965, %v2977
      %v3005 = vadd.f32 %v2966, %v2977
      %v3006 = vadd.f32 %v2967, %v2977
      %v3007 = vadd.f32 %v2968, %v2977
      %v3008 = vadd.f32 %v2969, %v2977
      %v3009 = vadd.f32 %v2970, %v2977
      %v3010 = vadd.f32 %v2971, %v2977
      %vm3011 = vcmp.ge.f32.partialorder %v2979, 0.0
      %vm3012 = vcmp.ge.f32.partialorder %v2980, 0.0
      %vm3013 = vcmp.ge.f32.partialorder %v2981, 0.0
      %vm3014 = vcmp.ge.f32.partialorder %v2982, 0.0
      %vm3015 = vcmp.ge.f32.partialorder %v2983, 0.0
      %vm3016 = vcmp.ge.f32.partialorder %v2984, 0.0
      %vm3017 = vcmp.ge.f32.partialorder %v2985, 0.0
      %vm3018 = vcmp.ge.f32.partialorder %v2986, 0.0
      %vm3019 = vcmp.ge.f32.partialorder %v2987, 0.0
      %vm3020 = vcmp.ge.f32.partialorder %v2988, 0.0
      %vm3021 = vcmp.ge.f32.partialorder %v2989, 0.0
      %vm3022 = vcmp.ge.f32.partialorder %v2990, 0.0
      %vm3023 = vcmp.ge.f32.partialorder %v2991, 0.0
      %vm3024 = vcmp.ge.f32.partialorder %v2992, 0.0
      %vm3025 = vcmp.ge.f32.partialorder %v2993, 0.0
      %vm3026 = vcmp.ge.f32.partialorder %v2994, 0.0
      %vm3027 = vcmp.ge.f32.partialorder %v2995, 0.0
      %vm3028 = vcmp.ge.f32.partialorder %v2996, 0.0
      %vm3029 = vcmp.ge.f32.partialorder %v2997, 0.0
      %vm3030 = vcmp.ge.f32.partialorder %v2998, 0.0
      %vm3031 = vcmp.ge.f32.partialorder %v2999, 0.0
      %vm3032 = vcmp.ge.f32.partialorder %v3000, 0.0
      %vm3033 = vcmp.ge.f32.partialorder %v3001, 0.0
      %vm3034 = vcmp.ge.f32.partialorder %v3002, 0.0
      %vm3035 = vcmp.ge.f32.partialorder %v3003, 0.0
      %vm3036 = vcmp.ge.f32.partialorder %v3004, 0.0
      %vm3037 = vcmp.ge.f32.partialorder %v3005, 0.0
      %vm3038 = vcmp.ge.f32.partialorder %v3006, 0.0
      %vm3039 = vcmp.ge.f32.partialorder %v3007, 0.0
      %vm3040 = vcmp.ge.f32.partialorder %v3008, 0.0
      %vm3041 = vcmp.ge.f32.partialorder %v3009, 0.0
      %vm3042 = vcmp.ge.f32.partialorder %v3010, 0.0
      %v3043 = vld [vmem:[%s6] sm:$0x1]
      %v3045 = vlaneseq
      %v3046 = vshrl.u32 %v3045, 7
      %v3047 = vsub.s32 0, %v3046
      %v3048 = vrot.slane %v3043, %v3047
      %v3050 = vmul.f32 %v3048, %v2979
      %v3051 = vmul.f32 %v3048, %v2980
      %v3052 = vmul.f32 %v3048, %v2981
      %v3053 = vmul.f32 %v3048, %v2982
      %v3054 = vmul.f32 %v3048, %v2983
      %v3055 = vmul.f32 %v3048, %v2984
      %v3056 = vmul.f32 %v3048, %v2985
      %v3057 = vmul.f32 %v3048, %v2986
      %v3058 = vmul.f32 %v3048, %v2987
      %v3059 = vmul.f32 %v3048, %v2988
      %v3060 = vmul.f32 %v3048, %v2989
      %v3061 = vmul.f32 %v3048, %v2990
      %v3062 = vmul.f32 %v3048, %v2991
      %v3063 = vmul.f32 %v3048, %v2992
      %v3064 = vmul.f32 %v3048, %v2993
      %v3065 = vmul.f32 %v3048, %v2994
      %v3066 = vmul.f32 %v3048, %v2995
      %v3067 = vmul.f32 %v3048, %v2996
      %v3068 = vmul.f32 %v3048, %v2997
      %v3069 = vmul.f32 %v3048, %v2998
      %v3070 = vmul.f32 %v3048, %v2999
      %v3071 = vmul.f32 %v3048, %v3000
      %v3072 = vmul.f32 %v3048, %v3001
      %v3073 = vmul.f32 %v3048, %v3002
      %v3074 = vmul.f32 %v3048, %v3003
      %v3075 = vmul.f32 %v3048, %v3004
      %v3076 = vmul.f32 %v3048, %v3005
      %v3077 = vmul.f32 %v3048, %v3006
      %v3078 = vmul.f32 %v3048, %v3007
      %v3079 = vmul.f32 %v3048, %v3008
      %v3080 = vmul.f32 %v3048, %v3009
      %v3081 = vmul.f32 %v3048, %v3010
      %v3082 = vsel %vm3011, %v2979, %v3050
      %v3083 = vsel %vm3012, %v2980, %v3051
      %v3084 = vsel %vm3013, %v2981, %v3052
      %v3085 = vsel %vm3014, %v2982, %v3053
      %v3086 = vsel %vm3015, %v2983, %v3054
      %v3087 = vsel %vm3016, %v2984, %v3055
      %v3088 = vsel %vm3017, %v2985, %v3056
      %v3089 = vsel %vm3018, %v2986, %v3057
      %v3090 = vsel %vm3019, %v2987, %v3058
      %v3091 = vsel %vm3020, %v2988, %v3059
      %v3092 = vsel %vm3021, %v2989, %v3060
      %v3093 = vsel %vm3022, %v2990, %v3061
      %v3094 = vsel %vm3023, %v2991, %v3062
      %v3095 = vsel %vm3024, %v2992, %v3063
      %v3096 = vsel %vm3025, %v2993, %v3064
      %v3097 = vsel %vm3026, %v2994, %v3065
      %v3098 = vsel %vm3027, %v2995, %v3066
      %v3099 = vsel %vm3028, %v2996, %v3067
      %v3100 = vsel %vm3029, %v2997, %v3068
      %v3101 = vsel %vm3030, %v2998, %v3069
      %v3102 = vsel %vm3031, %v2999, %v3070
      %v3103 = vsel %vm3032, %v3000, %v3071
      %v3104 = vsel %vm3033, %v3001, %v3072
      %v3105 = vsel %vm3034, %v3002, %v3073
      %v3106 = vsel %vm3035, %v3003, %v3074
      %v3107 = vsel %vm3036, %v3004, %v3075
      %v3108 = vsel %vm3037, %v3005, %v3076
      %v3109 = vsel %vm3038, %v3006, %v3077
      %v3110 = vsel %vm3039, %v3007, %v3078
      %v3111 = vsel %vm3040, %v3008, %v3079
      %v3112 = vsel %vm3041, %v3009, %v3080
      %v3113 = vsel %vm3042, %v3010, %v3081
      %3114 = vst.msk [vmem:[#allocation3] sm:$0xff] %vm2179, 0.0
      %3115 = vst.msk [vmem:[#allocation3 + $0x8] sm:$0xff] %vm2179, 0.0
      %3116 = vst.msk [vmem:[#allocation3 + $0x10] sm:$0xff] %vm2179, 0.0
      %3117 = vst.msk [vmem:[#allocation3 + $0x18] sm:$0xff] %vm2179, 0.0
      %3118 = vst.msk [vmem:[#allocation3 + $0x20] sm:$0xff] %vm2179, 0.0
      %3119 = vst.msk [vmem:[#allocation3 + $0x28] sm:$0xff] %vm2179, 0.0
      %3120 = vst.msk [vmem:[#allocation3 + $0x30] sm:$0xff] %vm2179, 0.0
      %3121 = vst.msk [vmem:[#allocation3 + $0x38] sm:$0xff] %vm2179, 0.0
      %3122 = vst.msk [vmem:[#allocation3 + $0x40] sm:$0xff] %vm2179, 0.0
      %3123 = vst.msk [vmem:[#allocation3 + $0x48] sm:$0xff] %vm2179, 0.0
      %3124 = vst.msk [vmem:[#allocation3 + $0x50] sm:$0xff] %vm2179, 0.0
      %3125 = vst.msk [vmem:[#allocation3 + $0x58] sm:$0xff] %vm2179, 0.0
      %3126 = vst.msk [vmem:[#allocation3 + $0x60] sm:$0xff] %vm2179, 0.0
      %3127 = vst.msk [vmem:[#allocation3 + $0x68] sm:$0xff] %vm2179, 0.0
      %3128 = vst.msk [vmem:[#allocation3 + $0x70] sm:$0xff] %vm2179, 0.0
      %3129 = vst.msk [vmem:[#allocation3 + $0x78] sm:$0xff] %vm2179, 0.0
      %3130 = vst.msk [vmem:[#allocation3 + $0x80] sm:$0xff] %vm2179, 0.0
      %3131 = vst.msk [vmem:[#allocation3 + $0x88] sm:$0xff] %vm2179, 0.0
      %3132 = vst.msk [vmem:[#allocation3 + $0x90] sm:$0xff] %vm2179, 0.0
      %3133 = vst.msk [vmem:[#allocation3 + $0x98] sm:$0xff] %vm2179, 0.0
      %3134 = vst.msk [vmem:[#allocation3 + $0xa0] sm:$0xff] %vm2179, 0.0
      %3135 = vst.msk [vmem:[#allocation3 + $0xa8] sm:$0xff] %vm2179, 0.0
      %3136 = vst.msk [vmem:[#allocation3 + $0xb0] sm:$0xff] %vm2179, 0.0
      %3137 = vst.msk [vmem:[#allocation3 + $0xb8] sm:$0xff] %vm2179, 0.0
      %3138 = vst.msk [vmem:[#allocation3 + $0xc0] sm:$0xff] %vm2179, 0.0
      %3139 = vst.msk [vmem:[#allocation3 + $0xc8] sm:$0xff] %vm2179, 0.0
      %3140 = vst.msk [vmem:[#allocation3 + $0xd0] sm:$0xff] %vm2179, 0.0
      %3141 = vst.msk [vmem:[#allocation3 + $0xd8] sm:$0xff] %vm2179, 0.0
      %3142 = vst.msk [vmem:[#allocation3 + $0xe0] sm:$0xff] %vm2179, 0.0
      %3143 = vst.msk [vmem:[#allocation3 + $0xe8] sm:$0xff] %vm2179, 0.0
      %3144 = vst.msk [vmem:[#allocation3 + $0xf0] sm:$0xff] %vm2179, 0.0
      %3145 = vst.msk [vmem:[#allocation3 + $0xf8] sm:$0xff] %vm2179, 0.0
      %3146 = vst.msk [vmem:[#allocation3 + $0x100] sm:$0xff] %vm2179, 0.0
      %3147 = vst.msk [vmem:[#allocation3 + $0x108] sm:$0xff] %vm2179, 0.0
      %3148 = vst.msk [vmem:[#allocation3 + $0x110] sm:$0xff] %vm2179, 0.0
      %3149 = vst.msk [vmem:[#allocation3 + $0x118] sm:$0xff] %vm2179, 0.0
      %3150 = vst.msk [vmem:[#allocation3 + $0x120] sm:$0xff] %vm2179, 0.0
      %3151 = vst.msk [vmem:[#allocation3 + $0x128] sm:$0xff] %vm2179, 0.0
      %3152 = vst.msk [vmem:[#allocation3 + $0x130] sm:$0xff] %vm2179, 0.0
      %3153 = vst.msk [vmem:[#allocation3 + $0x138] sm:$0xff] %vm2179, 0.0
      %3154 = vst.msk [vmem:[#allocation3 + $0x140] sm:$0xff] %vm2179, 0.0
      %3155 = vst.msk [vmem:[#allocation3 + $0x148] sm:$0xff] %vm2179, 0.0
      %3156 = vst.msk [vmem:[#allocation3 + $0x150] sm:$0xff] %vm2179, 0.0
      %3157 = vst.msk [vmem:[#allocation3 + $0x158] sm:$0xff] %vm2179, 0.0
      %3158 = vst.msk [vmem:[#allocation3 + $0x160] sm:$0xff] %vm2179, 0.0
      %3159 = vst.msk [vmem:[#allocation3 + $0x168] sm:$0xff] %vm2179, 0.0
      %3160 = vst.msk [vmem:[#allocation3 + $0x170] sm:$0xff] %vm2179, 0.0
      %3161 = vst.msk [vmem:[#allocation3 + $0x178] sm:$0xff] %vm2179, 0.0
      %3162 = vst.msk [vmem:[#allocation3 + $0x180] sm:$0xff] %vm2179, 0.0
      %3163 = vst.msk [vmem:[#allocation3 + $0x188] sm:$0xff] %vm2179, 0.0
      %3164 = vst.msk [vmem:[#allocation3 + $0x190] sm:$0xff] %vm2179, 0.0
      %3165 = vst.msk [vmem:[#allocation3 + $0x198] sm:$0xff] %vm2179, 0.0
      %3166 = vst.msk [vmem:[#allocation3 + $0x1a0] sm:$0xff] %vm2179, 0.0
      %3167 = vst.msk [vmem:[#allocation3 + $0x1a8] sm:$0xff] %vm2179, 0.0
      %3168 = vst.msk [vmem:[#allocation3 + $0x1b0] sm:$0xff] %vm2179, 0.0
      %3169 = vst.msk [vmem:[#allocation3 + $0x1b8] sm:$0xff] %vm2179, 0.0
      %3170 = vst.msk [vmem:[#allocation3 + $0x1c0] sm:$0xff] %vm2179, 0.0
      %3171 = vst.msk [vmem:[#allocation3 + $0x1c8] sm:$0xff] %vm2179, 0.0
      %3172 = vst.msk [vmem:[#allocation3 + $0x1d0] sm:$0xff] %vm2179, 0.0
      %3173 = vst.msk [vmem:[#allocation3 + $0x1d8] sm:$0xff] %vm2179, 0.0
      %3174 = vst.msk [vmem:[#allocation3 + $0x1e0] sm:$0xff] %vm2179, 0.0
      %3175 = vst.msk [vmem:[#allocation3 + $0x1e8] sm:$0xff] %vm2179, 0.0
      %3176 = vst.msk [vmem:[#allocation3 + $0x1f0] sm:$0xff] %vm2179, 0.0
      %3177 = vst.msk [vmem:[#allocation3 + $0x1f8] sm:$0xff] %vm2179, 0.0
      %3178 = vst.msk [vmem:[#allocation3 + $0x200] sm:$0xff] %vm2179, 0.0
      %3179 = vst.msk [vmem:[#allocation3 + $0x208] sm:$0xff] %vm2179, 0.0
      %3180 = vst.msk [vmem:[#allocation3 + $0x210] sm:$0xff] %vm2179, 0.0
      %3181 = vst.msk [vmem:[#allocation3 + $0x218] sm:$0xff] %vm2179, 0.0
      %3182 = vst.msk [vmem:[#allocation3 + $0x220] sm:$0xff] %vm2179, 0.0
      %3183 = vst.msk [vmem:[#allocation3 + $0x228] sm:$0xff] %vm2179, 0.0
      %3184 = vst.msk [vmem:[#allocation3 + $0x230] sm:$0xff] %vm2179, 0.0
      %3185 = vst.msk [vmem:[#allocation3 + $0x238] sm:$0xff] %vm2179, 0.0
      %s3186 = scalar_lea.vmem [#allocation3], 32
      %3187 = vst.msk [vmem:[%s3186 + $0x8] sm:$0xff] %vm2179, %v3082
      %3188 = vst.msk [vmem:[%s3186 + $0x10] sm:$0xff] %vm2179, %v3083
      %3189 = vst.msk [vmem:[%s3186 + $0x28] sm:$0xff] %vm2179, %v3084
      %3190 = vst.msk [vmem:[%s3186 + $0x30] sm:$0xff] %vm2179, %v3085
      %3191 = vst.msk [vmem:[%s3186 + $0x48] sm:$0xff] %vm2179, %v3086
      %3192 = vst.msk [vmem:[%s3186 + $0x50] sm:$0xff] %vm2179, %v3087
      %3193 = vst.msk [vmem:[%s3186 + $0x68] sm:$0xff] %vm2179, %v3088
      %3194 = vst.msk [vmem:[%s3186 + $0x70] sm:$0xff] %vm2179, %v3089
      %3195 = vst.msk [vmem:[%s3186 + $0x88] sm:$0xff] %vm2179, %v3090
      %3196 = vst.msk [vmem:[%s3186 + $0x90] sm:$0xff] %vm2179, %v3091
      %3197 = vst.msk [vmem:[%s3186 + $0xa8] sm:$0xff] %vm2179, %v3092
      %3198 = vst.msk [vmem:[%s3186 + $0xb0] sm:$0xff] %vm2179, %v3093
      %3199 = vst.msk [vmem:[%s3186 + $0xc8] sm:$0xff] %vm2179, %v3094
      %3200 = vst.msk [vmem:[%s3186 + $0xd0] sm:$0xff] %vm2179, %v3095
      %3201 = vst.msk [vmem:[%s3186 + $0xe8] sm:$0xff] %vm2179, %v3096
      %3202 = vst.msk [vmem:[%s3186 + $0xf0] sm:$0xff] %vm2179, %v3097
      %3203 = vst.msk [vmem:[%s3186 + $0x108] sm:$0xff] %vm2179, %v3098
      %3204 = vst.msk [vmem:[%s3186 + $0x110] sm:$0xff] %vm2179, %v3099
      %3205 = vst.msk [vmem:[%s3186 + $0x128] sm:$0xff] %vm2179, %v3100
      %3206 = vst.msk [vmem:[%s3186 + $0x130] sm:$0xff] %vm2179, %v3101
      %3207 = vst.msk [vmem:[%s3186 + $0x148] sm:$0xff] %vm2179, %v3102
      %3208 = vst.msk [vmem:[%s3186 + $0x150] sm:$0xff] %vm2179, %v3103
      %3209 = vst.msk [vmem:[%s3186 + $0x168] sm:$0xff] %vm2179, %v3104
      %3210 = vst.msk [vmem:[%s3186 + $0x170] sm:$0xff] %vm2179, %v3105
      %3211 = vst.msk [vmem:[%s3186 + $0x188] sm:$0xff] %vm2179, %v3106
      %3212 = vst.msk [vmem:[%s3186 + $0x190] sm:$0xff] %vm2179, %v3107
      %3213 = vst.msk [vmem:[%s3186 + $0x1a8] sm:$0xff] %vm2179, %v3108
      %3214 = vst.msk [vmem:[%s3186 + $0x1b0] sm:$0xff] %vm2179, %v3109
      %3215 = vst.msk [vmem:[%s3186 + $0x1c8] sm:$0xff] %vm2179, %v3110
      %3216 = vst.msk [vmem:[%s3186 + $0x1d0] sm:$0xff] %vm2179, %v3111
      %3217 = vst.msk [vmem:[%s3186 + $0x1e8] sm:$0xff] %vm2179, %v3112
      %3218 = vst.msk [vmem:[%s3186 + $0x1f0] sm:$0xff] %vm2179, %v3113
      %v3219 = vld [vmem:[#allocation3] sm:$0xff]
      %v3220 = vld [vmem:[#allocation3 + $0x8] sm:$0xff]
      %v3221 = vld [vmem:[#allocation3 + $0x10] sm:$0xff]
      %v3222 = vld [vmem:[#allocation3 + $0x18] sm:$0xff]
      %v3223 = vld [vmem:[#allocation3 + $0x20] sm:$0xff]
      %v3224 = vld [vmem:[#allocation3 + $0x28] sm:$0xff]
      %v3225 = vld [vmem:[#allocation3 + $0x30] sm:$0xff]
      %v3226 = vld [vmem:[#allocation3 + $0x38] sm:$0xff]
      %v3227 = vld [vmem:[#allocation3 + $0x40] sm:$0xff]
      %v3228 = vld [vmem:[#allocation3 + $0x48] sm:$0xff]
      %v3229 = vld [vmem:[#allocation3 + $0x50] sm:$0xff]
      %v3230 = vld [vmem:[#allocation3 + $0x58] sm:$0xff]
      %v3231 = vld [vmem:[#allocation3 + $0x60] sm:$0xff]
      %v3232 = vld [vmem:[#allocation3 + $0x68] sm:$0xff]
      %v3233 = vld [vmem:[#allocation3 + $0x70] sm:$0xff]
      %v3234 = vld [vmem:[#allocation3 + $0x78] sm:$0xff]
      %v3235 = vld [vmem:[#allocation3 + $0x80] sm:$0xff]
      %v3236 = vld [vmem:[#allocation3 + $0x88] sm:$0xff]
      %v3237 = vld [vmem:[#allocation3 + $0x90] sm:$0xff]
      %v3238 = vld [vmem:[#allocation3 + $0x98] sm:$0xff]
      %v3239 = vld [vmem:[#allocation3 + $0xa0] sm:$0xff]
      %v3240 = vld [vmem:[#allocation3 + $0xa8] sm:$0xff]
      %v3241 = vld [vmem:[#allocation3 + $0xb0] sm:$0xff]
      %v3242 = vld [vmem:[#allocation3 + $0xb8] sm:$0xff]
      %v3243 = vld [vmem:[#allocation3 + $0xc0] sm:$0xff]
      %v3244 = vld [vmem:[#allocation3 + $0xc8] sm:$0xff]
      %v3245 = vld [vmem:[#allocation3 + $0xd0] sm:$0xff]
      %v3246 = vld [vmem:[#allocation3 + $0xd8] sm:$0xff]
      %v3247 = vld [vmem:[#allocation3 + $0xe0] sm:$0xff]
      %v3248 = vld [vmem:[#allocation3 + $0xe8] sm:$0xff]
      %v3249 = vld [vmem:[#allocation3 + $0xf0] sm:$0xff]
      %v3250 = vld [vmem:[#allocation3 + $0xf8] sm:$0xff]
      %v3251 = vld [vmem:[#allocation3 + $0x100] sm:$0xff]
      %v3252 = vld [vmem:[#allocation3 + $0x108] sm:$0xff]
      %v3253 = vld [vmem:[#allocation3 + $0x110] sm:$0xff]
      %v3254 = vld [vmem:[#allocation3 + $0x118] sm:$0xff]
      %v3255 = vld [vmem:[#allocation3 + $0x120] sm:$0xff]
      %v3256 = vld [vmem:[#allocation3 + $0x128] sm:$0xff]
      %v3257 = vld [vmem:[#allocation3 + $0x130] sm:$0xff]
      %v3258 = vld [vmem:[#allocation3 + $0x138] sm:$0xff]
      %v3259 = vld [vmem:[#allocation3 + $0x140] sm:$0xff]
      %v3260 = vld [vmem:[#allocation3 + $0x148] sm:$0xff]
      %v3261 = vld [vmem:[#allocation3 + $0x150] sm:$0xff]
      %v3262 = vld [vmem:[#allocation3 + $0x158] sm:$0xff]
      %v3263 = vld [vmem:[#allocation3 + $0x160] sm:$0xff]
      %v3264 = vld [vmem:[#allocation3 + $0x168] sm:$0xff]
      %v3265 = vld [vmem:[#allocation3 + $0x170] sm:$0xff]
      %v3266 = vld [vmem:[#allocation3 + $0x178] sm:$0xff]
      %v3267 = vld [vmem:[#allocation3 + $0x180] sm:$0xff]
      %v3268 = vld [vmem:[#allocation3 + $0x188] sm:$0xff]
      %v3269 = vld [vmem:[#allocation3 + $0x190] sm:$0xff]
      %v3270 = vld [vmem:[#allocation3 + $0x198] sm:$0xff]
      %v3271 = vld [vmem:[#allocation3 + $0x1a0] sm:$0xff]
      %v3272 = vld [vmem:[#allocation3 + $0x1a8] sm:$0xff]
      %v3273 = vld [vmem:[#allocation3 + $0x1b0] sm:$0xff]
      %v3274 = vld [vmem:[#allocation3 + $0x1b8] sm:$0xff]
      %v3275 = vld [vmem:[#allocation3 + $0x1c0] sm:$0xff]
      %v3276 = vld [vmem:[#allocation3 + $0x1c8] sm:$0xff]
      %v3277 = vld [vmem:[#allocation3 + $0x1d0] sm:$0xff]
      %v3278 = vld [vmem:[#allocation3 + $0x1d8] sm:$0xff]
      %v3279 = vld [vmem:[#allocation3 + $0x1e0] sm:$0xff]
      %v3280 = vld [vmem:[#allocation3 + $0x1e8] sm:$0xff]
      %v3281 = vld [vmem:[#allocation3 + $0x1f0] sm:$0xff]
      %v3282 = vld [vmem:[#allocation3 + $0x1f8] sm:$0xff]
      %v3283 = vld [vmem:[#allocation3 + $0x200] sm:$0xff]
      %v3284 = vld [vmem:[#allocation3 + $0x208] sm:$0xff]
      %v3285 = vld [vmem:[#allocation3 + $0x210] sm:$0xff]
      %v3286 = vld [vmem:[#allocation3 + $0x218] sm:$0xff]
      %v3287 = vld [vmem:[#allocation3 + $0x220] sm:$0xff]
      %v3288 = vld [vmem:[#allocation3 + $0x228] sm:$0xff]
      %v3289 = vld [vmem:[#allocation3 + $0x230] sm:$0xff]
      %v3290 = vld [vmem:[#allocation3 + $0x238] sm:$0xff]
      %v3323 = vrot.slane %v3220, 1
      %v3324 = vrot.slane %v3221, 1
      %v3325 = vsel %vm794, %v3323, %v3324
      %v3326 = vrot.slane %v3224, 1
      %v3327 = vrot.slane %v3225, 1
      %v3328 = vsel %vm794, %v3326, %v3327
      %v3329 = vrot.slane %v3228, 1
      %v3330 = vrot.slane %v3229, 1
      %v3331 = vsel %vm794, %v3329, %v3330
      %v3332 = vrot.slane %v3232, 1
      %v3333 = vrot.slane %v3233, 1
      %v3334 = vsel %vm794, %v3332, %v3333
      %v3335 = vrot.slane %v3236, 1
      %v3336 = vrot.slane %v3237, 1
      %v3337 = vsel %vm794, %v3335, %v3336
      %v3338 = vrot.slane %v3240, 1
      %v3339 = vrot.slane %v3241, 1
      %v3340 = vsel %vm794, %v3338, %v3339
      %v3341 = vrot.slane %v3244, 1
      %v3342 = vrot.slane %v3245, 1
      %v3343 = vsel %vm794, %v3341, %v3342
      %v3344 = vrot.slane %v3248, 1
      %v3345 = vrot.slane %v3249, 1
      %v3346 = vsel %vm794, %v3344, %v3345
      %v3347 = vrot.slane %v3252, 1
      %v3348 = vrot.slane %v3253, 1
      %v3349 = vsel %vm794, %v3347, %v3348
      %v3350 = vrot.slane %v3256, 1
      %v3351 = vrot.slane %v3257, 1
      %v3352 = vsel %vm794, %v3350, %v3351
      %v3353 = vrot.slane %v3260, 1
      %v3354 = vrot.slane %v3261, 1
      %v3355 = vsel %vm794, %v3353, %v3354
      %v3356 = vrot.slane %v3264, 1
      %v3357 = vrot.slane %v3265, 1
      %v3358 = vsel %vm794, %v3356, %v3357
      %v3359 = vrot.slane %v3268, 1
      %v3360 = vrot.slane %v3269, 1
      %v3361 = vsel %vm794, %v3359, %v3360
      %v3362 = vrot.slane %v3272, 1
      %v3363 = vrot.slane %v3273, 1
      %v3364 = vsel %vm794, %v3362, %v3363
      %v3365 = vrot.slane %v3276, 1
      %v3366 = vrot.slane %v3277, 1
      %v3367 = vsel %vm794, %v3365, %v3366
      %v3368 = vrot.slane %v3280, 1
      %v3369 = vrot.slane %v3281, 1
      %v3370 = vsel %vm794, %v3368, %v3369
      %3371 = vrot.lane.b32.xlu0 %v3323, 8
      %v3372 = vpop.permute.xlu0 %3371
      %3373 = vrot.lane.b32.xlu0 %v3325, 8
      %v3374 = vpop.permute.xlu0 %3373
      %3375 = vrot.lane.b32.xlu0 %v3324, 8
      %v3376 = vpop.permute.xlu0 %3375
      %3377 = vrot.lane.b32.xlu0 %v3326, 8
      %v3378 = vpop.permute.xlu0 %3377
      %3379 = vrot.lane.b32.xlu0 %v3328, 8
      %v3380 = vpop.permute.xlu0 %3379
      %3381 = vrot.lane.b32.xlu0 %v3327, 8
      %v3382 = vpop.permute.xlu0 %3381
      %3383 = vrot.lane.b32.xlu0 %v3329, 8
      %v3384 = vpop.permute.xlu0 %3383
      %3385 = vrot.lane.b32.xlu0 %v3331, 8
      %v3386 = vpop.permute.xlu0 %3385
      %3387 = vrot.lane.b32.xlu0 %v3330, 8
      %v3388 = vpop.permute.xlu0 %3387
      %3389 = vrot.lane.b32.xlu0 %v3332, 8
      %v3390 = vpop.permute.xlu0 %3389
      %3391 = vrot.lane.b32.xlu0 %v3334, 8
      %v3392 = vpop.permute.xlu0 %3391
      %3393 = vrot.lane.b32.xlu0 %v3333, 8
      %v3394 = vpop.permute.xlu0 %3393
      %3395 = vrot.lane.b32.xlu0 %v3335, 8
      %v3396 = vpop.permute.xlu0 %3395
      %3397 = vrot.lane.b32.xlu0 %v3337, 8
      %v3398 = vpop.permute.xlu0 %3397
      %3399 = vrot.lane.b32.xlu0 %v3336, 8
      %v3400 = vpop.permute.xlu0 %3399
      %3401 = vrot.lane.b32.xlu0 %v3338, 8
      %v3402 = vpop.permute.xlu0 %3401
      %3403 = vrot.lane.b32.xlu0 %v3340, 8
      %v3404 = vpop.permute.xlu0 %3403
      %3405 = vrot.lane.b32.xlu0 %v3339, 8
      %v3406 = vpop.permute.xlu0 %3405
      %3407 = vrot.lane.b32.xlu0 %v3341, 8
      %v3408 = vpop.permute.xlu0 %3407
      %3409 = vrot.lane.b32.xlu0 %v3343, 8
      %v3410 = vpop.permute.xlu0 %3409
      %3411 = vrot.lane.b32.xlu0 %v3342, 8
      %v3412 = vpop.permute.xlu0 %3411
      %3413 = vrot.lane.b32.xlu0 %v3344, 8
      %v3414 = vpop.permute.xlu0 %3413
      %3415 = vrot.lane.b32.xlu0 %v3346, 8
      %v3416 = vpop.permute.xlu0 %3415
      %3417 = vrot.lane.b32.xlu0 %v3345, 8
      %v3418 = vpop.permute.xlu0 %3417
      %3419 = vrot.lane.b32.xlu0 %v3347, 8
      %v3420 = vpop.permute.xlu0 %3419
      %3421 = vrot.lane.b32.xlu0 %v3349, 8
      %v3422 = vpop.permute.xlu0 %3421
      %3423 = vrot.lane.b32.xlu0 %v3348, 8
      %v3424 = vpop.permute.xlu0 %3423
      %3425 = vrot.lane.b32.xlu0 %v3350, 8
      %v3426 = vpop.permute.xlu0 %3425
      %3427 = vrot.lane.b32.xlu0 %v3352, 8
      %v3428 = vpop.permute.xlu0 %3427
      %3429 = vrot.lane.b32.xlu0 %v3351, 8
      %v3430 = vpop.permute.xlu0 %3429
      %3431 = vrot.lane.b32.xlu0 %v3353, 8
      %v3432 = vpop.permute.xlu0 %3431
      %3433 = vrot.lane.b32.xlu0 %v3355, 8
      %v3434 = vpop.permute.xlu0 %3433
      %3435 = vrot.lane.b32.xlu0 %v3354, 8
      %v3436 = vpop.permute.xlu0 %3435
      %3437 = vrot.lane.b32.xlu0 %v3356, 8
      %v3438 = vpop.permute.xlu0 %3437
      %3439 = vrot.lane.b32.xlu0 %v3358, 8
      %v3440 = vpop.permute.xlu0 %3439
      %3441 = vrot.lane.b32.xlu0 %v3357, 8
      %v3442 = vpop.permute.xlu0 %3441
      %3443 = vrot.lane.b32.xlu0 %v3359, 8
      %v3444 = vpop.permute.xlu0 %3443
      %3445 = vrot.lane.b32.xlu0 %v3361, 8
      %v3446 = vpop.permute.xlu0 %3445
      %3447 = vrot.lane.b32.xlu0 %v3360, 8
      %v3448 = vpop.permute.xlu0 %3447
      %3449 = vrot.lane.b32.xlu0 %v3362, 8
      %v3450 = vpop.permute.xlu0 %3449
      %3451 = vrot.lane.b32.xlu0 %v3364, 8
      %v3452 = vpop.permute.xlu0 %3451
      %3453 = vrot.lane.b32.xlu0 %v3363, 8
      %v3454 = vpop.permute.xlu0 %3453
      %3455 = vrot.lane.b32.xlu0 %v3365, 8
      %v3456 = vpop.permute.xlu0 %3455
      %3457 = vrot.lane.b32.xlu0 %v3367, 8
      %v3458 = vpop.permute.xlu0 %3457
      %3459 = vrot.lane.b32.xlu0 %v3366, 8
      %v3460 = vpop.permute.xlu0 %3459
      %3461 = vrot.lane.b32.xlu0 %v3368, 8
      %v3462 = vpop.permute.xlu0 %3461
      %3463 = vrot.lane.b32.xlu0 %v3370, 8
      %v3464 = vpop.permute.xlu0 %3463
      %3465 = vrot.lane.b32.xlu0 %v3369, 8
      %v3466 = vpop.permute.xlu0 %3465
      %v3531 = vrot.slane %v3220, 2
      %v3532 = vrot.slane %v3221, 2
      %v3533 = vsel %vm1003, %v3531, %v3532
      %v3534 = vrot.slane %v3222, 2
      %v3535 = vsel %vm1003, %v3532, %v3534
      %v3536 = vrot.slane %v3224, 2
      %v3537 = vrot.slane %v3225, 2
      %v3538 = vsel %vm1003, %v3536, %v3537
      %v3539 = vrot.slane %v3226, 2
      %v3540 = vsel %vm1003, %v3537, %v3539
      %v3541 = vrot.slane %v3228, 2
      %v3542 = vrot.slane %v3229, 2
      %v3543 = vsel %vm1003, %v3541, %v3542
      %v3544 = vrot.slane %v3230, 2
      %v3545 = vsel %vm1003, %v3542, %v3544
      %v3546 = vrot.slane %v3232, 2
      %v3547 = vrot.slane %v3233, 2
      %v3548 = vsel %vm1003, %v3546, %v3547
      %v3549 = vrot.slane %v3234, 2
      %v3550 = vsel %vm1003, %v3547, %v3549
      %v3551 = vrot.slane %v3236, 2
      %v3552 = vrot.slane %v3237, 2
      %v3553 = vsel %vm1003, %v3551, %v3552
      %v3554 = vrot.slane %v3238, 2
      %v3555 = vsel %vm1003, %v3552, %v3554
      %v3556 = vrot.slane %v3240, 2
      %v3557 = vrot.slane %v3241, 2
      %v3558 = vsel %vm1003, %v3556, %v3557
      %v3559 = vrot.slane %v3242, 2
      %v3560 = vsel %vm1003, %v3557, %v3559
      %v3561 = vrot.slane %v3244, 2
      %v3562 = vrot.slane %v3245, 2
      %v3563 = vsel %vm1003, %v3561, %v3562
      %v3564 = vrot.slane %v3246, 2
      %v3565 = vsel %vm1003, %v3562, %v3564
      %v3566 = vrot.slane %v3248, 2
      %v3567 = vrot.slane %v3249, 2
      %v3568 = vsel %vm1003, %v3566, %v3567
      %v3569 = vrot.slane %v3250, 2
      %v3570 = vsel %vm1003, %v3567, %v3569
      %v3571 = vrot.slane %v3252, 2
      %v3572 = vrot.slane %v3253, 2
      %v3573 = vsel %vm1003, %v3571, %v3572
      %v3574 = vrot.slane %v3254, 2
      %v3575 = vsel %vm1003, %v3572, %v3574
      %v3576 = vrot.slane %v3256, 2
      %v3577 = vrot.slane %v3257, 2
      %v3578 = vsel %vm1003, %v3576, %v3577
      %v3579 = vrot.slane %v3258, 2
      %v3580 = vsel %vm1003, %v3577, %v3579
      %v3581 = vrot.slane %v3260, 2
      %v3582 = vrot.slane %v3261, 2
      %v3583 = vsel %vm1003, %v3581, %v3582
      %v3584 = vrot.slane %v3262, 2
      %v3585 = vsel %vm1003, %v3582, %v3584
      %v3586 = vrot.slane %v3264, 2
      %v3587 = vrot.slane %v3265, 2
      %v3588 = vsel %vm1003, %v3586, %v3587
      %v3589 = vrot.slane %v3266, 2
      %v3590 = vsel %vm1003, %v3587, %v3589
      %v3591 = vrot.slane %v3268, 2
      %v3592 = vrot.slane %v3269, 2
      %v3593 = vsel %vm1003, %v3591, %v3592
      %v3594 = vrot.slane %v3270, 2
      %v3595 = vsel %vm1003, %v3592, %v3594
      %v3596 = vrot.slane %v3272, 2
      %v3597 = vrot.slane %v3273, 2
      %v3598 = vsel %vm1003, %v3596, %v3597
      %v3599 = vrot.slane %v3274, 2
      %v3600 = vsel %vm1003, %v3597, %v3599
      %v3601 = vrot.slane %v3276, 2
      %v3602 = vrot.slane %v3277, 2
      %v3603 = vsel %vm1003, %v3601, %v3602
      %v3604 = vrot.slane %v3278, 2
      %v3605 = vsel %vm1003, %v3602, %v3604
      %v3606 = vrot.slane %v3280, 2
      %v3607 = vrot.slane %v3281, 2
      %v3608 = vsel %vm1003, %v3606, %v3607
      %v3609 = vrot.slane %v3282, 2
      %v3610 = vsel %vm1003, %v3607, %v3609
      %3611 = vrot.lane.b32.xlu0 %v3531, 16
      %v3612 = vpop.permute.xlu0 %3611
      %3613 = vrot.lane.b32.xlu0 %v3533, 16
      %v3614 = vpop.permute.xlu0 %3613
      %3615 = vrot.lane.b32.xlu0 %v3535, 16
      %v3616 = vpop.permute.xlu0 %3615
      %3617 = vrot.lane.b32.xlu0 %v3536, 16
      %v3618 = vpop.permute.xlu0 %3617
      %3619 = vrot.lane.b32.xlu0 %v3538, 16
      %v3620 = vpop.permute.xlu0 %3619
      %3621 = vrot.lane.b32.xlu0 %v3540, 16
      %v3622 = vpop.permute.xlu0 %3621
      %3623 = vrot.lane.b32.xlu0 %v3541, 16
      %v3624 = vpop.permute.xlu0 %3623
      %3625 = vrot.lane.b32.xlu0 %v3543, 16
      %v3626 = vpop.permute.xlu0 %3625
      %3627 = vrot.lane.b32.xlu0 %v3545, 16
      %v3628 = vpop.permute.xlu0 %3627
      %3629 = vrot.lane.b32.xlu0 %v3546, 16
      %v3630 = vpop.permute.xlu0 %3629
      %3631 = vrot.lane.b32.xlu0 %v3548, 16
      %v3632 = vpop.permute.xlu0 %3631
      %3633 = vrot.lane.b32.xlu0 %v3550, 16
      %v3634 = vpop.permute.xlu0 %3633
      %3635 = vrot.lane.b32.xlu0 %v3551, 16
      %v3636 = vpop.permute.xlu0 %3635
      %3637 = vrot.lane.b32.xlu0 %v3553, 16
      %v3638 = vpop.permute.xlu0 %3637
      %3639 = vrot.lane.b32.xlu0 %v3555, 16
      %v3640 = vpop.permute.xlu0 %3639
      %3641 = vrot.lane.b32.xlu0 %v3556, 16
      %v3642 = vpop.permute.xlu0 %3641
      %3643 = vrot.lane.b32.xlu0 %v3558, 16
      %v3644 = vpop.permute.xlu0 %3643
      %3645 = vrot.lane.b32.xlu0 %v3560, 16
      %v3646 = vpop.permute.xlu0 %3645
      %3647 = vrot.lane.b32.xlu0 %v3561, 16
      %v3648 = vpop.permute.xlu0 %3647
      %3649 = vrot.lane.b32.xlu0 %v3563, 16
      %v3650 = vpop.permute.xlu0 %3649
      %3651 = vrot.lane.b32.xlu0 %v3565, 16
      %v3652 = vpop.permute.xlu0 %3651
      %3653 = vrot.lane.b32.xlu0 %v3566, 16
      %v3654 = vpop.permute.xlu0 %3653
      %3655 = vrot.lane.b32.xlu0 %v3568, 16
      %v3656 = vpop.permute.xlu0 %3655
      %3657 = vrot.lane.b32.xlu0 %v3570, 16
      %v3658 = vpop.permute.xlu0 %3657
      %3659 = vrot.lane.b32.xlu0 %v3571, 16
      %v3660 = vpop.permute.xlu0 %3659
      %3661 = vrot.lane.b32.xlu0 %v3573, 16
      %v3662 = vpop.permute.xlu0 %3661
      %3663 = vrot.lane.b32.xlu0 %v3575, 16
      %v3664 = vpop.permute.xlu0 %3663
      %3665 = vrot.lane.b32.xlu0 %v3576, 16
      %v3666 = vpop.permute.xlu0 %3665
      %3667 = vrot.lane.b32.xlu0 %v3578, 16
      %v3668 = vpop.permute.xlu0 %3667
      %3669 = vrot.lane.b32.xlu0 %v3580, 16
      %v3670 = vpop.permute.xlu0 %3669
      %3671 = vrot.lane.b32.xlu0 %v3581, 16
      %v3672 = vpop.permute.xlu0 %3671
      %3673 = vrot.lane.b32.xlu0 %v3583, 16
      %v3674 = vpop.permute.xlu0 %3673
      %3675 = vrot.lane.b32.xlu0 %v3585, 16
      %v3676 = vpop.permute.xlu0 %3675
      %3677 = vrot.lane.b32.xlu0 %v3586, 16
      %v3678 = vpop.permute.xlu0 %3677
      %3679 = vrot.lane.b32.xlu0 %v3588, 16
      %v3680 = vpop.permute.xlu0 %3679
      %3681 = vrot.lane.b32.xlu0 %v3590, 16
      %v3682 = vpop.permute.xlu0 %3681
      %3683 = vrot.lane.b32.xlu0 %v3591, 16
      %v3684 = vpop.permute.xlu0 %3683
      %3685 = vrot.lane.b32.xlu0 %v3593, 16
      %v3686 = vpop.permute.xlu0 %3685
      %3687 = vrot.lane.b32.xlu0 %v3595, 16
      %v3688 = vpop.permute.xlu0 %3687
      %3689 = vrot.lane.b32.xlu0 %v3596, 16
      %v3690 = vpop.permute.xlu0 %3689
      %3691 = vrot.lane.b32.xlu0 %v3598, 16
      %v3692 = vpop.permute.xlu0 %3691
      %3693 = vrot.lane.b32.xlu0 %v3600, 16
      %v3694 = vpop.permute.xlu0 %3693
      %3695 = vrot.lane.b32.xlu0 %v3601, 16
      %v3696 = vpop.permute.xlu0 %3695
      %3697 = vrot.lane.b32.xlu0 %v3603, 16
      %v3698 = vpop.permute.xlu0 %3697
      %3699 = vrot.lane.b32.xlu0 %v3605, 16
      %v3700 = vpop.permute.xlu0 %3699
      %3701 = vrot.lane.b32.xlu0 %v3606, 16
      %v3702 = vpop.permute.xlu0 %3701
      %3703 = vrot.lane.b32.xlu0 %v3608, 16
      %v3704 = vpop.permute.xlu0 %3703
      %3705 = vrot.lane.b32.xlu0 %v3610, 16
      %v3706 = vpop.permute.xlu0 %3705
      %3773 = vrot.lane.b32.xlu0 %v3223, 24
      %v3774 = vpop.permute.xlu0 %3773
      %3775 = vrot.lane.b32.xlu0 %v3224, 24
      %v3776 = vpop.permute.xlu0 %3775
      %3777 = vrot.lane.b32.xlu0 %v3225, 24
      %v3778 = vpop.permute.xlu0 %3777
      %3779 = vrot.lane.b32.xlu0 %v3227, 24
      %v3780 = vpop.permute.xlu0 %3779
      %3781 = vrot.lane.b32.xlu0 %v3228, 24
      %v3782 = vpop.permute.xlu0 %3781
      %3783 = vrot.lane.b32.xlu0 %v3229, 24
      %v3784 = vpop.permute.xlu0 %3783
      %3785 = vrot.lane.b32.xlu0 %v3231, 24
      %v3786 = vpop.permute.xlu0 %3785
      %3787 = vrot.lane.b32.xlu0 %v3232, 24
      %v3788 = vpop.permute.xlu0 %3787
      %3789 = vrot.lane.b32.xlu0 %v3233, 24
      %v3790 = vpop.permute.xlu0 %3789
      %3791 = vrot.lane.b32.xlu0 %v3235, 24
      %v3792 = vpop.permute.xlu0 %3791
      %3793 = vrot.lane.b32.xlu0 %v3236, 24
      %v3794 = vpop.permute.xlu0 %3793
      %3795 = vrot.lane.b32.xlu0 %v3237, 24
      %v3796 = vpop.permute.xlu0 %3795
      %3797 = vrot.lane.b32.xlu0 %v3239, 24
      %v3798 = vpop.permute.xlu0 %3797
      %3799 = vrot.lane.b32.xlu0 %v3240, 24
      %v3800 = vpop.permute.xlu0 %3799
      %3801 = vrot.lane.b32.xlu0 %v3241, 24
      %v3802 = vpop.permute.xlu0 %3801
      %3803 = vrot.lane.b32.xlu0 %v3243, 24
      %v3804 = vpop.permute.xlu0 %3803
      %3805 = vrot.lane.b32.xlu0 %v3244, 24
      %v3806 = vpop.permute.xlu0 %3805
      %3807 = vrot.lane.b32.xlu0 %v3245, 24
      %v3808 = vpop.permute.xlu0 %3807
      %3809 = vrot.lane.b32.xlu0 %v3247, 24
      %v3810 = vpop.permute.xlu0 %3809
      %3811 = vrot.lane.b32.xlu0 %v3248, 24
      %v3812 = vpop.permute.xlu0 %3811
      %3813 = vrot.lane.b32.xlu0 %v3249, 24
      %v3814 = vpop.permute.xlu0 %3813
      %3815 = vrot.lane.b32.xlu0 %v3251, 24
      %v3816 = vpop.permute.xlu0 %3815
      %3817 = vrot.lane.b32.xlu0 %v3252, 24
      %v3818 = vpop.permute.xlu0 %3817
      %3819 = vrot.lane.b32.xlu0 %v3253, 24
      %v3820 = vpop.permute.xlu0 %3819
      %3821 = vrot.lane.b32.xlu0 %v3255, 24
      %v3822 = vpop.permute.xlu0 %3821
      %3823 = vrot.lane.b32.xlu0 %v3256, 24
      %v3824 = vpop.permute.xlu0 %3823
      %3825 = vrot.lane.b32.xlu0 %v3257, 24
      %v3826 = vpop.permute.xlu0 %3825
      %3827 = vrot.lane.b32.xlu0 %v3259, 24
      %v3828 = vpop.permute.xlu0 %3827
      %3829 = vrot.lane.b32.xlu0 %v3260, 24
      %v3830 = vpop.permute.xlu0 %3829
      %3831 = vrot.lane.b32.xlu0 %v3261, 24
      %v3832 = vpop.permute.xlu0 %3831
      %3833 = vrot.lane.b32.xlu0 %v3263, 24
      %v3834 = vpop.permute.xlu0 %3833
      %3835 = vrot.lane.b32.xlu0 %v3264, 24
      %v3836 = vpop.permute.xlu0 %3835
      %3837 = vrot.lane.b32.xlu0 %v3265, 24
      %v3838 = vpop.permute.xlu0 %3837
      %3839 = vrot.lane.b32.xlu0 %v3267, 24
      %v3840 = vpop.permute.xlu0 %3839
      %3841 = vrot.lane.b32.xlu0 %v3268, 24
      %v3842 = vpop.permute.xlu0 %3841
      %3843 = vrot.lane.b32.xlu0 %v3269, 24
      %v3844 = vpop.permute.xlu0 %3843
      %3845 = vrot.lane.b32.xlu0 %v3271, 24
      %v3846 = vpop.permute.xlu0 %3845
      %3847 = vrot.lane.b32.xlu0 %v3272, 24
      %v3848 = vpop.permute.xlu0 %3847
      %3849 = vrot.lane.b32.xlu0 %v3273, 24
      %v3850 = vpop.permute.xlu0 %3849
      %3851 = vrot.lane.b32.xlu0 %v3275, 24
      %v3852 = vpop.permute.xlu0 %3851
      %3853 = vrot.lane.b32.xlu0 %v3276, 24
      %v3854 = vpop.permute.xlu0 %3853
      %3855 = vrot.lane.b32.xlu0 %v3277, 24
      %v3856 = vpop.permute.xlu0 %3855
      %3857 = vrot.lane.b32.xlu0 %v3279, 24
      %v3858 = vpop.permute.xlu0 %3857
      %3859 = vrot.lane.b32.xlu0 %v3280, 24
      %v3860 = vpop.permute.xlu0 %3859
      %3861 = vrot.lane.b32.xlu0 %v3281, 24
      %v3862 = vpop.permute.xlu0 %3861
      %3863 = vrot.lane.b32.xlu0 %v3283, 24
      %v3864 = vpop.permute.xlu0 %3863
      %3865 = vrot.lane.b32.xlu0 %v3284, 24
      %v3866 = vpop.permute.xlu0 %3865
      %3867 = vrot.lane.b32.xlu0 %v3285, 24
      %v3868 = vpop.permute.xlu0 %3867
      %v3917 = vrot.slane %v3284, 1
      %v3918 = vrot.slane %v3285, 1
      %v3919 = vsel %vm794, %v3917, %v3918
      %3920 = vrot.lane.b32.xlu0 %v3326, 32
      %v3921 = vpop.permute.xlu0 %3920
      %3922 = vrot.lane.b32.xlu0 %v3328, 32
      %v3923 = vpop.permute.xlu0 %3922
      %3924 = vrot.lane.b32.xlu0 %v3327, 32
      %v3925 = vpop.permute.xlu0 %3924
      %3926 = vrot.lane.b32.xlu0 %v3329, 32
      %v3927 = vpop.permute.xlu0 %3926
      %3928 = vrot.lane.b32.xlu0 %v3331, 32
      %v3929 = vpop.permute.xlu0 %3928
      %3930 = vrot.lane.b32.xlu0 %v3330, 32
      %v3931 = vpop.permute.xlu0 %3930
      %3932 = vrot.lane.b32.xlu0 %v3332, 32
      %v3933 = vpop.permute.xlu0 %3932
      %3934 = vrot.lane.b32.xlu0 %v3334, 32
      %v3935 = vpop.permute.xlu0 %3934
      %3936 = vrot.lane.b32.xlu0 %v3333, 32
      %v3937 = vpop.permute.xlu0 %3936
      %3938 = vrot.lane.b32.xlu0 %v3335, 32
      %v3939 = vpop.permute.xlu0 %3938
      %3940 = vrot.lane.b32.xlu0 %v3337, 32
      %v3941 = vpop.permute.xlu0 %3940
      %3942 = vrot.lane.b32.xlu0 %v3336, 32
      %v3943 = vpop.permute.xlu0 %3942
      %3944 = vrot.lane.b32.xlu0 %v3338, 32
      %v3945 = vpop.permute.xlu0 %3944
      %3946 = vrot.lane.b32.xlu0 %v3340, 32
      %v3947 = vpop.permute.xlu0 %3946
      %3948 = vrot.lane.b32.xlu0 %v3339, 32
      %v3949 = vpop.permute.xlu0 %3948
      %3950 = vrot.lane.b32.xlu0 %v3341, 32
      %v3951 = vpop.permute.xlu0 %3950
      %3952 = vrot.lane.b32.xlu0 %v3343, 32
      %v3953 = vpop.permute.xlu0 %3952
      %3954 = vrot.lane.b32.xlu0 %v3342, 32
      %v3955 = vpop.permute.xlu0 %3954
      %3956 = vrot.lane.b32.xlu0 %v3344, 32
      %v3957 = vpop.permute.xlu0 %3956
      %3958 = vrot.lane.b32.xlu0 %v3346, 32
      %v3959 = vpop.permute.xlu0 %3958
      %3960 = vrot.lane.b32.xlu0 %v3345, 32
      %v3961 = vpop.permute.xlu0 %3960
      %3962 = vrot.lane.b32.xlu0 %v3347, 32
      %v3963 = vpop.permute.xlu0 %3962
      %3964 = vrot.lane.b32.xlu0 %v3349, 32
      %v3965 = vpop.permute.xlu0 %3964
      %3966 = vrot.lane.b32.xlu0 %v3348, 32
      %v3967 = vpop.permute.xlu0 %3966
      %3968 = vrot.lane.b32.xlu0 %v3350, 32
      %v3969 = vpop.permute.xlu0 %3968
      %3970 = vrot.lane.b32.xlu0 %v3352, 32
      %v3971 = vpop.permute.xlu0 %3970
      %3972 = vrot.lane.b32.xlu0 %v3351, 32
      %v3973 = vpop.permute.xlu0 %3972
      %3974 = vrot.lane.b32.xlu0 %v3353, 32
      %v3975 = vpop.permute.xlu0 %3974
      %3976 = vrot.lane.b32.xlu0 %v3355, 32
      %v3977 = vpop.permute.xlu0 %3976
      %3978 = vrot.lane.b32.xlu0 %v3354, 32
      %v3979 = vpop.permute.xlu0 %3978
      %3980 = vrot.lane.b32.xlu0 %v3356, 32
      %v3981 = vpop.permute.xlu0 %3980
      %3982 = vrot.lane.b32.xlu0 %v3358, 32
      %v3983 = vpop.permute.xlu0 %3982
      %3984 = vrot.lane.b32.xlu0 %v3357, 32
      %v3985 = vpop.permute.xlu0 %3984
      %3986 = vrot.lane.b32.xlu0 %v3359, 32
      %v3987 = vpop.permute.xlu0 %3986
      %3988 = vrot.lane.b32.xlu0 %v3361, 32
      %v3989 = vpop.permute.xlu0 %3988
      %3990 = vrot.lane.b32.xlu0 %v3360, 32
      %v3991 = vpop.permute.xlu0 %3990
      %3992 = vrot.lane.b32.xlu0 %v3362, 32
      %v3993 = vpop.permute.xlu0 %3992
      %3994 = vrot.lane.b32.xlu0 %v3364, 32
      %v3995 = vpop.permute.xlu0 %3994
      %3996 = vrot.lane.b32.xlu0 %v3363, 32
      %v3997 = vpop.permute.xlu0 %3996
      %3998 = vrot.lane.b32.xlu0 %v3365, 32
      %v3999 = vpop.permute.xlu0 %3998
      %4000 = vrot.lane.b32.xlu0 %v3367, 32
      %v4001 = vpop.permute.xlu0 %4000
      %4002 = vrot.lane.b32.xlu0 %v3366, 32
      %v4003 = vpop.permute.xlu0 %4002
      %4004 = vrot.lane.b32.xlu0 %v3368, 32
      %v4005 = vpop.permute.xlu0 %4004
      %4006 = vrot.lane.b32.xlu0 %v3370, 32
      %v4007 = vpop.permute.xlu0 %4006
      %4008 = vrot.lane.b32.xlu0 %v3369, 32
      %v4009 = vpop.permute.xlu0 %4008
      %4010 = vrot.lane.b32.xlu0 %v3917, 32
      %v4011 = vpop.permute.xlu0 %4010
      %4012 = vrot.lane.b32.xlu0 %v3919, 32
      %v4013 = vpop.permute.xlu0 %4012
      %4014 = vrot.lane.b32.xlu0 %v3918, 32
      %v4015 = vpop.permute.xlu0 %4014
      %v4065 = vrot.slane %v3284, 2
      %v4066 = vrot.slane %v3285, 2
      %v4067 = vsel %vm1003, %v4065, %v4066
      %v4068 = vrot.slane %v3286, 2
      %v4069 = vsel %vm1003, %v4066, %v4068
      %4070 = vrot.lane.b32.xlu0 %v3536, 40
      %v4071 = vpop.permute.xlu0 %4070
      %4072 = vrot.lane.b32.xlu0 %v3538, 40
      %v4073 = vpop.permute.xlu0 %4072
      %4074 = vrot.lane.b32.xlu0 %v3540, 40
      %v4075 = vpop.permute.xlu0 %4074
      %4076 = vrot.lane.b32.xlu0 %v3541, 40
      %v4077 = vpop.permute.xlu0 %4076
      %4078 = vrot.lane.b32.xlu0 %v3543, 40
      %v4079 = vpop.permute.xlu0 %4078
      %4080 = vrot.lane.b32.xlu0 %v3545, 40
      %v4081 = vpop.permute.xlu0 %4080
      %4082 = vrot.lane.b32.xlu0 %v3546, 40
      %v4083 = vpop.permute.xlu0 %4082
      %4084 = vrot.lane.b32.xlu0 %v3548, 40
      %v4085 = vpop.permute.xlu0 %4084
      %4086 = vrot.lane.b32.xlu0 %v3550, 40
      %v4087 = vpop.permute.xlu0 %4086
      %4088 = vrot.lane.b32.xlu0 %v3551, 40
      %v4089 = vpop.permute.xlu0 %4088
      %4090 = vrot.lane.b32.xlu0 %v3553, 40
      %v4091 = vpop.permute.xlu0 %4090
      %4092 = vrot.lane.b32.xlu0 %v3555, 40
      %v4093 = vpop.permute.xlu0 %4092
      %4094 = vrot.lane.b32.xlu0 %v3556, 40
      %v4095 = vpop.permute.xlu0 %4094
      %4096 = vrot.lane.b32.xlu0 %v3558, 40
      %v4097 = vpop.permute.xlu0 %4096
      %4098 = vrot.lane.b32.xlu0 %v3560, 40
      %v4099 = vpop.permute.xlu0 %4098
      %4100 = vrot.lane.b32.xlu0 %v3561, 40
      %v4101 = vpop.permute.xlu0 %4100
      %4102 = vrot.lane.b32.xlu0 %v3563, 40
      %v4103 = vpop.permute.xlu0 %4102
      %4104 = vrot.lane.b32.xlu0 %v3565, 40
      %v4105 = vpop.permute.xlu0 %4104
      %4106 = vrot.lane.b32.xlu0 %v3566, 40
      %v4107 = vpop.permute.xlu0 %4106
      %4108 = vrot.lane.b32.xlu0 %v3568, 40
      %v4109 = vpop.permute.xlu0 %4108
      %4110 = vrot.lane.b32.xlu0 %v3570, 40
      %v4111 = vpop.permute.xlu0 %4110
      %4112 = vrot.lane.b32.xlu0 %v3571, 40
      %v4113 = vpop.permute.xlu0 %4112
      %4114 = vrot.lane.b32.xlu0 %v3573, 40
      %v4115 = vpop.permute.xlu0 %4114
      %4116 = vrot.lane.b32.xlu0 %v3575, 40
      %v4117 = vpop.permute.xlu0 %4116
      %4118 = vrot.lane.b32.xlu0 %v3576, 40
      %v4119 = vpop.permute.xlu0 %4118
      %4120 = vrot.lane.b32.xlu0 %v3578, 40
      %v4121 = vpop.permute.xlu0 %4120
      %4122 = vrot.lane.b32.xlu0 %v3580, 40
      %v4123 = vpop.permute.xlu0 %4122
      %4124 = vrot.lane.b32.xlu0 %v3581, 40
      %v4125 = vpop.permute.xlu0 %4124
      %4126 = vrot.lane.b32.xlu0 %v3583, 40
      %v4127 = vpop.permute.xlu0 %4126
      %4128 = vrot.lane.b32.xlu0 %v3585, 40
      %v4129 = vpop.permute.xlu0 %4128
      %4130 = vrot.lane.b32.xlu0 %v3586, 40
      %v4131 = vpop.permute.xlu0 %4130
      %4132 = vrot.lane.b32.xlu0 %v3588, 40
      %v4133 = vpop.permute.xlu0 %4132
      %4134 = vrot.lane.b32.xlu0 %v3590, 40
      %v4135 = vpop.permute.xlu0 %4134
      %4136 = vrot.lane.b32.xlu0 %v3591, 40
      %v4137 = vpop.permute.xlu0 %4136
      %4138 = vrot.lane.b32.xlu0 %v3593, 40
      %v4139 = vpop.permute.xlu0 %4138
      %4140 = vrot.lane.b32.xlu0 %v3595, 40
      %v4141 = vpop.permute.xlu0 %4140
      %4142 = vrot.lane.b32.xlu0 %v3596, 40
      %v4143 = vpop.permute.xlu0 %4142
      %4144 = vrot.lane.b32.xlu0 %v3598, 40
      %v4145 = vpop.permute.xlu0 %4144
      %4146 = vrot.lane.b32.xlu0 %v3600, 40
      %v4147 = vpop.permute.xlu0 %4146
      %4148 = vrot.lane.b32.xlu0 %v3601, 40
      %v4149 = vpop.permute.xlu0 %4148
      %4150 = vrot.lane.b32.xlu0 %v3603, 40
      %v4151 = vpop.permute.xlu0 %4150
      %4152 = vrot.lane.b32.xlu0 %v3605, 40
      %v4153 = vpop.permute.xlu0 %4152
      %4154 = vrot.lane.b32.xlu0 %v3606, 40
      %v4155 = vpop.permute.xlu0 %4154
      %4156 = vrot.lane.b32.xlu0 %v3608, 40
      %v4157 = vpop.permute.xlu0 %4156
      %4158 = vrot.lane.b32.xlu0 %v3610, 40
      %v4159 = vpop.permute.xlu0 %4158
      %4160 = vrot.lane.b32.xlu0 %v4065, 40
      %v4161 = vpop.permute.xlu0 %4160
      %4162 = vrot.lane.b32.xlu0 %v4067, 40
      %v4163 = vpop.permute.xlu0 %4162
      %4164 = vrot.lane.b32.xlu0 %v4069, 40
      %v4165 = vpop.permute.xlu0 %4164
      %4217 = vrot.lane.b32.xlu0 %v3227, 48
      %v4218 = vpop.permute.xlu0 %4217
      %4219 = vrot.lane.b32.xlu0 %v3228, 48
      %v4220 = vpop.permute.xlu0 %4219
      %4221 = vrot.lane.b32.xlu0 %v3229, 48
      %v4222 = vpop.permute.xlu0 %4221
      %4223 = vrot.lane.b32.xlu0 %v3231, 48
      %v4224 = vpop.permute.xlu0 %4223
      %4225 = vrot.lane.b32.xlu0 %v3232, 48
      %v4226 = vpop.permute.xlu0 %4225
      %4227 = vrot.lane.b32.xlu0 %v3233, 48
      %v4228 = vpop.permute.xlu0 %4227
      %4229 = vrot.lane.b32.xlu0 %v3235, 48
      %v4230 = vpop.permute.xlu0 %4229
      %4231 = vrot.lane.b32.xlu0 %v3236, 48
      %v4232 = vpop.permute.xlu0 %4231
      %4233 = vrot.lane.b32.xlu0 %v3237, 48
      %v4234 = vpop.permute.xlu0 %4233
      %4235 = vrot.lane.b32.xlu0 %v3239, 48
      %v4236 = vpop.permute.xlu0 %4235
      %4237 = vrot.lane.b32.xlu0 %v3240, 48
      %v4238 = vpop.permute.xlu0 %4237
      %4239 = vrot.lane.b32.xlu0 %v3241, 48
      %v4240 = vpop.permute.xlu0 %4239
      %4241 = vrot.lane.b32.xlu0 %v3243, 48
      %v4242 = vpop.permute.xlu0 %4241
      %4243 = vrot.lane.b32.xlu0 %v3244, 48
      %v4244 = vpop.permute.xlu0 %4243
      %4245 = vrot.lane.b32.xlu0 %v3245, 48
      %v4246 = vpop.permute.xlu0 %4245
      %4247 = vrot.lane.b32.xlu0 %v3247, 48
      %v4248 = vpop.permute.xlu0 %4247
      %4249 = vrot.lane.b32.xlu0 %v3248, 48
      %v4250 = vpop.permute.xlu0 %4249
      %4251 = vrot.lane.b32.xlu0 %v3249, 48
      %v4252 = vpop.permute.xlu0 %4251
      %4253 = vrot.lane.b32.xlu0 %v3251, 48
      %v4254 = vpop.permute.xlu0 %4253
      %4255 = vrot.lane.b32.xlu0 %v3252, 48
      %v4256 = vpop.permute.xlu0 %4255
      %4257 = vrot.lane.b32.xlu0 %v3253, 48
      %v4258 = vpop.permute.xlu0 %4257
      %4259 = vrot.lane.b32.xlu0 %v3255, 48
      %v4260 = vpop.permute.xlu0 %4259
      %4261 = vrot.lane.b32.xlu0 %v3256, 48
      %v4262 = vpop.permute.xlu0 %4261
      %4263 = vrot.lane.b32.xlu0 %v3257, 48
      %v4264 = vpop.permute.xlu0 %4263
      %4265 = vrot.lane.b32.xlu0 %v3259, 48
      %v4266 = vpop.permute.xlu0 %4265
      %4267 = vrot.lane.b32.xlu0 %v3260, 48
      %v4268 = vpop.permute.xlu0 %4267
      %4269 = vrot.lane.b32.xlu0 %v3261, 48
      %v4270 = vpop.permute.xlu0 %4269
      %4271 = vrot.lane.b32.xlu0 %v3263, 48
      %v4272 = vpop.permute.xlu0 %4271
      %4273 = vrot.lane.b32.xlu0 %v3264, 48
      %v4274 = vpop.permute.xlu0 %4273
      %4275 = vrot.lane.b32.xlu0 %v3265, 48
      %v4276 = vpop.permute.xlu0 %4275
      %4277 = vrot.lane.b32.xlu0 %v3267, 48
      %v4278 = vpop.permute.xlu0 %4277
      %4279 = vrot.lane.b32.xlu0 %v3268, 48
      %v4280 = vpop.permute.xlu0 %4279
      %4281 = vrot.lane.b32.xlu0 %v3269, 48
      %v4282 = vpop.permute.xlu0 %4281
      %4283 = vrot.lane.b32.xlu0 %v3271, 48
      %v4284 = vpop.permute.xlu0 %4283
      %4285 = vrot.lane.b32.xlu0 %v3272, 48
      %v4286 = vpop.permute.xlu0 %4285
      %4287 = vrot.lane.b32.xlu0 %v3273, 48
      %v4288 = vpop.permute.xlu0 %4287
      %4289 = vrot.lane.b32.xlu0 %v3275, 48
      %v4290 = vpop.permute.xlu0 %4289
      %4291 = vrot.lane.b32.xlu0 %v3276, 48
      %v4292 = vpop.permute.xlu0 %4291
      %4293 = vrot.lane.b32.xlu0 %v3277, 48
      %v4294 = vpop.permute.xlu0 %4293
      %4295 = vrot.lane.b32.xlu0 %v3279, 48
      %v4296 = vpop.permute.xlu0 %4295
      %4297 = vrot.lane.b32.xlu0 %v3280, 48
      %v4298 = vpop.permute.xlu0 %4297
      %4299 = vrot.lane.b32.xlu0 %v3281, 48
      %v4300 = vpop.permute.xlu0 %4299
      %4301 = vrot.lane.b32.xlu0 %v3283, 48
      %v4302 = vpop.permute.xlu0 %4301
      %4303 = vrot.lane.b32.xlu0 %v3284, 48
      %v4304 = vpop.permute.xlu0 %4303
      %4305 = vrot.lane.b32.xlu0 %v3285, 48
      %v4306 = vpop.permute.xlu0 %4305
      %4307 = vrot.lane.b32.xlu0 %v3287, 48
      %v4308 = vpop.permute.xlu0 %4307
      %4309 = vrot.lane.b32.xlu0 %v3288, 48
      %v4310 = vpop.permute.xlu0 %4309
      %4311 = vrot.lane.b32.xlu0 %v3289, 48
      %v4312 = vpop.permute.xlu0 %4311
      %v4361 = vrot.slane %v3288, 1
      %v4362 = vrot.slane %v3289, 1
      %v4363 = vsel %vm794, %v4361, %v4362
      %4364 = vrot.lane.b32.xlu0 %v3329, 56
      %v4365 = vpop.permute.xlu0 %4364
      %4366 = vrot.lane.b32.xlu0 %v3331, 56
      %v4367 = vpop.permute.xlu0 %4366
      %4368 = vrot.lane.b32.xlu0 %v3330, 56
      %v4369 = vpop.permute.xlu0 %4368
      %4370 = vrot.lane.b32.xlu0 %v3332, 56
      %v4371 = vpop.permute.xlu0 %4370
      %4372 = vrot.lane.b32.xlu0 %v3334, 56
      %v4373 = vpop.permute.xlu0 %4372
      %4374 = vrot.lane.b32.xlu0 %v3333, 56
      %v4375 = vpop.permute.xlu0 %4374
      %4376 = vrot.lane.b32.xlu0 %v3335, 56
      %v4377 = vpop.permute.xlu0 %4376
      %4378 = vrot.lane.b32.xlu0 %v3337, 56
      %v4379 = vpop.permute.xlu0 %4378
      %4380 = vrot.lane.b32.xlu0 %v3336, 56
      %v4381 = vpop.permute.xlu0 %4380
      %4382 = vrot.lane.b32.xlu0 %v3338, 56
      %v4383 = vpop.permute.xlu0 %4382
      %4384 = vrot.lane.b32.xlu0 %v3340, 56
      %v4385 = vpop.permute.xlu0 %4384
      %4386 = vrot.lane.b32.xlu0 %v3339, 56
      %v4387 = vpop.permute.xlu0 %4386
      %4388 = vrot.lane.b32.xlu0 %v3341, 56
      %v4389 = vpop.permute.xlu0 %4388
      %4390 = vrot.lane.b32.xlu0 %v3343, 56
      %v4391 = vpop.permute.xlu0 %4390
      %4392 = vrot.lane.b32.xlu0 %v3342, 56
      %v4393 = vpop.permute.xlu0 %4392
      %4394 = vrot.lane.b32.xlu0 %v3344, 56
      %v4395 = vpop.permute.xlu0 %4394
      %4396 = vrot.lane.b32.xlu0 %v3346, 56
      %v4397 = vpop.permute.xlu0 %4396
      %4398 = vrot.lane.b32.xlu0 %v3345, 56
      %v4399 = vpop.permute.xlu0 %4398
      %4400 = vrot.lane.b32.xlu0 %v3347, 56
      %v4401 = vpop.permute.xlu0 %4400
      %4402 = vrot.lane.b32.xlu0 %v3349, 56
      %v4403 = vpop.permute.xlu0 %4402
      %4404 = vrot.lane.b32.xlu0 %v3348, 56
      %v4405 = vpop.permute.xlu0 %4404
      %4406 = vrot.lane.b32.xlu0 %v3350, 56
      %v4407 = vpop.permute.xlu0 %4406
      %4408 = vrot.lane.b32.xlu0 %v3352, 56
      %v4409 = vpop.permute.xlu0 %4408
      %4410 = vrot.lane.b32.xlu0 %v3351, 56
      %v4411 = vpop.permute.xlu0 %4410
      %4412 = vrot.lane.b32.xlu0 %v3353, 56
      %v4413 = vpop.permute.xlu0 %4412
      %4414 = vrot.lane.b32.xlu0 %v3355, 56
      %v4415 = vpop.permute.xlu0 %4414
      %4416 = vrot.lane.b32.xlu0 %v3354, 56
      %v4417 = vpop.permute.xlu0 %4416
      %4418 = vrot.lane.b32.xlu0 %v3356, 56
      %v4419 = vpop.permute.xlu0 %4418
      %4420 = vrot.lane.b32.xlu0 %v3358, 56
      %v4421 = vpop.permute.xlu0 %4420
      %4422 = vrot.lane.b32.xlu0 %v3357, 56
      %v4423 = vpop.permute.xlu0 %4422
      %4424 = vrot.lane.b32.xlu0 %v3359, 56
      %v4425 = vpop.permute.xlu0 %4424
      %4426 = vrot.lane.b32.xlu0 %v3361, 56
      %v4427 = vpop.permute.xlu0 %4426
      %4428 = vrot.lane.b32.xlu0 %v3360, 56
      %v4429 = vpop.permute.xlu0 %4428
      %4430 = vrot.lane.b32.xlu0 %v3362, 56
      %v4431 = vpop.permute.xlu0 %4430
      %4432 = vrot.lane.b32.xlu0 %v3364, 56
      %v4433 = vpop.permute.xlu0 %4432
      %4434 = vrot.lane.b32.xlu0 %v3363, 56
      %v4435 = vpop.permute.xlu0 %4434
      %4436 = vrot.lane.b32.xlu0 %v3365, 56
      %v4437 = vpop.permute.xlu0 %4436
      %4438 = vrot.lane.b32.xlu0 %v3367, 56
      %v4439 = vpop.permute.xlu0 %4438
      %4440 = vrot.lane.b32.xlu0 %v3366, 56
      %v4441 = vpop.permute.xlu0 %4440
      %4442 = vrot.lane.b32.xlu0 %v3368, 56
      %v4443 = vpop.permute.xlu0 %4442
      %4444 = vrot.lane.b32.xlu0 %v3370, 56
      %v4445 = vpop.permute.xlu0 %4444
      %4446 = vrot.lane.b32.xlu0 %v3369, 56
      %v4447 = vpop.permute.xlu0 %4446
      %4448 = vrot.lane.b32.xlu0 %v3917, 56
      %v4449 = vpop.permute.xlu0 %4448
      %4450 = vrot.lane.b32.xlu0 %v3919, 56
      %v4451 = vpop.permute.xlu0 %4450
      %4452 = vrot.lane.b32.xlu0 %v3918, 56
      %v4453 = vpop.permute.xlu0 %4452
      %4454 = vrot.lane.b32.xlu0 %v4361, 56
      %v4455 = vpop.permute.xlu0 %4454
      %4456 = vrot.lane.b32.xlu0 %v4363, 56
      %v4457 = vpop.permute.xlu0 %4456
      %4458 = vrot.lane.b32.xlu0 %v4362, 56
      %v4459 = vpop.permute.xlu0 %4458
      %v4509 = vrot.slane %v3288, 2
      %v4510 = vrot.slane %v3289, 2
      %v4511 = vsel %vm1003, %v4509, %v4510
      %v4512 = vrot.slane %v3290, 2
      %v4513 = vsel %vm1003, %v4510, %v4512
      %4514 = vrot.lane.b32.xlu0 %v3541, 64
      %v4515 = vpop.permute.xlu0 %4514
      %4516 = vrot.lane.b32.xlu0 %v3543, 64
      %v4517 = vpop.permute.xlu0 %4516
      %4518 = vrot.lane.b32.xlu0 %v3545, 64
      %v4519 = vpop.permute.xlu0 %4518
      %4520 = vrot.lane.b32.xlu0 %v3546, 64
      %v4521 = vpop.permute.xlu0 %4520
      %4522 = vrot.lane.b32.xlu0 %v3548, 64
      %v4523 = vpop.permute.xlu0 %4522
      %4524 = vrot.lane.b32.xlu0 %v3550, 64
      %v4525 = vpop.permute.xlu0 %4524
      %4526 = vrot.lane.b32.xlu0 %v3551, 64
      %v4527 = vpop.permute.xlu0 %4526
      %4528 = vrot.lane.b32.xlu0 %v3553, 64
      %v4529 = vpop.permute.xlu0 %4528
      %4530 = vrot.lane.b32.xlu0 %v3555, 64
      %v4531 = vpop.permute.xlu0 %4530
      %4532 = vrot.lane.b32.xlu0 %v3556, 64
      %v4533 = vpop.permute.xlu0 %4532
      %4534 = vrot.lane.b32.xlu0 %v3558, 64
      %v4535 = vpop.permute.xlu0 %4534
      %4536 = vrot.lane.b32.xlu0 %v3560, 64
      %v4537 = vpop.permute.xlu0 %4536
      %4538 = vrot.lane.b32.xlu0 %v3561, 64
      %v4539 = vpop.permute.xlu0 %4538
      %4540 = vrot.lane.b32.xlu0 %v3563, 64
      %v4541 = vpop.permute.xlu0 %4540
      %4542 = vrot.lane.b32.xlu0 %v3565, 64
      %v4543 = vpop.permute.xlu0 %4542
      %4544 = vrot.lane.b32.xlu0 %v3566, 64
      %v4545 = vpop.permute.xlu0 %4544
      %4546 = vrot.lane.b32.xlu0 %v3568, 64
      %v4547 = vpop.permute.xlu0 %4546
      %4548 = vrot.lane.b32.xlu0 %v3570, 64
      %v4549 = vpop.permute.xlu0 %4548
      %4550 = vrot.lane.b32.xlu0 %v3571, 64
      %v4551 = vpop.permute.xlu0 %4550
      %4552 = vrot.lane.b32.xlu0 %v3573, 64
      %v4553 = vpop.permute.xlu0 %4552
      %4554 = vrot.lane.b32.xlu0 %v3575, 64
      %v4555 = vpop.permute.xlu0 %4554
      %4556 = vrot.lane.b32.xlu0 %v3576, 64
      %v4557 = vpop.permute.xlu0 %4556
      %4558 = vrot.lane.b32.xlu0 %v3578, 64
      %v4559 = vpop.permute.xlu0 %4558
      %4560 = vrot.lane.b32.xlu0 %v3580, 64
      %v4561 = vpop.permute.xlu0 %4560
      %4562 = vrot.lane.b32.xlu0 %v3581, 64
      %v4563 = vpop.permute.xlu0 %4562
      %4564 = vrot.lane.b32.xlu0 %v3583, 64
      %v4565 = vpop.permute.xlu0 %4564
      %4566 = vrot.lane.b32.xlu0 %v3585, 64
      %v4567 = vpop.permute.xlu0 %4566
      %4568 = vrot.lane.b32.xlu0 %v3586, 64
      %v4569 = vpop.permute.xlu0 %4568
      %4570 = vrot.lane.b32.xlu0 %v3588, 64
      %v4571 = vpop.permute.xlu0 %4570
      %4572 = vrot.lane.b32.xlu0 %v3590, 64
      %v4573 = vpop.permute.xlu0 %4572
      %4574 = vrot.lane.b32.xlu0 %v3591, 64
      %v4575 = vpop.permute.xlu0 %4574
      %4576 = vrot.lane.b32.xlu0 %v3593, 64
      %v4577 = vpop.permute.xlu0 %4576
      %4578 = vrot.lane.b32.xlu0 %v3595, 64
      %v4579 = vpop.permute.xlu0 %4578
      %4580 = vrot.lane.b32.xlu0 %v3596, 64
      %v4581 = vpop.permute.xlu0 %4580
      %4582 = vrot.lane.b32.xlu0 %v3598, 64
      %v4583 = vpop.permute.xlu0 %4582
      %4584 = vrot.lane.b32.xlu0 %v3600, 64
      %v4585 = vpop.permute.xlu0 %4584
      %4586 = vrot.lane.b32.xlu0 %v3601, 64
      %v4587 = vpop.permute.xlu0 %4586
      %4588 = vrot.lane.b32.xlu0 %v3603, 64
      %v4589 = vpop.permute.xlu0 %4588
      %4590 = vrot.lane.b32.xlu0 %v3605, 64
      %v4591 = vpop.permute.xlu0 %4590
      %4592 = vrot.lane.b32.xlu0 %v3606, 64
      %v4593 = vpop.permute.xlu0 %4592
      %4594 = vrot.lane.b32.xlu0 %v3608, 64
      %v4595 = vpop.permute.xlu0 %4594
      %4596 = vrot.lane.b32.xlu0 %v3610, 64
      %v4597 = vpop.permute.xlu0 %4596
      %4598 = vrot.lane.b32.xlu0 %v4065, 64
      %v4599 = vpop.permute.xlu0 %4598
      %4600 = vrot.lane.b32.xlu0 %v4067, 64
      %v4601 = vpop.permute.xlu0 %4600
      %4602 = vrot.lane.b32.xlu0 %v4069, 64
      %v4603 = vpop.permute.xlu0 %4602
      %4604 = vrot.lane.b32.xlu0 %v4509, 64
      %v4605 = vpop.permute.xlu0 %4604
      %4606 = vrot.lane.b32.xlu0 %v4511, 64
      %v4607 = vpop.permute.xlu0 %4606
      %4608 = vrot.lane.b32.xlu0 %v4513, 64
      %v4609 = vpop.permute.xlu0 %4608
      %v4658 = vsel %vm2179, %v3219, %v3372
      %v4659 = vsel %vm2179, %v3220, %v3374
      %v4660 = vsel %vm2179, %v3221, %v3376
      %v4661 = vsel %vm2179, %v3223, %v3378
      %v4662 = vsel %vm2179, %v3224, %v3380
      %v4663 = vsel %vm2179, %v3225, %v3382
      %v4664 = vsel %vm2179, %v3227, %v3384
      %v4665 = vsel %vm2179, %v3228, %v3386
      %v4666 = vsel %vm2179, %v3229, %v3388
      %v4667 = vsel %vm2179, %v3231, %v3390
      %v4668 = vsel %vm2179, %v3232, %v3392
      %v4669 = vsel %vm2179, %v3233, %v3394
      %v4670 = vsel %vm2179, %v3235, %v3396
      %v4671 = vsel %vm2179, %v3236, %v3398
      %v4672 = vsel %vm2179, %v3237, %v3400
      %v4673 = vsel %vm2179, %v3239, %v3402
      %v4674 = vsel %vm2179, %v3240, %v3404
      %v4675 = vsel %vm2179, %v3241, %v3406
      %v4676 = vsel %vm2179, %v3243, %v3408
      %v4677 = vsel %vm2179, %v3244, %v3410
      %v4678 = vsel %vm2179, %v3245, %v3412
      %v4679 = vsel %vm2179, %v3247, %v3414
      %v4680 = vsel %vm2179, %v3248, %v3416
      %v4681 = vsel %vm2179, %v3249, %v3418
      %v4682 = vsel %vm2179, %v3251, %v3420
      %v4683 = vsel %vm2179, %v3252, %v3422
      %v4684 = vsel %vm2179, %v3253, %v3424
      %v4685 = vsel %vm2179, %v3255, %v3426
      %v4686 = vsel %vm2179, %v3256, %v3428
      %v4687 = vsel %vm2179, %v3257, %v3430
      %v4688 = vsel %vm2179, %v3259, %v3432
      %v4689 = vsel %vm2179, %v3260, %v3434
      %v4690 = vsel %vm2179, %v3261, %v3436
      %v4691 = vsel %vm2179, %v3263, %v3438
      %v4692 = vsel %vm2179, %v3264, %v3440
      %v4693 = vsel %vm2179, %v3265, %v3442
      %v4694 = vsel %vm2179, %v3267, %v3444
      %v4695 = vsel %vm2179, %v3268, %v3446
      %v4696 = vsel %vm2179, %v3269, %v3448
      %v4697 = vsel %vm2179, %v3271, %v3450
      %v4698 = vsel %vm2179, %v3272, %v3452
      %v4699 = vsel %vm2179, %v3273, %v3454
      %v4700 = vsel %vm2179, %v3275, %v3456
      %v4701 = vsel %vm2179, %v3276, %v3458
      %v4702 = vsel %vm2179, %v3277, %v3460
      %v4703 = vsel %vm2179, %v3279, %v3462
      %v4704 = vsel %vm2179, %v3280, %v3464
      %v4705 = vsel %vm2179, %v3281, %v3466
      %v4706 = vsel %vm2277, %v4658, %v3612
      %v4707 = vsel %vm2277, %v4659, %v3614
      %v4708 = vsel %vm2277, %v4660, %v3616
      %v4709 = vsel %vm2277, %v4661, %v3618
      %v4710 = vsel %vm2277, %v4662, %v3620
      %v4711 = vsel %vm2277, %v4663, %v3622
      %v4712 = vsel %vm2277, %v4664, %v3624
      %v4713 = vsel %vm2277, %v4665, %v3626
      %v4714 = vsel %vm2277, %v4666, %v3628
      %v4715 = vsel %vm2277, %v4667, %v3630
      %v4716 = vsel %vm2277, %v4668, %v3632
      %v4717 = vsel %vm2277, %v4669, %v3634
      %v4718 = vsel %vm2277, %v4670, %v3636
      %v4719 = vsel %vm2277, %v4671, %v3638
      %v4720 = vsel %vm2277, %v4672, %v3640
      %v4721 = vsel %vm2277, %v4673, %v3642
      %v4722 = vsel %vm2277, %v4674, %v3644
      %v4723 = vsel %vm2277, %v4675, %v3646
      %v4724 = vsel %vm2277, %v4676, %v3648
      %v4725 = vsel %vm2277, %v4677, %v3650
      %v4726 = vsel %vm2277, %v4678, %v3652
      %v4727 = vsel %vm2277, %v4679, %v3654
      %v4728 = vsel %vm2277, %v4680, %v3656
      %v4729 = vsel %vm2277, %v4681, %v3658
      %v4730 = vsel %vm2277, %v4682, %v3660
      %v4731 = vsel %vm2277, %v4683, %v3662
      %v4732 = vsel %vm2277, %v4684, %v3664
      %v4733 = vsel %vm2277, %v4685, %v3666
      %v4734 = vsel %vm2277, %v4686, %v3668
      %v4735 = vsel %vm2277, %v4687, %v3670
      %v4736 = vsel %vm2277, %v4688, %v3672
      %v4737 = vsel %vm2277, %v4689, %v3674
      %v4738 = vsel %vm2277, %v4690, %v3676
      %v4739 = vsel %vm2277, %v4691, %v3678
      %v4740 = vsel %vm2277, %v4692, %v3680
      %v4741 = vsel %vm2277, %v4693, %v3682
      %v4742 = vsel %vm2277, %v4694, %v3684
      %v4743 = vsel %vm2277, %v4695, %v3686
      %v4744 = vsel %vm2277, %v4696, %v3688
      %v4745 = vsel %vm2277, %v4697, %v3690
      %v4746 = vsel %vm2277, %v4698, %v3692
      %v4747 = vsel %vm2277, %v4699, %v3694
      %v4748 = vsel %vm2277, %v4700, %v3696
      %v4749 = vsel %vm2277, %v4701, %v3698
      %v4750 = vsel %vm2277, %v4702, %v3700
      %v4751 = vsel %vm2277, %v4703, %v3702
      %v4752 = vsel %vm2277, %v4704, %v3704
      %v4753 = vsel %vm2277, %v4705, %v3706
      %v4754 = vsel %vm2375, %v4706, %v3774
      %v4755 = vsel %vm2375, %v4707, %v3776
      %v4756 = vsel %vm2375, %v4708, %v3778
      %v4757 = vsel %vm2375, %v4709, %v3780
      %v4758 = vsel %vm2375, %v4710, %v3782
      %v4759 = vsel %vm2375, %v4711, %v3784
      %v4760 = vsel %vm2375, %v4712, %v3786
      %v4761 = vsel %vm2375, %v4713, %v3788
      %v4762 = vsel %vm2375, %v4714, %v3790
      %v4763 = vsel %vm2375, %v4715, %v3792
      %v4764 = vsel %vm2375, %v4716, %v3794
      %v4765 = vsel %vm2375, %v4717, %v3796
      %v4766 = vsel %vm2375, %v4718, %v3798
      %v4767 = vsel %vm2375, %v4719, %v3800
      %v4768 = vsel %vm2375, %v4720, %v3802
      %v4769 = vsel %vm2375, %v4721, %v3804
      %v4770 = vsel %vm2375, %v4722, %v3806
      %v4771 = vsel %vm2375, %v4723, %v3808
      %v4772 = vsel %vm2375, %v4724, %v3810
      %v4773 = vsel %vm2375, %v4725, %v3812
      %v4774 = vsel %vm2375, %v4726, %v3814
      %v4775 = vsel %vm2375, %v4727, %v3816
      %v4776 = vsel %vm2375, %v4728, %v3818
      %v4777 = vsel %vm2375, %v4729, %v3820
      %v4778 = vsel %vm2375, %v4730, %v3822
      %v4779 = vsel %vm2375, %v4731, %v3824
      %v4780 = vsel %vm2375, %v4732, %v3826
      %v4781 = vsel %vm2375, %v4733, %v3828
      %v4782 = vsel %vm2375, %v4734, %v3830
      %v4783 = vsel %vm2375, %v4735, %v3832
      %v4784 = vsel %vm2375, %v4736, %v3834
      %v4785 = vsel %vm2375, %v4737, %v3836
      %v4786 = vsel %vm2375, %v4738, %v3838
      %v4787 = vsel %vm2375, %v4739, %v3840
      %v4788 = vsel %vm2375, %v4740, %v3842
      %v4789 = vsel %vm2375, %v4741, %v3844
      %v4790 = vsel %vm2375, %v4742, %v3846
      %v4791 = vsel %vm2375, %v4743, %v3848
      %v4792 = vsel %vm2375, %v4744, %v3850
      %v4793 = vsel %vm2375, %v4745, %v3852
      %v4794 = vsel %vm2375, %v4746, %v3854
      %v4795 = vsel %vm2375, %v4747, %v3856
      %v4796 = vsel %vm2375, %v4748, %v3858
      %v4797 = vsel %vm2375, %v4749, %v3860
      %v4798 = vsel %vm2375, %v4750, %v3862
      %v4799 = vsel %vm2375, %v4751, %v3864
      %v4800 = vsel %vm2375, %v4752, %v3866
      %v4801 = vsel %vm2375, %v4753, %v3868
      %v4802 = vsel %vm2473, %v4754, %v3921
      %v4803 = vsel %vm2473, %v4755, %v3923
      %v4804 = vsel %vm2473, %v4756, %v3925
      %v4805 = vsel %vm2473, %v4757, %v3927
      %v4806 = vsel %vm2473, %v4758, %v3929
      %v4807 = vsel %vm2473, %v4759, %v3931
      %v4808 = vsel %vm2473, %v4760, %v3933
      %v4809 = vsel %vm2473, %v4761, %v3935
      %v4810 = vsel %vm2473, %v4762, %v3937
      %v4811 = vsel %vm2473, %v4763, %v3939
      %v4812 = vsel %vm2473, %v4764, %v3941
      %v4813 = vsel %vm2473, %v4765, %v3943
      %v4814 = vsel %vm2473, %v4766, %v3945
      %v4815 = vsel %vm2473, %v4767, %v3947
      %v4816 = vsel %vm2473, %v4768, %v3949
      %v4817 = vsel %vm2473, %v4769, %v3951
      %v4818 = vsel %vm2473, %v4770, %v3953
      %v4819 = vsel %vm2473, %v4771, %v3955
      %v4820 = vsel %vm2473, %v4772, %v3957
      %v4821 = vsel %vm2473, %v4773, %v3959
      %v4822 = vsel %vm2473, %v4774, %v3961
      %v4823 = vsel %vm2473, %v4775, %v3963
      %v4824 = vsel %vm2473, %v4776, %v3965
      %v4825 = vsel %vm2473, %v4777, %v3967
      %v4826 = vsel %vm2473, %v4778, %v3969
      %v4827 = vsel %vm2473, %v4779, %v3971
      %v4828 = vsel %vm2473, %v4780, %v3973
      %v4829 = vsel %vm2473, %v4781, %v3975
      %v4830 = vsel %vm2473, %v4782, %v3977
      %v4831 = vsel %vm2473, %v4783, %v3979
      %v4832 = vsel %vm2473, %v4784, %v3981
      %v4833 = vsel %vm2473, %v4785, %v3983
      %v4834 = vsel %vm2473, %v4786, %v3985
      %v4835 = vsel %vm2473, %v4787, %v3987
      %v4836 = vsel %vm2473, %v4788, %v3989
      %v4837 = vsel %vm2473, %v4789, %v3991
      %v4838 = vsel %vm2473, %v4790, %v3993
      %v4839 = vsel %vm2473, %v4791, %v3995
      %v4840 = vsel %vm2473, %v4792, %v3997
      %v4841 = vsel %vm2473, %v4793, %v3999
      %v4842 = vsel %vm2473, %v4794, %v4001
      %v4843 = vsel %vm2473, %v4795, %v4003
      %v4844 = vsel %vm2473, %v4796, %v4005
      %v4845 = vsel %vm2473, %v4797, %v4007
      %v4846 = vsel %vm2473, %v4798, %v4009
      %v4847 = vsel %vm2473, %v4799, %v4011
      %v4848 = vsel %vm2473, %v4800, %v4013
      %v4849 = vsel %vm2473, %v4801, %v4015
      %vm4850 = vcmask 326656
      %v4851 = vsel %vm4850, %v4802, %v4071
      %v4852 = vsel %vm4850, %v4803, %v4073
      %v4853 = vsel %vm4850, %v4804, %v4075
      %v4854 = vsel %vm4850, %v4805, %v4077
      %v4855 = vsel %vm4850, %v4806, %v4079
      %v4856 = vsel %vm4850, %v4807, %v4081
      %v4857 = vsel %vm4850, %v4808, %v4083
      %v4858 = vsel %vm4850, %v4809, %v4085
      %v4859 = vsel %vm4850, %v4810, %v4087
      %v4860 = vsel %vm4850, %v4811, %v4089
      %v4861 = vsel %vm4850, %v4812, %v4091
      %v4862 = vsel %vm4850, %v4813, %v4093
      %v4863 = vsel %vm4850, %v4814, %v4095
      %v4864 = vsel %vm4850, %v4815, %v4097
      %v4865 = vsel %vm4850, %v4816, %v4099
      %v4866 = vsel %vm4850, %v4817, %v4101
      %v4867 = vsel %vm4850, %v4818, %v4103
      %v4868 = vsel %vm4850, %v4819, %v4105
      %v4869 = vsel %vm4850, %v4820, %v4107
      %v4870 = vsel %vm4850, %v4821, %v4109
      %v4871 = vsel %vm4850, %v4822, %v4111
      %v4872 = vsel %vm4850, %v4823, %v4113
      %v4873 = vsel %vm4850, %v4824, %v4115
      %v4874 = vsel %vm4850, %v4825, %v4117
      %v4875 = vsel %vm4850, %v4826, %v4119
      %v4876 = vsel %vm4850, %v4827, %v4121
      %v4877 = vsel %vm4850, %v4828, %v4123
      %v4878 = vsel %vm4850, %v4829, %v4125
      %v4879 = vsel %vm4850, %v4830, %v4127
      %v4880 = vsel %vm4850, %v4831, %v4129
      %v4881 = vsel %vm4850, %v4832, %v4131
      %v4882 = vsel %vm4850, %v4833, %v4133
      %v4883 = vsel %vm4850, %v4834, %v4135
      %v4884 = vsel %vm4850, %v4835, %v4137
      %v4885 = vsel %vm4850, %v4836, %v4139
      %v4886 = vsel %vm4850, %v4837, %v4141
      %v4887 = vsel %vm4850, %v4838, %v4143
      %v4888 = vsel %vm4850, %v4839, %v4145
      %v4889 = vsel %vm4850, %v4840, %v4147
      %v4890 = vsel %vm4850, %v4841, %v4149
      %v4891 = vsel %vm4850, %v4842, %v4151
      %v4892 = vsel %vm4850, %v4843, %v4153
      %v4893 = vsel %vm4850, %v4844, %v4155
      %v4894 = vsel %vm4850, %v4845, %v4157
      %v4895 = vsel %vm4850, %v4846, %v4159
      %v4896 = vsel %vm4850, %v4847, %v4161
      %v4897 = vsel %vm4850, %v4848, %v4163
      %v4898 = vsel %vm4850, %v4849, %v4165
      %vm4899 = vcmask 392192
      %v4900 = vsel %vm4899, %v4851, %v4218
      %v4901 = vsel %vm4899, %v4852, %v4220
      %v4902 = vsel %vm4899, %v4853, %v4222
      %v4903 = vsel %vm4899, %v4854, %v4224
      %v4904 = vsel %vm4899, %v4855, %v4226
      %v4905 = vsel %vm4899, %v4856, %v4228
      %v4906 = vsel %vm4899, %v4857, %v4230
      %v4907 = vsel %vm4899, %v4858, %v4232
      %v4908 = vsel %vm4899, %v4859, %v4234
      %v4909 = vsel %vm4899, %v4860, %v4236
      %v4910 = vsel %vm4899, %v4861, %v4238
      %v4911 = vsel %vm4899, %v4862, %v4240
      %v4912 = vsel %vm4899, %v4863, %v4242
      %v4913 = vsel %vm4899, %v4864, %v4244
      %v4914 = vsel %vm4899, %v4865, %v4246
      %v4915 = vsel %vm4899, %v4866, %v4248
      %v4916 = vsel %vm4899, %v4867, %v4250
      %v4917 = vsel %vm4899, %v4868, %v4252
      %v4918 = vsel %vm4899, %v4869, %v4254
      %v4919 = vsel %vm4899, %v4870, %v4256
      %v4920 = vsel %vm4899, %v4871, %v4258
      %v4921 = vsel %vm4899, %v4872, %v4260
      %v4922 = vsel %vm4899, %v4873, %v4262
      %v4923 = vsel %vm4899, %v4874, %v4264
      %v4924 = vsel %vm4899, %v4875, %v4266
      %v4925 = vsel %vm4899, %v4876, %v4268
      %v4926 = vsel %vm4899, %v4877, %v4270
      %v4927 = vsel %vm4899, %v4878, %v4272
      %v4928 = vsel %vm4899, %v4879, %v4274
      %v4929 = vsel %vm4899, %v4880, %v4276
      %v4930 = vsel %vm4899, %v4881, %v4278
      %v4931 = vsel %vm4899, %v4882, %v4280
      %v4932 = vsel %vm4899, %v4883, %v4282
      %v4933 = vsel %vm4899, %v4884, %v4284
      %v4934 = vsel %vm4899, %v4885, %v4286
      %v4935 = vsel %vm4899, %v4886, %v4288
      %v4936 = vsel %vm4899, %v4887, %v4290
      %v4937 = vsel %vm4899, %v4888, %v4292
      %v4938 = vsel %vm4899, %v4889, %v4294
      %v4939 = vsel %vm4899, %v4890, %v4296
      %v4940 = vsel %vm4899, %v4891, %v4298
      %v4941 = vsel %vm4899, %v4892, %v4300
      %v4942 = vsel %vm4899, %v4893, %v4302
      %v4943 = vsel %vm4899, %v4894, %v4304
      %v4944 = vsel %vm4899, %v4895, %v4306
      %v4945 = vsel %vm4899, %v4896, %v4308
      %v4946 = vsel %vm4899, %v4897, %v4310
      %v4947 = vsel %vm4899, %v4898, %v4312
      %vm4948 = vcmask 457728
      %v4949 = vsel %vm4948, %v4900, %v4365
      %v4950 = vsel %vm4948, %v4901, %v4367
      %v4951 = vsel %vm4948, %v4902, %v4369
      %v4952 = vsel %vm4948, %v4903, %v4371
      %v4953 = vsel %vm4948, %v4904, %v4373
      %v4954 = vsel %vm4948, %v4905, %v4375
      %v4955 = vsel %vm4948, %v4906, %v4377
      %v4956 = vsel %vm4948, %v4907, %v4379
      %v4957 = vsel %vm4948, %v4908, %v4381
      %v4958 = vsel %vm4948, %v4909, %v4383
      %v4959 = vsel %vm4948, %v4910, %v4385
      %v4960 = vsel %vm4948, %v4911, %v4387
      %v4961 = vsel %vm4948, %v4912, %v4389
      %v4962 = vsel %vm4948, %v4913, %v4391
      %v4963 = vsel %vm4948, %v4914, %v4393
      %v4964 = vsel %vm4948, %v4915, %v4395
      %v4965 = vsel %vm4948, %v4916, %v4397
      %v4966 = vsel %vm4948, %v4917, %v4399
      %v4967 = vsel %vm4948, %v4918, %v4401
      %v4968 = vsel %vm4948, %v4919, %v4403
      %v4969 = vsel %vm4948, %v4920, %v4405
      %v4970 = vsel %vm4948, %v4921, %v4407
      %v4971 = vsel %vm4948, %v4922, %v4409
      %v4972 = vsel %vm4948, %v4923, %v4411
      %v4973 = vsel %vm4948, %v4924, %v4413
      %v4974 = vsel %vm4948, %v4925, %v4415
      %v4975 = vsel %vm4948, %v4926, %v4417
      %v4976 = vsel %vm4948, %v4927, %v4419
      %v4977 = vsel %vm4948, %v4928, %v4421
      %v4978 = vsel %vm4948, %v4929, %v4423
      %v4979 = vsel %vm4948, %v4930, %v4425
      %v4980 = vsel %vm4948, %v4931, %v4427
      %v4981 = vsel %vm4948, %v4932, %v4429
      %v4982 = vsel %vm4948, %v4933, %v4431
      %v4983 = vsel %vm4948, %v4934, %v4433
      %v4984 = vsel %vm4948, %v4935, %v4435
      %v4985 = vsel %vm4948, %v4936, %v4437
      %v4986 = vsel %vm4948, %v4937, %v4439
      %v4987 = vsel %vm4948, %v4938, %v4441
      %v4988 = vsel %vm4948, %v4939, %v4443
      %v4989 = vsel %vm4948, %v4940, %v4445
      %v4990 = vsel %vm4948, %v4941, %v4447
      %v4991 = vsel %vm4948, %v4942, %v4449
      %v4992 = vsel %vm4948, %v4943, %v4451
      %v4993 = vsel %vm4948, %v4944, %v4453
      %v4994 = vsel %vm4948, %v4945, %v4455
      %v4995 = vsel %vm4948, %v4946, %v4457
      %v4996 = vsel %vm4948, %v4947, %v4459
      %vm4997 = vcmask 523264
      %v4998 = vsel %vm4997, %v4949, %v4515
      %v4999 = vsel %vm4997, %v4950, %v4517
      %v5000 = vsel %vm4997, %v4951, %v4519
      %v5001 = vsel %vm4997, %v4952, %v4521
      %v5002 = vsel %vm4997, %v4953, %v4523
      %v5003 = vsel %vm4997, %v4954, %v4525
      %v5004 = vsel %vm4997, %v4955, %v4527
      %v5005 = vsel %vm4997, %v4956, %v4529
      %v5006 = vsel %vm4997, %v4957, %v4531
      %v5007 = vsel %vm4997, %v4958, %v4533
      %v5008 = vsel %vm4997, %v4959, %v4535
      %v5009 = vsel %vm4997, %v4960, %v4537
      %v5010 = vsel %vm4997, %v4961, %v4539
      %v5011 = vsel %vm4997, %v4962, %v4541
      %v5012 = vsel %vm4997, %v4963, %v4543
      %v5013 = vsel %vm4997, %v4964, %v4545
      %v5014 = vsel %vm4997, %v4965, %v4547
      %v5015 = vsel %vm4997, %v4966, %v4549
      %v5016 = vsel %vm4997, %v4967, %v4551
      %v5017 = vsel %vm4997, %v4968, %v4553
      %v5018 = vsel %vm4997, %v4969, %v4555
      %v5019 = vsel %vm4997, %v4970, %v4557
      %v5020 = vsel %vm4997, %v4971, %v4559
      %v5021 = vsel %vm4997, %v4972, %v4561
      %v5022 = vsel %vm4997, %v4973, %v4563
      %v5023 = vsel %vm4997, %v4974, %v4565
      %v5024 = vsel %vm4997, %v4975, %v4567
      %v5025 = vsel %vm4997, %v4976, %v4569
      %v5026 = vsel %vm4997, %v4977, %v4571
      %v5027 = vsel %vm4997, %v4978, %v4573
      %v5028 = vsel %vm4997, %v4979, %v4575
      %v5029 = vsel %vm4997, %v4980, %v4577
      %v5030 = vsel %vm4997, %v4981, %v4579
      %v5031 = vsel %vm4997, %v4982, %v4581
      %v5032 = vsel %vm4997, %v4983, %v4583
      %v5033 = vsel %vm4997, %v4984, %v4585
      %v5034 = vsel %vm4997, %v4985, %v4587
      %v5035 = vsel %vm4997, %v4986, %v4589
      %v5036 = vsel %vm4997, %v4987, %v4591
      %v5037 = vsel %vm4997, %v4988, %v4593
      %v5038 = vsel %vm4997, %v4989, %v4595
      %v5039 = vsel %vm4997, %v4990, %v4597
      %v5040 = vsel %vm4997, %v4991, %v4599
      %v5041 = vsel %vm4997, %v4992, %v4601
      %v5042 = vsel %vm4997, %v4993, %v4603
      %v5043 = vsel %vm4997, %v4994, %v4605
      %v5044 = vsel %vm4997, %v4995, %v4607
      %v5045 = vsel %vm4997, %v4996, %v4609
      %v5094 = vrot.slane %v4998, 7
      %v5095 = vrot.slane %v4999, 7
      %v5096 = vsel %vm2570, %v5094, %v5095
      %v5097 = vrot.slane %v5000, 7
      %v5098 = vsel %vm2570, %v5095, %v5097
      %v5099 = vrot.slane %v5001, 7
      %v5100 = vrot.slane %v5002, 7
      %v5101 = vsel %vm2570, %v5099, %v5100
      %v5102 = vrot.slane %v5003, 7
      %v5103 = vsel %vm2570, %v5100, %v5102
      %v5104 = vrot.slane %v5004, 7
      %v5105 = vrot.slane %v5005, 7
      %v5106 = vsel %vm2570, %v5104, %v5105
      %v5107 = vrot.slane %v5006, 7
      %v5108 = vsel %vm2570, %v5105, %v5107
      %v5109 = vrot.slane %v5007, 7
      %v5110 = vrot.slane %v5008, 7
      %v5111 = vsel %vm2570, %v5109, %v5110
      %v5112 = vrot.slane %v5009, 7
      %v5113 = vsel %vm2570, %v5110, %v5112
      %v5114 = vrot.slane %v5010, 7
      %v5115 = vrot.slane %v5011, 7
      %v5116 = vsel %vm2570, %v5114, %v5115
      %v5117 = vrot.slane %v5012, 7
      %v5118 = vsel %vm2570, %v5115, %v5117
      %v5119 = vrot.slane %v5013, 7
      %v5120 = vrot.slane %v5014, 7
      %v5121 = vsel %vm2570, %v5119, %v5120
      %v5122 = vrot.slane %v5015, 7
      %v5123 = vsel %vm2570, %v5120, %v5122
      %v5124 = vrot.slane %v5016, 7
      %v5125 = vrot.slane %v5017, 7
      %v5126 = vsel %vm2570, %v5124, %v5125
      %v5127 = vrot.slane %v5018, 7
      %v5128 = vsel %vm2570, %v5125, %v5127
      %v5129 = vrot.slane %v5019, 7
      %v5130 = vrot.slane %v5020, 7
      %v5131 = vsel %vm2570, %v5129, %v5130
      %v5132 = vrot.slane %v5021, 7
      %v5133 = vsel %vm2570, %v5130, %v5132
      %v5134 = vrot.slane %v5022, 7
      %v5135 = vrot.slane %v5023, 7
      %v5136 = vsel %vm2570, %v5134, %v5135
      %v5137 = vrot.slane %v5024, 7
      %v5138 = vsel %vm2570, %v5135, %v5137
      %v5139 = vrot.slane %v5025, 7
      %v5140 = vrot.slane %v5026, 7
      %v5141 = vsel %vm2570, %v5139, %v5140
      %v5142 = vrot.slane %v5027, 7
      %v5143 = vsel %vm2570, %v5140, %v5142
      %v5144 = vrot.slane %v5028, 7
      %v5145 = vrot.slane %v5029, 7
      %v5146 = vsel %vm2570, %v5144, %v5145
      %v5147 = vrot.slane %v5030, 7
      %v5148 = vsel %vm2570, %v5145, %v5147
      %v5149 = vrot.slane %v5031, 7
      %v5150 = vrot.slane %v5032, 7
      %v5151 = vsel %vm2570, %v5149, %v5150
      %v5152 = vrot.slane %v5033, 7
      %v5153 = vsel %vm2570, %v5150, %v5152
      %v5154 = vrot.slane %v5034, 7
      %v5155 = vrot.slane %v5035, 7
      %v5156 = vsel %vm2570, %v5154, %v5155
      %v5157 = vrot.slane %v5036, 7
      %v5158 = vsel %vm2570, %v5155, %v5157
      %v5159 = vrot.slane %v5037, 7
      %v5160 = vrot.slane %v5038, 7
      %v5161 = vsel %vm2570, %v5159, %v5160
      %v5162 = vrot.slane %v5039, 7
      %v5163 = vsel %vm2570, %v5160, %v5162
      %v5164 = vrot.slane %v5040, 7
      %v5165 = vrot.slane %v5041, 7
      %v5166 = vsel %vm2570, %v5164, %v5165
      %v5167 = vrot.slane %v5042, 7
      %v5168 = vsel %vm2570, %v5165, %v5167
      %v5169 = vrot.slane %v5043, 7
      %v5170 = vrot.slane %v5044, 7
      %v5171 = vsel %vm2570, %v5169, %v5170
      %v5172 = vrot.slane %v5045, 7
      %v5173 = vsel %vm2570, %v5170, %v5172
      %v5206 = vpack.c.bf16 %v5098, %v5096
      %v5207 = vpack.c.bf16 %v5103, %v5101
      %v5208 = vpack.c.bf16 %v5108, %v5106
      %v5209 = vpack.c.bf16 %v5113, %v5111
      %v5210 = vpack.c.bf16 %v5118, %v5116
      %v5211 = vpack.c.bf16 %v5123, %v5121
      %v5212 = vpack.c.bf16 %v5128, %v5126
      %v5213 = vpack.c.bf16 %v5133, %v5131
      %v5214 = vpack.c.bf16 %v5138, %v5136
      %v5215 = vpack.c.bf16 %v5143, %v5141
      %v5216 = vpack.c.bf16 %v5148, %v5146
      %v5217 = vpack.c.bf16 %v5153, %v5151
      %v5218 = vpack.c.bf16 %v5158, %v5156
      %v5219 = vpack.c.bf16 %v5163, %v5161
      %v5220 = vpack.c.bf16 %v5168, %v5166
      %v5221 = vpack.c.bf16 %v5173, %v5171
      %v5222 = vld [vmem:[%s7] sm:$0xf]
      %v5223 = vld [vmem:[%s7 + $0x4] sm:$0xf]
      %v5224 = vld [vmem:[%s7 + $0x8] sm:$0xf]
      %v5225 = vld [vmem:[%s7 + $0xc] sm:$0xf]
      %v5226 = vld [vmem:[%s7 + $0x10] sm:$0xf]
      %v5227 = vld [vmem:[%s7 + $0x14] sm:$0xf]
      %v5228 = vld [vmem:[%s7 + $0x18] sm:$0xf]
      %v5229 = vld [vmem:[%s7 + $0x1c] sm:$0xf]
      %v5230 = vld [vmem:[%s7 + $0x20] sm:$0xf]
      %v5240 = vunpack.c.l.b16 %v5222
      %v5241 = vunpack.c.l.b16 %v5223
      %v5242 = vunpack.c.l.b16 %v5224
      %v5243 = vunpack.c.l.b16 %v5225
      %v5244 = vunpack.c.l.b16 %v5226
      %v5245 = vunpack.c.l.b16 %v5227
      %v5246 = vunpack.c.l.b16 %v5228
      %v5247 = vunpack.c.l.b16 %v5229
      %v5248 = vunpack.c.l.b16 %v5230
      %v5249 = vpack.c.b16 %v5241, %v5240
      %v5250 = vpack.c.b16 %v5243, %v5242
      %v5251 = vpack.c.b16 %v5245, %v5244
      %v5252 = vpack.c.b16 %v5247, %v5246
      %v5253 = vpack.c.b16 %v5248, %v5248
      %vm5258 = vcmask 588800
      %v5260 = vsel %vm5258, %v5206, 0
      %v5263 = vsel %vm5258, %v5207, 0
      %v5266 = vsel %vm5258, %v5208, 0
      %v5269 = vsel %vm5258, %v5209, 0
      %v5272 = vsel %vm5258, %v5210, 0
      %v5275 = vsel %vm5258, %v5211, 0
      %v5278 = vsel %vm5258, %v5212, 0
      %v5281 = vsel %vm5258, %v5213, 0
      %v5284 = vsel %vm5258, %v5214, 0
      %v5287 = vsel %vm5258, %v5215, 0
      %v5290 = vsel %vm5258, %v5216, 0
      %v5293 = vsel %vm5258, %v5217, 0
      %v5296 = vsel %vm5258, %v5218, 0
      %v5299 = vsel %vm5258, %v5219, 0
      %v5302 = vsel %vm5258, %v5220, 0
      %v5305 = vsel %vm5258, %v5221, 0
      %vm5307 = vcmask 1043456
      %v5309 = vsel %vm5307, %v5253, 0
      %5311 = vmatprep.subr.bf16.mxu0 0
      %5312 = vmatpush1.bf16.msra.mxu0 %v5249
      %5313 = vmatprep.subr.bf16.mxu0 0
      %5314 = vmatpush1.bf16.msra.mxu0 %v5250
      %5315 = vmatprep.subr.bf16.mxu0 0
      %5316 = vmatpush1.bf16.msra.mxu0 %v5251
      %5317 = vmatprep.subr.bf16.mxu0 0
      %5318 = vmatpush1.bf16.msra.mxu0 %v5252
      %5319 = vmatprep.subr.bf16.mxu0 0
      %5320 = vmatpush1.bf16.msra.mxu0 %v5309
      %5321 = vmatprep.subr.bf16.mxu0 0
      %5322 = vmatpush1.bf16.msra.mxu0 0
      %5323 = vmatprep.subr.bf16.mxu0 0
      %5324 = vmatpush1.bf16.msra.mxu0 0
      %5325 = vmatprep.subr.bf16.mxu0 0
      %5326 = vmatpush1.bf16.msra.mxu0 0
      %5327 = vmatprep.subr.bf16.mxu0 0
      %5328 = vmatpush1.bf16.msra.mxu0 0
      %5329 = vmatprep.subr.bf16.mxu0 0
      %5330 = vmatpush1.bf16.msra.mxu0 0
      %5331 = vmatprep.subr.bf16.mxu0 0
      %5332 = vmatpush1.bf16.msra.mxu0 0
      %5333 = vmatprep.subr.bf16.mxu0 0
      %5334 = vmatpush1.bf16.msra.mxu0 0
      %5335 = vmatprep.subr.bf16.mxu0 0
      %5336 = vmatpush1.bf16.msra.mxu0 0
      %5337 = vmatprep.subr.bf16.mxu0 0
      %5338 = vmatpush1.bf16.msra.mxu0 0
      %5339 = vmatprep.subr.bf16.mxu0 0
      %5340 = vmatpush1.bf16.msra.mxu0 0
      %5341 = vmatprep.subr.bf16.mxu0 0
      %5342 = vmatpush1.bf16.msra.mxu0 0
      %5343 = vmatprep.mubr.bf16.mxu0 0
      %5344 = vmatmul.mubr.bf16.gmra.mrb[0].mxu0 %v5260
      %v5345 = vpop.f32.mrb[0].mxu0
      %v5346 = vadd.f32 0.0, %v5345
      %v5347 = vpop.f32.mrb[0].mxu0
      %v5348 = vpop.f32.mrb[0].mxu0
      %v5349 = vadd.f32 0.0, %v5348
      %v5350 = vpop.f32.mrb[0].mxu0
      %5351 = vmatprep.mubr.bf16.mxu0 0
      %5352 = vmatmul.mubr.bf16.gmra.mrb[0].mxu0 %v5263
      %v5353 = vpop.f32.mrb[0].mxu0
      %v5354 = vadd.f32 0.0, %v5353
      %v5355 = vpop.f32.mrb[0].mxu0
      %v5356 = vpop.f32.mrb[0].mxu0
      %v5357 = vadd.f32 0.0, %v5356
      %v5358 = vpop.f32.mrb[0].mxu0
      %5359 = vmatprep.mubr.bf16.mxu0 0
      %5360 = vmatmul.mubr.bf16.gmra.mrb[0].mxu0 %v5266
      %v5361 = vpop.f32.mrb[0].mxu0
      %v5362 = vadd.f32 0.0, %v5361
      %v5363 = vpop.f32.mrb[0].mxu0
      %v5364 = vpop.f32.mrb[0].mxu0
      %v5365 = vadd.f32 0.0, %v5364
      %v5366 = vpop.f32.mrb[0].mxu0
      %5367 = vmatprep.mubr.bf16.mxu0 0
      %5368 = vmatmul.mubr.bf16.gmra.mrb[0].mxu0 %v5269
      %v5369 = vpop.f32.mrb[0].mxu0
      %v5370 = vadd.f32 0.0, %v5369
      %v5371 = vpop.f32.mrb[0].mxu0
      %v5372 = vpop.f32.mrb[0].mxu0
      %v5373 = vadd.f32 0.0, %v5372
      %v5374 = vpop.f32.mrb[0].mxu0
      %5375 = vmatprep.mubr.bf16.mxu0 0
      %5376 = vmatmul.mubr.bf16.gmra.mrb[0].mxu0 %v5272
      %v5377 = vpop.f32.mrb[0].mxu0
      %v5378 = vadd.f32 0.0, %v5377
      %v5379 = vpop.f32.mrb[0].mxu0
      %v5380 = vpop.f32.mrb[0].mxu0
      %v5381 = vadd.f32 0.0, %v5380
      %v5382 = vpop.f32.mrb[0].mxu0
      %5383 = vmatprep.mubr.bf16.mxu0 0
      %5384 = vmatmul.mubr.bf16.gmra.mrb[0].mxu0 %v5275
      %v5385 = vpop.f32.mrb[0].mxu0
      %v5386 = vadd.f32 0.0, %v5385
      %v5387 = vpop.f32.mrb[0].mxu0
      %v5388 = vpop.f32.mrb[0].mxu0
      %v5389 = vadd.f32 0.0, %v5388
      %v5390 = vpop.f32.mrb[0].mxu0
      %5391 = vmatprep.mubr.bf16.mxu0 0
      %5392 = vmatmul.mubr.bf16.gmra.mrb[0].mxu0 %v5278
      %v5393 = vpop.f32.mrb[0].mxu0
      %v5394 = vadd.f32 0.0, %v5393
      %v5395 = vpop.f32.mrb[0].mxu0
      %v5396 = vpop.f32.mrb[0].mxu0
      %v5397 = vadd.f32 0.0, %v5396
      %v5398 = vpop.f32.mrb[0].mxu0
      %5399 = vmatprep.mubr.bf16.mxu0 0
      %5400 = vmatmul.mubr.bf16.gmra.mrb[0].mxu0 %v5281
      %v5401 = vpop.f32.mrb[0].mxu0
      %v5402 = vadd.f32 0.0, %v5401
      %v5403 = vpop.f32.mrb[0].mxu0
      %v5404 = vpop.f32.mrb[0].mxu0
      %v5405 = vadd.f32 0.0, %v5404
      %v5406 = vpop.f32.mrb[0].mxu0
      %5407 = vmatprep.mubr.bf16.mxu0 0
      %5408 = vmatmul.mubr.bf16.gmra.mrb[0].mxu0 %v5284
      %v5409 = vpop.f32.mrb[0].mxu0
      %v5410 = vadd.f32 0.0, %v5409
      %v5411 = vpop.f32.mrb[0].mxu0
      %v5412 = vpop.f32.mrb[0].mxu0
      %v5413 = vadd.f32 0.0, %v5412
      %v5414 = vpop.f32.mrb[0].mxu0
      %5415 = vmatprep.mubr.bf16.mxu0 0
      %5416 = vmatmul.mubr.bf16.gmra.mrb[0].mxu0 %v5287
      %v5417 = vpop.f32.mrb[0].mxu0
      %v5418 = vadd.f32 0.0, %v5417
      %v5419 = vpop.f32.mrb[0].mxu0
      %v5420 = vpop.f32.mrb[0].mxu0
      %v5421 = vadd.f32 0.0, %v5420
      %v5422 = vpop.f32.mrb[0].mxu0
      %5423 = vmatprep.mubr.bf16.mxu0 0
      %5424 = vmatmul.mubr.bf16.gmra.mrb[0].mxu0 %v5290
      %v5425 = vpop.f32.mrb[0].mxu0
      %v5426 = vadd.f32 0.0, %v5425
      %v5427 = vpop.f32.mrb[0].mxu0
      %v5428 = vpop.f32.mrb[0].mxu0
      %v5429 = vadd.f32 0.0, %v5428
      %v5430 = vpop.f32.mrb[0].mxu0
      %5431 = vmatprep.mubr.bf16.mxu0 0
      %5432 = vmatmul.mubr.bf16.gmra.mrb[0].mxu0 %v5293
      %v5433 = vpop.f32.mrb[0].mxu0
      %v5434 = vadd.f32 0.0, %v5433
      %v5435 = vpop.f32.mrb[0].mxu0
      %v5436 = vpop.f32.mrb[0].mxu0
      %v5437 = vadd.f32 0.0, %v5436
      %v5438 = vpop.f32.mrb[0].mxu0
      %5439 = vmatprep.mubr.bf16.mxu0 0
      %5440 = vmatmul.mubr.bf16.gmra.mrb[0].mxu0 %v5296
      %v5441 = vpop.f32.mrb[0].mxu0
      %v5442 = vadd.f32 0.0, %v5441
      %v5443 = vpop.f32.mrb[0].mxu0
      %v5444 = vpop.f32.mrb[0].mxu0
      %v5445 = vadd.f32 0.0, %v5444
      %v5446 = vpop.f32.mrb[0].mxu0
      %5447 = vmatprep.mubr.bf16.mxu0 0
      %5448 = vmatmul.mubr.bf16.gmra.mrb[0].mxu0 %v5299
      %v5449 = vpop.f32.mrb[0].mxu0
      %v5450 = vadd.f32 0.0, %v5449
      %v5451 = vpop.f32.mrb[0].mxu0
      %v5452 = vpop.f32.mrb[0].mxu0
      %v5453 = vadd.f32 0.0, %v5452
      %v5454 = vpop.f32.mrb[0].mxu0
      %5455 = vmatprep.mubr.bf16.mxu0 0
      %5456 = vmatmul.mubr.bf16.gmra.mrb[0].mxu0 %v5302
      %v5457 = vpop.f32.mrb[0].mxu0
      %v5458 = vadd.f32 0.0, %v5457
      %v5459 = vpop.f32.mrb[0].mxu0
      %v5460 = vpop.f32.mrb[0].mxu0
      %v5461 = vadd.f32 0.0, %v5460
      %v5462 = vpop.f32.mrb[0].mxu0
      %5463 = vmatprep.mubr.bf16.mxu0 0
      %5464 = vmatmul.mubr.bf16.gmra.mrb[0].mxu0 %v5305
      %v5465 = vpop.f32.mrb[0].mxu0
      %v5466 = vadd.f32 0.0, %v5465
      %v5467 = vpop.f32.mrb[0].mxu0
      %v5468 = vpop.f32.mrb[0].mxu0
      %v5469 = vadd.f32 0.0, %v5468
      %v5470 = vpop.f32.mrb[0].mxu0
      %5471 = vdwg.mxu0
      %v5472 = vld [vmem:[%s8] sm:$0x1]
      %v5474 = vlaneseq
      %v5475 = vshrl.u32 %v5474, 7
      %v5476 = vsub.s32 0, %v5475
      %v5477 = vrot.slane %v5472, %v5476
      %v5479 = vmul.f32 %v5346, %v5477
      %v5480 = vmul.f32 %v5349, %v5477
      %v5481 = vmul.f32 %v5354, %v5477
      %v5482 = vmul.f32 %v5357, %v5477
      %v5483 = vmul.f32 %v5362, %v5477
      %v5484 = vmul.f32 %v5365, %v5477
      %v5485 = vmul.f32 %v5370, %v5477
      %v5486 = vmul.f32 %v5373, %v5477
      %v5487 = vmul.f32 %v5378, %v5477
      %v5488 = vmul.f32 %v5381, %v5477
      %v5489 = vmul.f32 %v5386, %v5477
      %v5490 = vmul.f32 %v5389, %v5477
      %v5491 = vmul.f32 %v5394, %v5477
      %v5492 = vmul.f32 %v5397, %v5477
      %v5493 = vmul.f32 %v5402, %v5477
      %v5494 = vmul.f32 %v5405, %v5477
      %v5495 = vmul.f32 %v5410, %v5477
      %v5496 = vmul.f32 %v5413, %v5477
      %v5497 = vmul.f32 %v5418, %v5477
      %v5498 = vmul.f32 %v5421, %v5477
      %v5499 = vmul.f32 %v5426, %v5477
      %v5500 = vmul.f32 %v5429, %v5477
      %v5501 = vmul.f32 %v5434, %v5477
      %v5502 = vmul.f32 %v5437, %v5477
      %v5503 = vmul.f32 %v5442, %v5477
      %v5504 = vmul.f32 %v5445, %v5477
      %v5505 = vmul.f32 %v5450, %v5477
      %v5506 = vmul.f32 %v5453, %v5477
      %v5507 = vmul.f32 %v5458, %v5477
      %v5508 = vmul.f32 %v5461, %v5477
      %v5509 = vmul.f32 %v5466, %v5477
      %v5510 = vmul.f32 %v5469, %v5477
      %v5511 = vld [vmem:[%s9] sm:$0x1]
      %v5513 = vlaneseq
      %v5514 = vshrl.u32 %v5513, 7
      %v5515 = vsub.s32 0, %v5514
      %v5516 = vrot.slane %v5511, %v5515
      %v5518 = vadd.f32 %v5479, %v5516
      %v5519 = vadd.f32 %v5480, %v5516
      %v5520 = vadd.f32 %v5481, %v5516
      %v5521 = vadd.f32 %v5482, %v5516
      %v5522 = vadd.f32 %v5483, %v5516
      %v5523 = vadd.f32 %v5484, %v5516
      %v5524 = vadd.f32 %v5485, %v5516
      %v5525 = vadd.f32 %v5486, %v5516
      %v5526 = vadd.f32 %v5487, %v5516
      %v5527 = vadd.f32 %v5488, %v5516
      %v5528 = vadd.f32 %v5489, %v5516
      %v5529 = vadd.f32 %v5490, %v5516
      %v5530 = vadd.f32 %v5491, %v5516
      %v5531 = vadd.f32 %v5492, %v5516
      %v5532 = vadd.f32 %v5493, %v5516
      %v5533 = vadd.f32 %v5494, %v5516
      %v5534 = vadd.f32 %v5495, %v5516
      %v5535 = vadd.f32 %v5496, %v5516
      %v5536 = vadd.f32 %v5497, %v5516
      %v5537 = vadd.f32 %v5498, %v5516
      %v5538 = vadd.f32 %v5499, %v5516
      %v5539 = vadd.f32 %v5500, %v5516
      %v5540 = vadd.f32 %v5501, %v5516
      %v5541 = vadd.f32 %v5502, %v5516
      %v5542 = vadd.f32 %v5503, %v5516
      %v5543 = vadd.f32 %v5504, %v5516
      %v5544 = vadd.f32 %v5505, %v5516
      %v5545 = vadd.f32 %v5506, %v5516
      %v5546 = vadd.f32 %v5507, %v5516
      %v5547 = vadd.f32 %v5508, %v5516
      %v5548 = vadd.f32 %v5509, %v5516
      %v5549 = vadd.f32 %v5510, %v5516
      %v5550 = vpack.c.bf16 %v475, %v474
      %v5551 = vpack.c.bf16 %v477, %v476
      %v5552 = vpack.c.bf16 %v479, %v478
      %v5553 = vpack.c.bf16 %v481, %v480
      %v5554 = vpack.c.bf16 %v483, %v482
      %v5555 = vpack.c.bf16 %v485, %v484
      %v5556 = vpack.c.bf16 %v487, %v486
      %v5557 = vpack.c.bf16 %v489, %v488
      %v5558 = vpack.c.bf16 %v491, %v490
      %v5559 = vpack.c.bf16 %v493, %v492
      %v5560 = vpack.c.bf16 %v495, %v494
      %v5561 = vpack.c.bf16 %v497, %v496
      %v5562 = vpack.c.bf16 %v499, %v498
      %v5563 = vpack.c.bf16 %v501, %v500
      %v5564 = vpack.c.bf16 %v503, %v502
      %v5565 = vpack.c.bf16 %v505, %v504
      %v5566 = vld [vmem:[%s10] sm:$0x3]
      %v5568 = vsel %vm584, %v5550, 0
      %v5571 = vsel %vm584, %v5551, 0
      %v5574 = vsel %vm584, %v5552, 0
      %v5577 = vsel %vm584, %v5553, 0
      %v5580 = vsel %vm584, %v5554, 0
      %v5583 = vsel %vm584, %v5555, 0
      %v5586 = vsel %vm584, %v5556, 0
      %v5589 = vsel %vm584, %v5557, 0
      %v5592 = vsel %vm584, %v5558, 0
      %v5595 = vsel %vm584, %v5559, 0
      %v5598 = vsel %vm584, %v5560, 0
      %v5601 = vsel %vm584, %v5561, 0
      %v5604 = vsel %vm584, %v5562, 0
      %v5607 = vsel %vm584, %v5563, 0
      %v5610 = vsel %vm584, %v5564, 0
      %v5613 = vsel %vm584, %v5565, 0
      %v5616 = vsel %vm2768, %v5566, 0
      %5618 = vmatprep.subr.bf16.mxu0 0
      %5619 = vmatpush1.bf16.msra.mxu0 %v5616
      %5620 = vmatprep.subr.bf16.mxu0 0
      %5621 = vmatpush1.bf16.msra.mxu0 0
      %5622 = vmatprep.subr.bf16.mxu0 0
      %5623 = vmatpush1.bf16.msra.mxu0 0
      %5624 = vmatprep.subr.bf16.mxu0 0
      %5625 = vmatpush1.bf16.msra.mxu0 0
      %5626 = vmatprep.subr.bf16.mxu0 0
      %5627 = vmatpush1.bf16.msra.mxu0 0
      %5628 = vmatprep.subr.bf16.mxu0 0
      %5629 = vmatpush1.bf16.msra.mxu0 0
      %5630 = vmatprep.subr.bf16.mxu0 0
      %5631 = vmatpush1.bf16.msra.mxu0 0
      %5632 = vmatprep.subr.bf16.mxu0 0
      %5633 = vmatpush1.bf16.msra.mxu0 0
      %5634 = vmatprep.subr.bf16.mxu0 0
      %5635 = vmatpush1.bf16.msra.mxu0 0
      %5636 = vmatprep.subr.bf16.mxu0 0
      %5637 = vmatpush1.bf16.msra.mxu0 0
      %5638 = vmatprep.subr.bf16.mxu0 0
      %5639 = vmatpush1.bf16.msra.mxu0 0
      %5640 = vmatprep.subr.bf16.mxu0 0
      %5641 = vmatpush1.bf16.msra.mxu0 0
      %5642 = vmatprep.subr.bf16.mxu0 0
      %5643 = vmatpush1.bf16.msra.mxu0 0
      %5644 = vmatprep.subr.bf16.mxu0 0
      %5645 = vmatpush1.bf16.msra.mxu0 0
      %5646 = vmatprep.subr.bf16.mxu0 0
      %5647 = vmatpush1.bf16.msra.mxu0 0
      %5648 = vmatprep.subr.bf16.mxu0 0
      %5649 = vmatpush1.bf16.msra.mxu0 0
      %5650 = vmatprep.mubr.bf16.mxu0 0
      %5651 = vmatmul.mubr.bf16.gmra.mrb[0].mxu0 %v5568
      %v5652 = vpop.f32.mrb[0].mxu0
      %v5653 = vadd.f32 0.0, %v5652
      %v5654 = vpop.f32.mrb[0].mxu0
      %v5655 = vpop.f32.mrb[0].mxu0
      %v5656 = vadd.f32 0.0, %v5655
      %v5657 = vpop.f32.mrb[0].mxu0
      %5658 = vmatprep.mubr.bf16.mxu0 0
      %5659 = vmatmul.mubr.bf16.gmra.mrb[0].mxu0 %v5571
      %v5660 = vpop.f32.mrb[0].mxu0
      %v5661 = vadd.f32 0.0, %v5660
      %v5662 = vpop.f32.mrb[0].mxu0
      %v5663 = vpop.f32.mrb[0].mxu0
      %v5664 = vadd.f32 0.0, %v5663
      %v5665 = vpop.f32.mrb[0].mxu0
      %5666 = vmatprep.mubr.bf16.mxu0 0
      %5667 = vmatmul.mubr.bf16.gmra.mrb[0].mxu0 %v5574
      %v5668 = vpop.f32.mrb[0].mxu0
      %v5669 = vadd.f32 0.0, %v5668
      %v5670 = vpop.f32.mrb[0].mxu0
      %v5671 = vpop.f32.mrb[0].mxu0
      %v5672 = vadd.f32 0.0, %v5671
      %v5673 = vpop.f32.mrb[0].mxu0
      %5674 = vmatprep.mubr.bf16.mxu0 0
      %5675 = vmatmul.mubr.bf16.gmra.mrb[0].mxu0 %v5577
      %v5676 = vpop.f32.mrb[0].mxu0
      %v5677 = vadd.f32 0.0, %v5676
      %v5678 = vpop.f32.mrb[0].mxu0
      %v5679 = vpop.f32.mrb[0].mxu0
      %v5680 = vadd.f32 0.0, %v5679
      %v5681 = vpop.f32.mrb[0].mxu0
      %5682 = vmatprep.mubr.bf16.mxu0 0
      %5683 = vmatmul.mubr.bf16.gmra.mrb[0].mxu0 %v5580
      %v5684 = vpop.f32.mrb[0].mxu0
      %v5685 = vadd.f32 0.0, %v5684
      %v5686 = vpop.f32.mrb[0].mxu0
      %v5687 = vpop.f32.mrb[0].mxu0
      %v5688 = vadd.f32 0.0, %v5687
      %v5689 = vpop.f32.mrb[0].mxu0
      %5690 = vmatprep.mubr.bf16.mxu0 0
      %5691 = vmatmul.mubr.bf16.gmra.mrb[0].mxu0 %v5583
      %v5692 = vpop.f32.mrb[0].mxu0
      %v5693 = vadd.f32 0.0, %v5692
      %v5694 = vpop.f32.mrb[0].mxu0
      %v5695 = vpop.f32.mrb[0].mxu0
      %v5696 = vadd.f32 0.0, %v5695
      %v5697 = vpop.f32.mrb[0].mxu0
      %5698 = vmatprep.mubr.bf16.mxu0 0
      %5699 = vmatmul.mubr.bf16.gmra.mrb[0].mxu0 %v5586
      %v5700 = vpop.f32.mrb[0].mxu0
      %v5701 = vadd.f32 0.0, %v5700
      %v5702 = vpop.f32.mrb[0].mxu0
      %v5703 = vpop.f32.mrb[0].mxu0
      %v5704 = vadd.f32 0.0, %v5703
      %v5705 = vpop.f32.mrb[0].mxu0
      %5706 = vmatprep.mubr.bf16.mxu0 0
      %5707 = vmatmul.mubr.bf16.gmra.mrb[0].mxu0 %v5589
      %v5708 = vpop.f32.mrb[0].mxu0
      %v5709 = vadd.f32 0.0, %v5708
      %v5710 = vpop.f32.mrb[0].mxu0
      %v5711 = vpop.f32.mrb[0].mxu0
      %v5712 = vadd.f32 0.0, %v5711
      %v5713 = vpop.f32.mrb[0].mxu0
      %5714 = vmatprep.mubr.bf16.mxu0 0
      %5715 = vmatmul.mubr.bf16.gmra.mrb[0].mxu0 %v5592
      %v5716 = vpop.f32.mrb[0].mxu0
      %v5717 = vadd.f32 0.0, %v5716
      %v5718 = vpop.f32.mrb[0].mxu0
      %v5719 = vpop.f32.mrb[0].mxu0
      %v5720 = vadd.f32 0.0, %v5719
      %v5721 = vpop.f32.mrb[0].mxu0
      %5722 = vmatprep.mubr.bf16.mxu0 0
      %5723 = vmatmul.mubr.bf16.gmra.mrb[0].mxu0 %v5595
      %v5724 = vpop.f32.mrb[0].mxu0
      %v5725 = vadd.f32 0.0, %v5724
      %v5726 = vpop.f32.mrb[0].mxu0
      %v5727 = vpop.f32.mrb[0].mxu0
      %v5728 = vadd.f32 0.0, %v5727
      %v5729 = vpop.f32.mrb[0].mxu0
      %5730 = vmatprep.mubr.bf16.mxu0 0
      %5731 = vmatmul.mubr.bf16.gmra.mrb[0].mxu0 %v5598
      %v5732 = vpop.f32.mrb[0].mxu0
      %v5733 = vadd.f32 0.0, %v5732
      %v5734 = vpop.f32.mrb[0].mxu0
      %v5735 = vpop.f32.mrb[0].mxu0
      %v5736 = vadd.f32 0.0, %v5735
      %v5737 = vpop.f32.mrb[0].mxu0
      %5738 = vmatprep.mubr.bf16.mxu0 0
      %5739 = vmatmul.mubr.bf16.gmra.mrb[0].mxu0 %v5601
      %v5740 = vpop.f32.mrb[0].mxu0
      %v5741 = vadd.f32 0.0, %v5740
      %v5742 = vpop.f32.mrb[0].mxu0
      %v5743 = vpop.f32.mrb[0].mxu0
      %v5744 = vadd.f32 0.0, %v5743
      %v5745 = vpop.f32.mrb[0].mxu0
      %5746 = vmatprep.mubr.bf16.mxu0 0
      %5747 = vmatmul.mubr.bf16.gmra.mrb[0].mxu0 %v5604
      %v5748 = vpop.f32.mrb[0].mxu0
      %v5749 = vadd.f32 0.0, %v5748
      %v5750 = vpop.f32.mrb[0].mxu0
      %v5751 = vpop.f32.mrb[0].mxu0
      %v5752 = vadd.f32 0.0, %v5751
      %v5753 = vpop.f32.mrb[0].mxu0
      %5754 = vmatprep.mubr.bf16.mxu0 0
      %5755 = vmatmul.mubr.bf16.gmra.mrb[0].mxu0 %v5607
      %v5756 = vpop.f32.mrb[0].mxu0
      %v5757 = vadd.f32 0.0, %v5756
      %v5758 = vpop.f32.mrb[0].mxu0
      %v5759 = vpop.f32.mrb[0].mxu0
      %v5760 = vadd.f32 0.0, %v5759
      %v5761 = vpop.f32.mrb[0].mxu0
      %5762 = vmatprep.mubr.bf16.mxu0 0
      %5763 = vmatmul.mubr.bf16.gmra.mrb[0].mxu0 %v5610
      %v5764 = vpop.f32.mrb[0].mxu0
      %v5765 = vadd.f32 0.0, %v5764
      %v5766 = vpop.f32.mrb[0].mxu0
      %v5767 = vpop.f32.mrb[0].mxu0
      %v5768 = vadd.f32 0.0, %v5767
      %v5769 = vpop.f32.mrb[0].mxu0
      %5770 = vmatprep.mubr.bf16.mxu0 0
      %5771 = vmatmul.mubr.bf16.gmra.mrb[0].mxu0 %v5613
      %v5772 = vpop.f32.mrb[0].mxu0
      %v5773 = vadd.f32 0.0, %v5772
      %v5774 = vpop.f32.mrb[0].mxu0
      %v5775 = vpop.f32.mrb[0].mxu0
      %v5776 = vadd.f32 0.0, %v5775
      %v5777 = vpop.f32.mrb[0].mxu0
      %5778 = vdwg.mxu0
      %v5779 = vld [vmem:[%s11] sm:$0x1]
      %v5781 = vlaneseq
      %v5782 = vshrl.u32 %v5781, 7
      %v5783 = vsub.s32 0, %v5782
      %v5784 = vrot.slane %v5779, %v5783
      %v5786 = vmul.f32 %v5653, %v5784
      %v5787 = vmul.f32 %v5656, %v5784
      %v5788 = vmul.f32 %v5661, %v5784
      %v5789 = vmul.f32 %v5664, %v5784
      %v5790 = vmul.f32 %v5669, %v5784
      %v5791 = vmul.f32 %v5672, %v5784
      %v5792 = vmul.f32 %v5677, %v5784
      %v5793 = vmul.f32 %v5680, %v5784
      %v5794 = vmul.f32 %v5685, %v5784
      %v5795 = vmul.f32 %v5688, %v5784
      %v5796 = vmul.f32 %v5693, %v5784
      %v5797 = vmul.f32 %v5696, %v5784
      %v5798 = vmul.f32 %v5701, %v5784
      %v5799 = vmul.f32 %v5704, %v5784
      %v5800 = vmul.f32 %v5709, %v5784
      %v5801 = vmul.f32 %v5712, %v5784
      %v5802 = vmul.f32 %v5717, %v5784
      %v5803 = vmul.f32 %v5720, %v5784
      %v5804 = vmul.f32 %v5725, %v5784
      %v5805 = vmul.f32 %v5728, %v5784
      %v5806 = vmul.f32 %v5733, %v5784
      %v5807 = vmul.f32 %v5736, %v5784
      %v5808 = vmul.f32 %v5741, %v5784
      %v5809 = vmul.f32 %v5744, %v5784
      %v5810 = vmul.f32 %v5749, %v5784
      %v5811 = vmul.f32 %v5752, %v5784
      %v5812 = vmul.f32 %v5757, %v5784
      %v5813 = vmul.f32 %v5760, %v5784
      %v5814 = vmul.f32 %v5765, %v5784
      %v5815 = vmul.f32 %v5768, %v5784
      %v5816 = vmul.f32 %v5773, %v5784
      %v5817 = vmul.f32 %v5776, %v5784
      %v5818 = vld [vmem:[%s12] sm:$0x1]
      %v5820 = vlaneseq
      %v5821 = vshrl.u32 %v5820, 7
      %v5822 = vsub.s32 0, %v5821
      %v5823 = vrot.slane %v5818, %v5822
      %v5825 = vadd.f32 %v5786, %v5823
      %v5826 = vadd.f32 %v5787, %v5823
      %v5827 = vadd.f32 %v5788, %v5823
      %v5828 = vadd.f32 %v5789, %v5823
      %v5829 = vadd.f32 %v5790, %v5823
      %v5830 = vadd.f32 %v5791, %v5823
      %v5831 = vadd.f32 %v5792, %v5823
      %v5832 = vadd.f32 %v5793, %v5823
      %v5833 = vadd.f32 %v5794, %v5823
      %v5834 = vadd.f32 %v5795, %v5823
      %v5835 = vadd.f32 %v5796, %v5823
      %v5836 = vadd.f32 %v5797, %v5823
      %v5837 = vadd.f32 %v5798, %v5823
      %v5838 = vadd.f32 %v5799, %v5823
      %v5839 = vadd.f32 %v5800, %v5823
      %v5840 = vadd.f32 %v5801, %v5823
      %v5841 = vadd.f32 %v5802, %v5823
      %v5842 = vadd.f32 %v5803, %v5823
      %v5843 = vadd.f32 %v5804, %v5823
      %v5844 = vadd.f32 %v5805, %v5823
      %v5845 = vadd.f32 %v5806, %v5823
      %v5846 = vadd.f32 %v5807, %v5823
      %v5847 = vadd.f32 %v5808, %v5823
      %v5848 = vadd.f32 %v5809, %v5823
      %v5849 = vadd.f32 %v5810, %v5823
      %v5850 = vadd.f32 %v5811, %v5823
      %v5851 = vadd.f32 %v5812, %v5823
      %v5852 = vadd.f32 %v5813, %v5823
      %v5853 = vadd.f32 %v5814, %v5823
      %v5854 = vadd.f32 %v5815, %v5823
      %v5855 = vadd.f32 %v5816, %v5823
      %v5856 = vadd.f32 %v5817, %v5823
      %v5857 = vadd.f32 %v5825, %v5518
      %v5858 = vadd.f32 %v5826, %v5519
      %v5859 = vadd.f32 %v5827, %v5520
      %v5860 = vadd.f32 %v5828, %v5521
      %v5861 = vadd.f32 %v5829, %v5522
      %v5862 = vadd.f32 %v5830, %v5523
      %v5863 = vadd.f32 %v5831, %v5524
      %v5864 = vadd.f32 %v5832, %v5525
      %v5865 = vadd.f32 %v5833, %v5526
      %v5866 = vadd.f32 %v5834, %v5527
      %v5867 = vadd.f32 %v5835, %v5528
      %v5868 = vadd.f32 %v5836, %v5529
      %v5869 = vadd.f32 %v5837, %v5530
      %v5870 = vadd.f32 %v5838, %v5531
      %v5871 = vadd.f32 %v5839, %v5532
      %v5872 = vadd.f32 %v5840, %v5533
      %v5873 = vadd.f32 %v5841, %v5534
      %v5874 = vadd.f32 %v5842, %v5535
      %v5875 = vadd.f32 %v5843, %v5536
      %v5876 = vadd.f32 %v5844, %v5537
      %v5877 = vadd.f32 %v5845, %v5538
      %v5878 = vadd.f32 %v5846, %v5539
      %v5879 = vadd.f32 %v5847, %v5540
      %v5880 = vadd.f32 %v5848, %v5541
      %v5881 = vadd.f32 %v5849, %v5542
      %v5882 = vadd.f32 %v5850, %v5543
      %v5883 = vadd.f32 %v5851, %v5544
      %v5884 = vadd.f32 %v5852, %v5545
      %v5885 = vadd.f32 %v5853, %v5546
      %v5886 = vadd.f32 %v5854, %v5547
      %v5887 = vadd.f32 %v5855, %v5548
      %v5888 = vadd.f32 %v5856, %v5549
      %5889 = vst.msk [vmem:[%s440] sm:$0xff] %vm2179, %v5857
      %5890 = vst.msk [vmem:[%s440 + $0x8] sm:$0xff] %vm2179, %v5858
      %5891 = vst.msk [vmem:[%s440 + $0x10] sm:$0xff] %vm2179, %v5859
      %5892 = vst.msk [vmem:[%s440 + $0x18] sm:$0xff] %vm2179, %v5860
      %5893 = vst.msk [vmem:[%s440 + $0x20] sm:$0xff] %vm2179, %v5861
      %5894 = vst.msk [vmem:[%s440 + $0x28] sm:$0xff] %vm2179, %v5862
      %5895 = vst.msk [vmem:[%s440 + $0x30] sm:$0xff] %vm2179, %v5863
      %5896 = vst.msk [vmem:[%s440 + $0x38] sm:$0xff] %vm2179, %v5864
      %5897 = vst.msk [vmem:[%s440 + $0x40] sm:$0xff] %vm2179, %v5865
      %5898 = vst.msk [vmem:[%s440 + $0x48] sm:$0xff] %vm2179, %v5866
      %5899 = vst.msk [vmem:[%s440 + $0x50] sm:$0xff] %vm2179, %v5867
      %5900 = vst.msk [vmem:[%s440 + $0x58] sm:$0xff] %vm2179, %v5868
      %5901 = vst.msk [vmem:[%s440 + $0x60] sm:$0xff] %vm2179, %v5869
      %5902 = vst.msk [vmem:[%s440 + $0x68] sm:$0xff] %vm2179, %v5870
      %5903 = vst.msk [vmem:[%s440 + $0x70] sm:$0xff] %vm2179, %v5871
      %5904 = vst.msk [vmem:[%s440 + $0x78] sm:$0xff] %vm2179, %v5872
      %5905 = vst.msk [vmem:[%s440 + $0x80] sm:$0xff] %vm2179, %v5873
      %5906 = vst.msk [vmem:[%s440 + $0x88] sm:$0xff] %vm2179, %v5874
      %5907 = vst.msk [vmem:[%s440 + $0x90] sm:$0xff] %vm2179, %v5875
      %5908 = vst.msk [vmem:[%s440 + $0x98] sm:$0xff] %vm2179, %v5876
      %5909 = vst.msk [vmem:[%s440 + $0xa0] sm:$0xff] %vm2179, %v5877
      %5910 = vst.msk [vmem:[%s440 + $0xa8] sm:$0xff] %vm2179, %v5878
      %5911 = vst.msk [vmem:[%s440 + $0xb0] sm:$0xff] %vm2179, %v5879
      %5912 = vst.msk [vmem:[%s440 + $0xb8] sm:$0xff] %vm2179, %v5880
      %5913 = vst.msk [vmem:[%s440 + $0xc0] sm:$0xff] %vm2179, %v5881
      %5914 = vst.msk [vmem:[%s440 + $0xc8] sm:$0xff] %vm2179, %v5882
      %5915 = vst.msk [vmem:[%s440 + $0xd0] sm:$0xff] %vm2179, %v5883
      %5916 = vst.msk [vmem:[%s440 + $0xd8] sm:$0xff] %vm2179, %v5884
      %5917 = vst.msk [vmem:[%s440 + $0xe0] sm:$0xff] %vm2179, %v5885
      %5918 = vst.msk [vmem:[%s440 + $0xe8] sm:$0xff] %vm2179, %v5886
      %5919 = vst.msk [vmem:[%s440 + $0xf0] sm:$0xff] %vm2179, %v5887
      %5920 = vst.msk [vmem:[%s440 + $0xf8] sm:$0xff] %vm2179, %v5888
      %p5921 = scmp.lt.s32.totalorder %s24, 1
      %s5922 = scalar_select %p5921, %s24, 1
      %s5923 = smul.addr %s5922, 32
      %s5924 = smul.addr %s5923, 8
      %s5925 = scalar_lea.vmem %s13, %s5924
      // Predicated region
      $region73: #{tpu_custom_call.1} parent=71 // pred_check
        %p5926 = pneg %p320
      $region74: #{tpu_custom_call.1} parent=71 // pred_check_branch
        %5928 = sbr.rel (%p5926) target = $region76
      $region75: #{tpu_custom_call.1} parent=71 // pred_region
        _
      $region76: #{tpu_custom_call.1} parent=71 // pred_fallthru
        _
    $region72: #{tpu_custom_call.1} parent=5 // pred_fallthru
      _
    %p5929 = scmp.le.s32.totalorder 2, %s19
    // Predicated region
    $region77: #{tpu_custom_call.1} parent=5 // pred_check
      %p5930 = pneg %p5929
    $region78: #{tpu_custom_call.1} parent=5 // pred_check_branch
      %5932 = sbr.rel (%p5930) target = $region80
    $region79: #{tpu_custom_call.1} parent=5 // pred_region
      %s5933 = ssub.s32 %s19, 2
      // Predicated region
      $region81: #{tpu_custom_call.1} parent=79 // pred_check
        %p5934 = pneg %p326
      $region82: #{tpu_custom_call.1} parent=79 // pred_check_branch
        %5936 = sbr.rel (%p5934) target = $region84
      $region83: #{tpu_custom_call.1} parent=79 // pred_region
        %p5937 = scmp.lt.s32.totalorder %s25, 1
        %s5938 = scalar_select %p5937, %s25, 1
        %s5939 = smul.addr %s5938, 32
        %s5940 = smul.addr %s5939, 8
        %s5941 = scalar_lea.vmem %s13, %s5940
      $region84: #{tpu_custom_call.1} parent=79 // pred_fallthru
        _
    $region80: #{tpu_custom_call.1} parent=5 // pred_fallthru
      _
  $region6: #{tpu_custom_call.1} parent=0 // loop_footer
    %s23 = sadd.s32 1, %s19
  $region7: #{tpu_custom_call.1} parent=0 // loop_footer_branch
    %18 = sbr.rel target = $region3
  $region8: #{tpu_custom_call.1} parent=0 // loop_exit
    _

</llo_original>
